<compile_context>
chip_gen: v5e
topology: v5e:2x2
jax: 0.10.0
libtpu: 0.0.40
codegen_flags: <defaults>
</compile_context>

<pallas_src>
import jax
import jax.numpy as jnp
import numpy as np
from jax import lax
from jax.experimental import pallas as pl
from jax.experimental.pallas import tpu as pltpu


def _round_up(x, m):
    return (x + m - 1) // m * m


def _lstm_recurrence_kernel(gx_ref,       # (TC, Bp, 4Hp)  precomputed x@Wih0 + b0
                            whh0_ref,     # (Hp, 4Hp)
                            w1_ref,       # (2Hp, 4Hp)     stacked [Wih1; Whh1]
                            b1_ref,       # (1, 4Hp)
                            h1_out_ref,   # (TC, Bp, Hp)   layer-1 hidden states
                            h0_sc, c0_sc, h1_sc, c1_sc):   # (Bp, Hp) state scratch
    TC, Bp, _ = gx_ref.shape
    Hp = whh0_ref.shape[0]

    # Zero-init the carried LSTM state on the first time-chunk only.
    @pl.when(pl.program_id(0) == 0)
    def _():
        z = jnp.zeros((Bp, Hp), jnp.float32)
        h0_sc[...] = z
        c0_sc[...] = z
        h1_sc[...] = z
        c1_sc[...] = z

    # Hoist the layer-1 bias broadcast out of the time loop (4 vregs live).
    b1 = jnp.broadcast_to(b1_ref[...], (Bp, 4 * Hp))

    def step(t, carry):
        h0, c0, h1, c1 = carry

        # ---- LSTM layer 0: x-projection precomputed outside the kernel, only
        #      the recurrent h-matmul remains on the serial critical path.
        g0 = gx_ref[t] + jnp.dot(h0, whh0_ref[...],
                                 preferred_element_type=jnp.float32)
        i0 = jax.nn.sigmoid(g0[:, 0 * Hp:1 * Hp])
        f0 = jax.nn.sigmoid(g0[:, 1 * Hp:2 * Hp])
        gg0 = jnp.tanh(g0[:, 2 * Hp:3 * Hp])
        o0 = jax.nn.sigmoid(g0[:, 3 * Hp:4 * Hp])
        c0 = f0 * c0 + i0 * gg0
        h0 = o0 * jnp.tanh(c0)

        # ---- LSTM layer 1: ih/hh matmuls fused into one MXU pass
        #      (eval mode -> no inter-layer dropout).
        xh = jnp.concatenate([h0, h1], axis=1)                    # (Bp, 2Hp)
        g1 = jnp.dot(xh, w1_ref[...],
                     preferred_element_type=jnp.float32) + b1
        i1 = jax.nn.sigmoid(g1[:, 0 * Hp:1 * Hp])
        f1 = jax.nn.sigmoid(g1[:, 1 * Hp:2 * Hp])
        gg1 = jnp.tanh(g1[:, 2 * Hp:3 * Hp])
        o1 = jax.nn.sigmoid(g1[:, 3 * Hp:4 * Hp])
        c1 = f1 * c1 + i1 * gg1
        h1 = o1 * jnp.tanh(c1)

        h1_out_ref[t] = h1                                        # lane-dense store
        return (h0, c0, h1, c1)

    carry_in = (h0_sc[...], c0_sc[...], h1_sc[...], c1_sc[...])
    h0, c0, h1, c1 = lax.fori_loop(0, TC, step, carry_in, unroll=True)
    h0_sc[...] = h0
    c0_sc[...] = c0
    h1_sc[...] = h1
    c1_sc[...] = c1


def decoder_rnn_forward(features, captions, params, *, time_chunk=8):
    """features: (B, E) float32, captions: (B, Tc) int32 -> logits (B, Tc, V)."""
    emb_tbl = params["embed"]                       # (V, E)
    B, E = features.shape
    H = params["whh0"].shape[1]                     # whh0 is (4H, H)

    # --- glue (plain JAX): embedding gather + concat ---
    caps = captions[:, :-1]                                           # (B, Tc-1)
    embeds = jnp.take(emb_tbl, caps, axis=0)                          # (B, Tc-1, E)
    inputs = jnp.concatenate([features[:, None, :], embeds], axis=1)  # (B, T, E)
    T = inputs.shape[1]

    # --- pad to TPU-friendly shapes: B -> sublane multiple (8), H -> lane (128),
    #     T -> multiple of the time-chunk so the grid tiles exactly.
    Bp = _round_up(B, 8)
    Hp = _round_up(H, 128)
    TC = min(time_chunk, T)
    Tp = _round_up(T, TC)

    def pad_w(w, in_orig, in_pad):
        # torch layout (4H, in) -> gate-block-aligned, transposed (in_pad, 4*Hp)
        w4 = w.reshape(4, H, in_orig)
        out = jnp.zeros((4, Hp, in_pad), w.dtype).at[:, :H, :in_orig].set(w4)
        return out.reshape(4 * Hp, in_pad).T

    def pad_b(b):
        b4 = b.reshape(4, H)
        return jnp.zeros((4, Hp), b.dtype).at[:, :H].set(b4).reshape(1, 4 * Hp)

    wih0_p = pad_w(params["wih0"], E, E)                              # (E, 4Hp)
    b0_p = pad_b(params["bih0"] + params["bhh0"])                     # (1, 4Hp)
    whh0_p = pad_w(params["whh0"], H, Hp)                             # (Hp, 4Hp)
    w1_p = jnp.concatenate(
        [pad_w(params["wih1"], H, Hp), pad_w(params["whh1"], H, Hp)],
        axis=0)                                                       # (2Hp, 4Hp)
    b1_p = pad_b(params["bih1"] + params["bhh1"])                     # (1, 4Hp)

    # --- hoisted layer-0 input projection: one big MXU-friendly matmul ---
    x_tm = jnp.transpose(inputs, (1, 0, 2))                           # (T, B, E)
    x_tm = jnp.pad(x_tm, ((0, 0), (0, Bp - B), (0, 0)))               # (T, Bp, E)
    gx = (x_tm.reshape(T * Bp, E) @ wih0_p + b0_p).reshape(T, Bp, 4 * Hp)
    gx = jnp.pad(gx, ((0, Tp - T), (0, 0), (0, 0)))                   # (Tp, Bp, 4Hp)

    # --- Pallas kernel: only the serial 2-layer LSTM recurrence, time-chunked
    #     on the grid so gx input and h1 output chunks are double-buffered.
    h1_all = pl.pallas_call(
        _lstm_recurrence_kernel,
        out_shape=jax.ShapeDtypeStruct((Tp, Bp, Hp), jnp.float32),
        grid_spec=pltpu.PrefetchScalarGridSpec(
            num_scalar_prefetch=0,
            grid=(Tp // TC,),
            in_specs=[
                pl.BlockSpec((TC, Bp, 4 * Hp), lambda i: (i, 0, 0)),
                pl.BlockSpec((Hp, 4 * Hp), lambda i: (0, 0)),
                pl.BlockSpec((2 * Hp, 4 * Hp), lambda i: (0, 0)),
                pl.BlockSpec((1, 4 * Hp), lambda i: (0, 0)),
            ],
            out_specs=pl.BlockSpec((TC, Bp, Hp), lambda i: (i, 0, 0)),
            scratch_shapes=[pltpu.VMEM((Bp, Hp), jnp.float32)] * 4,
        ),
        compiler_params=pltpu.CompilerParams(
            dimension_semantics=("arbitrary",)),
    )(gx, whh0_p, w1_p, b1_p)

    # --- hoisted final Linear, fused with the batch_first transpose ---
    logits = (jnp.einsum("tbh,vh->btv", h1_all[:T, :B, :H], params["wfc"])
              + params["bfc"])                                        # (B, T, V)
    return logits


# ---------------- pure-JAX reference for validation ----------------
def _reference_forward(features, captions, params):
    caps = captions[:, :-1]
    embeds = jnp.take(params["embed"], caps, axis=0)
    inputs = jnp.concatenate([features[:, None, :], embeds], axis=1)
    B, T, E = inputs.shape
    H = params["whh0"].shape[1]

    def cell(x, h, c, wih, whh, bih, bhh):
        g = x @ wih.T + bih + h @ whh.T + bhh
        i, f, gg, o = jnp.split(g, 4, axis=-1)
        c = jax.nn.sigmoid(f) * c + jax.nn.sigmoid(i) * jnp.tanh(gg)
        h = jax.nn.sigmoid(o) * jnp.tanh(c)
        return h, c

    h0 = c0 = h1 = c1 = jnp.zeros((B, H), jnp.float32)
    outs = []
    for t in range(T):
        h0, c0 = cell(inputs[:, t], h0, c0,
                      params["wih0"], params["whh0"], params["bih0"], params["bhh0"])
        h1, c1 = cell(h0, h1, c1,
                      params["wih1"], params["whh1"], params["bih1"], params["bhh1"])
        outs.append(h1 @ params["wfc"].T + params["bfc"])
    return jnp.stack(outs, axis=1)


if __name__ == "__main__":
    # Small shapes consistent with the module's forward.
    B, E, H, V, Tc = 2, 32, 32, 48, 8
    key = jax.random.PRNGKey(0)
    ks = jax.random.split(key, 16)
    u = lambda k, shape, s: jax.random.uniform(k, shape, jnp.float32, -s, s)
    scale = 1.0 / np.sqrt(H)

    params = {
        "embed": u(ks[0], (V, E), 1.0),
        "wih0": u(ks[1], (4 * H, E), scale),
        "whh0": u(ks[2], (4 * H, H), scale),
        "bih0": u(ks[3], (4 * H,), scale),
        "bhh0": u(ks[4], (4 * H,), scale),
        "wih1": u(ks[5], (4 * H, H), scale),
        "whh1": u(ks[6], (4 * H, H), scale),
        "bih1": u(ks[7], (4 * H,), scale),
        "bhh1": u(ks[8], (4 * H,), scale),
        "wfc": u(ks[9], (V, H), scale),
        "bfc": u(ks[10], (V,), scale),
    }

    features = jax.random.normal(ks[11], (B, E), jnp.float32)
    captions = jax.random.randint(ks[12], (B, Tc), 0, V, jnp.int32)

    out = decoder_rnn_forward(features, captions, params)
    jax.block_until_ready(out)

    ref = _reference_forward(features, captions, params)
    assert out.shape == (B, Tc, V), out.shape
    np.testing.assert_allclose(np.asarray(out), np.asarray(ref), rtol=1e-4, atol=1e-4)
    print("KERNEL_OK")
</pallas_src>

<mosaic_0001>
module attributes {stable_mosaic.version = 11 : i64} {
  func.func @_lstm_recurrence_kernel(%arg0: i32, %arg1: memref<8x8x512xf32, #tpu.memory_space<vmem>>, %arg2: memref<128x512xf32, #tpu.memory_space<vmem>>, %arg3: memref<256x512xf32, #tpu.memory_space<vmem>>, %arg4: memref<1x512xf32, #tpu.memory_space<vmem>>, %arg5: memref<8x8x128xf32, #tpu.memory_space<vmem>>, %arg6: memref<8x128xf32, #tpu.memory_space<vmem>>, %arg7: memref<8x128xf32, #tpu.memory_space<vmem>>, %arg8: memref<8x128xf32, #tpu.memory_space<vmem>>, %arg9: memref<8x128xf32, #tpu.memory_space<vmem>>) attributes {dimension_semantics = [#tpu.dimension_semantics<arbitrary>], iteration_bounds = array<i64: 1>, scalar_prefetch = 0 : i64, scratch_operands = 4 : i64, tpu.core_type = #tpu.core_type<tc>, window_params = [{transform_indices = @transform_0, window_bounds = array<i64: 8, 8, 512>}, {pipeline_mode = #tpu.pipeline_mode<synchronous>, transform_indices = @transform_1, window_bounds = array<i64: 128, 512>}, {pipeline_mode = #tpu.pipeline_mode<synchronous>, transform_indices = @transform_2, window_bounds = array<i64: 256, 512>}, {pipeline_mode = #tpu.pipeline_mode<synchronous>, transform_indices = @transform_3, window_bounds = array<i64: 1, 512>}, {transform_indices = @transform_4, window_bounds = array<i64: 8, 8, 128>}]} {
    %c0_i32 = arith.constant 0 : i32
    %0 = arith.cmpi eq, %arg0, %c0_i32 : i32
    %1 = arith.extui %0 : i1 to i32
    %c0_i32_0 = arith.constant 0 : i32
    %2 = arith.cmpi ne, %1, %c0_i32_0 : i32
    scf.if %2 {
      %cst_146 = arith.constant 0.000000e+00 : f32
      %526 = vector.broadcast %cst_146 : f32 to vector<8x128xf32>
      %c0_147 = arith.constant 0 : index
      %c0_148 = arith.constant 0 : index
      %527 = vector.load %arg6[%c0_147, %c0_148] : memref<8x128xf32, #tpu.memory_space<vmem>>, vector<8x128xf32>
      tpu.vector_store %arg6[%c0_147, %c0_148], %526 {strides = array<i32>} : memref<8x128xf32, #tpu.memory_space<vmem>>, vector<8x128xf32>,
      %c0_149 = arith.constant 0 : index
      %c0_150 = arith.constant 0 : index
      %528 = vector.load %arg7[%c0_149, %c0_150] : memref<8x128xf32, #tpu.memory_space<vmem>>, vector<8x128xf32>
      tpu.vector_store %arg7[%c0_149, %c0_150], %526 {strides = array<i32>} : memref<8x128xf32, #tpu.memory_space<vmem>>, vector<8x128xf32>,
      %c0_151 = arith.constant 0 : index
      %c0_152 = arith.constant 0 : index
      %529 = vector.load %arg8[%c0_151, %c0_152] : memref<8x128xf32, #tpu.memory_space<vmem>>, vector<8x128xf32>
      tpu.vector_store %arg8[%c0_151, %c0_152], %526 {strides = array<i32>} : memref<8x128xf32, #tpu.memory_space<vmem>>, vector<8x128xf32>,
      %c0_153 = arith.constant 0 : index
      %c0_154 = arith.constant 0 : index
      %530 = vector.load %arg9[%c0_153, %c0_154] : memref<8x128xf32, #tpu.memory_space<vmem>>, vector<8x128xf32>
      tpu.vector_store %arg9[%c0_153, %c0_154], %526 {strides = array<i32>} : memref<8x128xf32, #tpu.memory_space<vmem>>, vector<8x128xf32>,
    } else {
    }
    %c0 = arith.constant 0 : index
    %c0_1 = arith.constant 0 : index
    %3 = vector.load %arg4[%c0, %c0_1] : memref<1x512xf32, #tpu.memory_space<vmem>>, vector<1x512xf32>
    %4 = vector.shape_cast %3 : vector<1x512xf32> to vector<1x512xf32>
    %5 = vector.broadcast %4 : vector<1x512xf32> to vector<8x512xf32>
    %c0_2 = arith.constant 0 : index
    %c0_3 = arith.constant 0 : index
    %6 = vector.load %arg6[%c0_2, %c0_3] : memref<8x128xf32, #tpu.memory_space<vmem>>, vector<8x128xf32>
    %c0_4 = arith.constant 0 : index
    %c0_5 = arith.constant 0 : index
    %7 = vector.load %arg7[%c0_4, %c0_5] : memref<8x128xf32, #tpu.memory_space<vmem>>, vector<8x128xf32>
    %c0_6 = arith.constant 0 : index
    %c0_7 = arith.constant 0 : index
    %8 = vector.load %arg8[%c0_6, %c0_7] : memref<8x128xf32, #tpu.memory_space<vmem>>, vector<8x128xf32>
    %c0_8 = arith.constant 0 : index
    %c0_9 = arith.constant 0 : index
    %9 = vector.load %arg9[%c0_8, %c0_9] : memref<8x128xf32, #tpu.memory_space<vmem>>, vector<8x128xf32>
    %c0_i32_10 = arith.constant 0 : i32
    %10 = arith.index_cast %c0_i32_10 : i32 to index
    %c0_11 = arith.constant 0 : index
    %c0_12 = arith.constant 0 : index
    %11 = vector.load %arg1[%10, %c0_11, %c0_12] : memref<8x8x512xf32, #tpu.memory_space<vmem>>, vector<1x8x512xf32>
    %12 = vector.shape_cast %11 : vector<1x8x512xf32> to vector<8x512xf32>
    %c0_13 = arith.constant 0 : index
    %c0_14 = arith.constant 0 : index
    %13 = vector.load %arg2[%c0_13, %c0_14] : memref<128x512xf32, #tpu.memory_space<vmem>>, vector<128x512xf32>
    %cst = arith.constant dense<0.000000e+00> : vector<8x512xf32>
    %14 = tpu.matmul %6, %13, %cst {dimension_numbers = #tpu.dot_dimension_numbers<[1], [0], [0], [1], [0, 0, 1, 1], [], []>} : vector<8x128xf32>, vector<128x512xf32>, vector<8x512xf32> -> vector<8x512xf32>
    %15 = arith.addf %12, %14 : vector<8x512xf32>
    %16 = vector.extract_strided_slice %15 {offsets = [0, 0], sizes = [8, 128], strides = [1, 1]} : vector<8x512xf32> to vector<8x128xf32>
    %17 = arith.negf %16 : vector<8x128xf32>
    %18 = math.exp %17 : vector<8x128xf32>
    %cst_15 = arith.constant 1.000000e+00 : f32
    %19 = vector.broadcast %cst_15 : f32 to vector<8x128xf32>
    %20 = arith.addf %19, %18 : vector<8x128xf32>
    %21 = arith.divf %19, %20 : vector<8x128xf32>
    %22 = vector.extract_strided_slice %15 {offsets = [0, 128], sizes = [8, 128], strides = [1, 1]} : vector<8x512xf32> to vector<8x128xf32>
    %23 = arith.negf %22 : vector<8x128xf32>
    %24 = math.exp %23 : vector<8x128xf32>
    %cst_16 = arith.constant 1.000000e+00 : f32
    %25 = vector.broadcast %cst_16 : f32 to vector<8x128xf32>
    %26 = arith.addf %25, %24 : vector<8x128xf32>
    %27 = arith.divf %25, %26 : vector<8x128xf32>
    %28 = vector.extract_strided_slice %15 {offsets = [0, 256], sizes = [8, 128], strides = [1, 1]} : vector<8x512xf32> to vector<8x128xf32>
    %29 = math.tanh %28 : vector<8x128xf32>
    %30 = vector.extract_strided_slice %15 {offsets = [0, 384], sizes = [8, 128], strides = [1, 1]} : vector<8x512xf32> to vector<8x128xf32>
    %31 = arith.negf %30 : vector<8x128xf32>
    %32 = math.exp %31 : vector<8x128xf32>
    %cst_17 = arith.constant 1.000000e+00 : f32
    %33 = vector.broadcast %cst_17 : f32 to vector<8x128xf32>
    %34 = arith.addf %33, %32 : vector<8x128xf32>
    %35 = arith.divf %33, %34 : vector<8x128xf32>
    %36 = arith.mulf %27, %7 : vector<8x128xf32>
    %37 = arith.mulf %21, %29 : vector<8x128xf32>
    %38 = arith.addf %36, %37 : vector<8x128xf32>
    %39 = math.tanh %38 : vector<8x128xf32>
    %40 = arith.mulf %35, %39 : vector<8x128xf32>
    %41 = tpu.concatenate %40, %8 in 1 : vector<8x128xf32>, vector<8x128xf32> -> vector<8x256xf32>
    %c0_18 = arith.constant 0 : index
    %c0_19 = arith.constant 0 : index
    %42 = vector.load %arg3[%c0_18, %c0_19] : memref<256x512xf32, #tpu.memory_space<vmem>>, vector<256x512xf32>
    %cst_20 = arith.constant dense<0.000000e+00> : vector<8x512xf32>
    %43 = tpu.matmul %41, %42, %cst_20 {dimension_numbers = #tpu.dot_dimension_numbers<[1], [0], [0], [1], [0, 0, 1, 1], [], []>} : vector<8x256xf32>, vector<256x512xf32>, vector<8x512xf32> -> vector<8x512xf32>
    %44 = arith.addf %43, %5 : vector<8x512xf32>
    %45 = vector.extract_strided_slice %44 {offsets = [0, 0], sizes = [8, 128], strides = [1, 1]} : vector<8x512xf32> to vector<8x128xf32>
    %46 = arith.negf %45 : vector<8x128xf32>
    %47 = math.exp %46 : vector<8x128xf32>
    %cst_21 = arith.constant 1.000000e+00 : f32
    %48 = vector.broadcast %cst_21 : f32 to vector<8x128xf32>
    %49 = arith.addf %48, %47 : vector<8x128xf32>
    %50 = arith.divf %48, %49 : vector<8x128xf32>
    %51 = vector.extract_strided_slice %44 {offsets = [0, 128], sizes = [8, 128], strides = [1, 1]} : vector<8x512xf32> to vector<8x128xf32>
    %52 = arith.negf %51 : vector<8x128xf32>
    %53 = math.exp %52 : vector<8x128xf32>
    %cst_22 = arith.constant 1.000000e+00 : f32
    %54 = vector.broadcast %cst_22 : f32 to vector<8x128xf32>
    %55 = arith.addf %54, %53 : vector<8x128xf32>
    %56 = arith.divf %54, %55 : vector<8x128xf32>
    %57 = vector.extract_strided_slice %44 {offsets = [0, 256], sizes = [8, 128], strides = [1, 1]} : vector<8x512xf32> to vector<8x128xf32>
    %58 = math.tanh %57 : vector<8x128xf32>
    %59 = vector.extract_strided_slice %44 {offsets = [0, 384], sizes = [8, 128], strides = [1, 1]} : vector<8x512xf32> to vector<8x128xf32>
    %60 = arith.negf %59 : vector<8x128xf32>
    %61 = math.exp %60 : vector<8x128xf32>
    %cst_23 = arith.constant 1.000000e+00 : f32
    %62 = vector.broadcast %cst_23 : f32 to vector<8x128xf32>
    %63 = arith.addf %62, %61 : vector<8x128xf32>
    %64 = arith.divf %62, %63 : vector<8x128xf32>
    %65 = arith.mulf %56, %9 : vector<8x128xf32>
    %66 = arith.mulf %50, %58 : vector<8x128xf32>
    %67 = arith.addf %65, %66 : vector<8x128xf32>
    %68 = math.tanh %67 : vector<8x128xf32>
    %69 = arith.mulf %64, %68 : vector<8x128xf32>
    %70 = arith.index_cast %c0_i32_10 : i32 to index
    %c0_24 = arith.constant 0 : index
    %c0_25 = arith.constant 0 : index
    %71 = vector.load %arg5[%70, %c0_24, %c0_25] : memref<8x8x128xf32, #tpu.memory_space<vmem>>, vector<1x8x128xf32>
    %72 = vector.shape_cast %71 : vector<1x8x128xf32> to vector<8x128xf32>
    %73 = vector.shape_cast %69 : vector<8x128xf32> to vector<1x8x128xf32>
    tpu.vector_store %arg5[%70, %c0_24, %c0_25], %73 {strides = array<i32>} : memref<8x8x128xf32, #tpu.memory_space<vmem>>, vector<1x8x128xf32>,
    %c1_i32 = arith.constant 1 : i32
    %74 = arith.index_cast %c1_i32 : i32 to index
    %c0_26 = arith.constant 0 : index
    %c0_27 = arith.constant 0 : index
    %75 = vector.load %arg1[%74, %c0_26, %c0_27] : memref<8x8x512xf32, #tpu.memory_space<vmem>>, vector<1x8x512xf32>
    %76 = vector.shape_cast %75 : vector<1x8x512xf32> to vector<8x512xf32>
    %c0_28 = arith.constant 0 : index
    %c0_29 = arith.constant 0 : index
    %77 = vector.load %arg2[%c0_28, %c0_29] : memref<128x512xf32, #tpu.memory_space<vmem>>, vector<128x512xf32>
    %cst_30 = arith.constant dense<0.000000e+00> : vector<8x512xf32>
    %78 = tpu.matmul %40, %77, %cst_30 {dimension_numbers = #tpu.dot_dimension_numbers<[1], [0], [0], [1], [0, 0, 1, 1], [], []>} : vector<8x128xf32>, vector<128x512xf32>, vector<8x512xf32> -> vector<8x512xf32>
    %79 = arith.addf %76, %78 : vector<8x512xf32>
    %80 = vector.extract_strided_slice %79 {offsets = [0, 0], sizes = [8, 128], strides = [1, 1]} : vector<8x512xf32> to vector<8x128xf32>
    %81 = arith.negf %80 : vector<8x128xf32>
    %82 = math.exp %81 : vector<8x128xf32>
    %cst_31 = arith.constant 1.000000e+00 : f32
    %83 = vector.broadcast %cst_31 : f32 to vector<8x128xf32>
    %84 = arith.addf %83, %82 : vector<8x128xf32>
    %85 = arith.divf %83, %84 : vector<8x128xf32>
    %86 = vector.extract_strided_slice %79 {offsets = [0, 128], sizes = [8, 128], strides = [1, 1]} : vector<8x512xf32> to vector<8x128xf32>
    %87 = arith.negf %86 : vector<8x128xf32>
    %88 = math.exp %87 : vector<8x128xf32>
    %cst_32 = arith.constant 1.000000e+00 : f32
    %89 = vector.broadcast %cst_32 : f32 to vector<8x128xf32>
    %90 = arith.addf %89, %88 : vector<8x128xf32>
    %91 = arith.divf %89, %90 : vector<8x128xf32>
    %92 = vector.extract_strided_slice %79 {offsets = [0, 256], sizes = [8, 128], strides = [1, 1]} : vector<8x512xf32> to vector<8x128xf32>
    %93 = math.tanh %92 : vector<8x128xf32>
    %94 = vector.extract_strided_slice %79 {offsets = [0, 384], sizes = [8, 128], strides = [1, 1]} : vector<8x512xf32> to vector<8x128xf32>
    %95 = arith.negf %94 : vector<8x128xf32>
    %96 = math.exp %95 : vector<8x128xf32>
    %cst_33 = arith.constant 1.000000e+00 : f32
    %97 = vector.broadcast %cst_33 : f32 to vector<8x128xf32>
    %98 = arith.addf %97, %96 : vector<8x128xf32>
    %99 = arith.divf %97, %98 : vector<8x128xf32>
    %100 = arith.mulf %91, %38 : vector<8x128xf32>
    %101 = arith.mulf %85, %93 : vector<8x128xf32>
    %102 = arith.addf %100, %101 : vector<8x128xf32>
    %103 = math.tanh %102 : vector<8x128xf32>
    %104 = arith.mulf %99, %103 : vector<8x128xf32>
    %105 = tpu.concatenate %104, %69 in 1 : vector<8x128xf32>, vector<8x128xf32> -> vector<8x256xf32>
    %c0_34 = arith.constant 0 : index
    %c0_35 = arith.constant 0 : index
    %106 = vector.load %arg3[%c0_34, %c0_35] : memref<256x512xf32, #tpu.memory_space<vmem>>, vector<256x512xf32>
    %cst_36 = arith.constant dense<0.000000e+00> : vector<8x512xf32>
    %107 = tpu.matmul %105, %106, %cst_36 {dimension_numbers = #tpu.dot_dimension_numbers<[1], [0], [0], [1], [0, 0, 1, 1], [], []>} : vector<8x256xf32>, vector<256x512xf32>, vector<8x512xf32> -> vector<8x512xf32>
    %108 = arith.addf %107, %5 : vector<8x512xf32>
    %109 = vector.extract_strided_slice %108 {offsets = [0, 0], sizes = [8, 128], strides = [1, 1]} : vector<8x512xf32> to vector<8x128xf32>
    %110 = arith.negf %109 : vector<8x128xf32>
    %111 = math.exp %110 : vector<8x128xf32>
    %cst_37 = arith.constant 1.000000e+00 : f32
    %112 = vector.broadcast %cst_37 : f32 to vector<8x128xf32>
    %113 = arith.addf %112, %111 : vector<8x128xf32>
    %114 = arith.divf %112, %113 : vector<8x128xf32>
    %115 = vector.extract_strided_slice %108 {offsets = [0, 128], sizes = [8, 128], strides = [1, 1]} : vector<8x512xf32> to vector<8x128xf32>
    %116 = arith.negf %115 : vector<8x128xf32>
    %117 = math.exp %116 : vector<8x128xf32>
    %cst_38 = arith.constant 1.000000e+00 : f32
    %118 = vector.broadcast %cst_38 : f32 to vector<8x128xf32>
    %119 = arith.addf %118, %117 : vector<8x128xf32>
    %120 = arith.divf %118, %119 : vector<8x128xf32>
    %121 = vector.extract_strided_slice %108 {offsets = [0, 256], sizes = [8, 128], strides = [1, 1]} : vector<8x512xf32> to vector<8x128xf32>
    %122 = math.tanh %121 : vector<8x128xf32>
    %123 = vector.extract_strided_slice %108 {offsets = [0, 384], sizes = [8, 128], strides = [1, 1]} : vector<8x512xf32> to vector<8x128xf32>
    %124 = arith.negf %123 : vector<8x128xf32>
    %125 = math.exp %124 : vector<8x128xf32>
    %cst_39 = arith.constant 1.000000e+00 : f32
    %126 = vector.broadcast %cst_39 : f32 to vector<8x128xf32>
    %127 = arith.addf %126, %125 : vector<8x128xf32>
    %128 = arith.divf %126, %127 : vector<8x128xf32>
    %129 = arith.mulf %120, %67 : vector<8x128xf32>
    %130 = arith.mulf %114, %122 : vector<8x128xf32>
    %131 = arith.addf %129, %130 : vector<8x128xf32>
    %132 = math.tanh %131 : vector<8x128xf32>
    %133 = arith.mulf %128, %132 : vector<8x128xf32>
    %134 = arith.index_cast %c1_i32 : i32 to index
    %c0_40 = arith.constant 0 : index
    %c0_41 = arith.constant 0 : index
    %135 = vector.load %arg5[%134, %c0_40, %c0_41] : memref<8x8x128xf32, #tpu.memory_space<vmem>>, vector<1x8x128xf32>
    %136 = vector.shape_cast %135 : vector<1x8x128xf32> to vector<8x128xf32>
    %137 = vector.shape_cast %133 : vector<8x128xf32> to vector<1x8x128xf32>
    tpu.vector_store %arg5[%134, %c0_40, %c0_41], %137 {strides = array<i32>} : memref<8x8x128xf32, #tpu.memory_space<vmem>>, vector<1x8x128xf32>,
    %c2_i32 = arith.constant 2 : i32
    %138 = arith.index_cast %c2_i32 : i32 to index
    %c0_42 = arith.constant 0 : index
    %c0_43 = arith.constant 0 : index
    %139 = vector.load %arg1[%138, %c0_42, %c0_43] : memref<8x8x512xf32, #tpu.memory_space<vmem>>, vector<1x8x512xf32>
    %140 = vector.shape_cast %139 : vector<1x8x512xf32> to vector<8x512xf32>
    %c0_44 = arith.constant 0 : index
    %c0_45 = arith.constant 0 : index
    %141 = vector.load %arg2[%c0_44, %c0_45] : memref<128x512xf32, #tpu.memory_space<vmem>>, vector<128x512xf32>
    %cst_46 = arith.constant dense<0.000000e+00> : vector<8x512xf32>
    %142 = tpu.matmul %104, %141, %cst_46 {dimension_numbers = #tpu.dot_dimension_numbers<[1], [0], [0], [1], [0, 0, 1, 1], [], []>} : vector<8x128xf32>, vector<128x512xf32>, vector<8x512xf32> -> vector<8x512xf32>
    %143 = arith.addf %140, %142 : vector<8x512xf32>
    %144 = vector.extract_strided_slice %143 {offsets = [0, 0], sizes = [8, 128], strides = [1, 1]} : vector<8x512xf32> to vector<8x128xf32>
    %145 = arith.negf %144 : vector<8x128xf32>
    %146 = math.exp %145 : vector<8x128xf32>
    %cst_47 = arith.constant 1.000000e+00 : f32
    %147 = vector.broadcast %cst_47 : f32 to vector<8x128xf32>
    %148 = arith.addf %147, %146 : vector<8x128xf32>
    %149 = arith.divf %147, %148 : vector<8x128xf32>
    %150 = vector.extract_strided_slice %143 {offsets = [0, 128], sizes = [8, 128], strides = [1, 1]} : vector<8x512xf32> to vector<8x128xf32>
    %151 = arith.negf %150 : vector<8x128xf32>
    %152 = math.exp %151 : vector<8x128xf32>
    %cst_48 = arith.constant 1.000000e+00 : f32
    %153 = vector.broadcast %cst_48 : f32 to vector<8x128xf32>
    %154 = arith.addf %153, %152 : vector<8x128xf32>
    %155 = arith.divf %153, %154 : vector<8x128xf32>
    %156 = vector.extract_strided_slice %143 {offsets = [0, 256], sizes = [8, 128], strides = [1, 1]} : vector<8x512xf32> to vector<8x128xf32>
    %157 = math.tanh %156 : vector<8x128xf32>
    %158 = vector.extract_strided_slice %143 {offsets = [0, 384], sizes = [8, 128], strides = [1, 1]} : vector<8x512xf32> to vector<8x128xf32>
    %159 = arith.negf %158 : vector<8x128xf32>
    %160 = math.exp %159 : vector<8x128xf32>
    %cst_49 = arith.constant 1.000000e+00 : f32
    %161 = vector.broadcast %cst_49 : f32 to vector<8x128xf32>
    %162 = arith.addf %161, %160 : vector<8x128xf32>
    %163 = arith.divf %161, %162 : vector<8x128xf32>
    %164 = arith.mulf %155, %102 : vector<8x128xf32>
    %165 = arith.mulf %149, %157 : vector<8x128xf32>
    %166 = arith.addf %164, %165 : vector<8x128xf32>
    %167 = math.tanh %166 : vector<8x128xf32>
    %168 = arith.mulf %163, %167 : vector<8x128xf32>
    %169 = tpu.concatenate %168, %133 in 1 : vector<8x128xf32>, vector<8x128xf32> -> vector<8x256xf32>
    %c0_50 = arith.constant 0 : index
    %c0_51 = arith.constant 0 : index
    %170 = vector.load %arg3[%c0_50, %c0_51] : memref<256x512xf32, #tpu.memory_space<vmem>>, vector<256x512xf32>
    %cst_52 = arith.constant dense<0.000000e+00> : vector<8x512xf32>
    %171 = tpu.matmul %169, %170, %cst_52 {dimension_numbers = #tpu.dot_dimension_numbers<[1], [0], [0], [1], [0, 0, 1, 1], [], []>} : vector<8x256xf32>, vector<256x512xf32>, vector<8x512xf32> -> vector<8x512xf32>
    %172 = arith.addf %171, %5 : vector<8x512xf32>
    %173 = vector.extract_strided_slice %172 {offsets = [0, 0], sizes = [8, 128], strides = [1, 1]} : vector<8x512xf32> to vector<8x128xf32>
    %174 = arith.negf %173 : vector<8x128xf32>
    %175 = math.exp %174 : vector<8x128xf32>
    %cst_53 = arith.constant 1.000000e+00 : f32
    %176 = vector.broadcast %cst_53 : f32 to vector<8x128xf32>
    %177 = arith.addf %176, %175 : vector<8x128xf32>
    %178 = arith.divf %176, %177 : vector<8x128xf32>
    %179 = vector.extract_strided_slice %172 {offsets = [0, 128], sizes = [8, 128], strides = [1, 1]} : vector<8x512xf32> to vector<8x128xf32>
    %180 = arith.negf %179 : vector<8x128xf32>
    %181 = math.exp %180 : vector<8x128xf32>
    %cst_54 = arith.constant 1.000000e+00 : f32
    %182 = vector.broadcast %cst_54 : f32 to vector<8x128xf32>
    %183 = arith.addf %182, %181 : vector<8x128xf32>
    %184 = arith.divf %182, %183 : vector<8x128xf32>
    %185 = vector.extract_strided_slice %172 {offsets = [0, 256], sizes = [8, 128], strides = [1, 1]} : vector<8x512xf32> to vector<8x128xf32>
    %186 = math.tanh %185 : vector<8x128xf32>
    %187 = vector.extract_strided_slice %172 {offsets = [0, 384], sizes = [8, 128], strides = [1, 1]} : vector<8x512xf32> to vector<8x128xf32>
    %188 = arith.negf %187 : vector<8x128xf32>
    %189 = math.exp %188 : vector<8x128xf32>
    %cst_55 = arith.constant 1.000000e+00 : f32
    %190 = vector.broadcast %cst_55 : f32 to vector<8x128xf32>
    %191 = arith.addf %190, %189 : vector<8x128xf32>
    %192 = arith.divf %190, %191 : vector<8x128xf32>
    %193 = arith.mulf %184, %131 : vector<8x128xf32>
    %194 = arith.mulf %178, %186 : vector<8x128xf32>
    %195 = arith.addf %193, %194 : vector<8x128xf32>
    %196 = math.tanh %195 : vector<8x128xf32>
    %197 = arith.mulf %192, %196 : vector<8x128xf32>
    %198 = arith.index_cast %c2_i32 : i32 to index
    %c0_56 = arith.constant 0 : index
    %c0_57 = arith.constant 0 : index
    %199 = vector.load %arg5[%198, %c0_56, %c0_57] : memref<8x8x128xf32, #tpu.memory_space<vmem>>, vector<1x8x128xf32>
    %200 = vector.shape_cast %199 : vector<1x8x128xf32> to vector<8x128xf32>
    %201 = vector.shape_cast %197 : vector<8x128xf32> to vector<1x8x128xf32>
    tpu.vector_store %arg5[%198, %c0_56, %c0_57], %201 {strides = array<i32>} : memref<8x8x128xf32, #tpu.memory_space<vmem>>, vector<1x8x128xf32>,
    %c3_i32 = arith.constant 3 : i32
    %202 = arith.index_cast %c3_i32 : i32 to index
    %c0_58 = arith.constant 0 : index
    %c0_59 = arith.constant 0 : index
    %203 = vector.load %arg1[%202, %c0_58, %c0_59] : memref<8x8x512xf32, #tpu.memory_space<vmem>>, vector<1x8x512xf32>
    %204 = vector.shape_cast %203 : vector<1x8x512xf32> to vector<8x512xf32>
    %c0_60 = arith.constant 0 : index
    %c0_61 = arith.constant 0 : index
    %205 = vector.load %arg2[%c0_60, %c0_61] : memref<128x512xf32, #tpu.memory_space<vmem>>, vector<128x512xf32>
    %cst_62 = arith.constant dense<0.000000e+00> : vector<8x512xf32>
    %206 = tpu.matmul %168, %205, %cst_62 {dimension_numbers = #tpu.dot_dimension_numbers<[1], [0], [0], [1], [0, 0, 1, 1], [], []>} : vector<8x128xf32>, vector<128x512xf32>, vector<8x512xf32> -> vector<8x512xf32>
    %207 = arith.addf %204, %206 : vector<8x512xf32>
    %208 = vector.extract_strided_slice %207 {offsets = [0, 0], sizes = [8, 128], strides = [1, 1]} : vector<8x512xf32> to vector<8x128xf32>
    %209 = arith.negf %208 : vector<8x128xf32>
    %210 = math.exp %209 : vector<8x128xf32>
    %cst_63 = arith.constant 1.000000e+00 : f32
    %211 = vector.broadcast %cst_63 : f32 to vector<8x128xf32>
    %212 = arith.addf %211, %210 : vector<8x128xf32>
    %213 = arith.divf %211, %212 : vector<8x128xf32>
    %214 = vector.extract_strided_slice %207 {offsets = [0, 128], sizes = [8, 128], strides = [1, 1]} : vector<8x512xf32> to vector<8x128xf32>
    %215 = arith.negf %214 : vector<8x128xf32>
    %216 = math.exp %215 : vector<8x128xf32>
    %cst_64 = arith.constant 1.000000e+00 : f32
    %217 = vector.broadcast %cst_64 : f32 to vector<8x128xf32>
    %218 = arith.addf %217, %216 : vector<8x128xf32>
    %219 = arith.divf %217, %218 : vector<8x128xf32>
    %220 = vector.extract_strided_slice %207 {offsets = [0, 256], sizes = [8, 128], strides = [1, 1]} : vector<8x512xf32> to vector<8x128xf32>
    %221 = math.tanh %220 : vector<8x128xf32>
    %222 = vector.extract_strided_slice %207 {offsets = [0, 384], sizes = [8, 128], strides = [1, 1]} : vector<8x512xf32> to vector<8x128xf32>
    %223 = arith.negf %222 : vector<8x128xf32>
    %224 = math.exp %223 : vector<8x128xf32>
    %cst_65 = arith.constant 1.000000e+00 : f32
    %225 = vector.broadcast %cst_65 : f32 to vector<8x128xf32>
    %226 = arith.addf %225, %224 : vector<8x128xf32>
    %227 = arith.divf %225, %226 : vector<8x128xf32>
    %228 = arith.mulf %219, %166 : vector<8x128xf32>
    %229 = arith.mulf %213, %221 : vector<8x128xf32>
    %230 = arith.addf %228, %229 : vector<8x128xf32>
    %231 = math.tanh %230 : vector<8x128xf32>
    %232 = arith.mulf %227, %231 : vector<8x128xf32>
    %233 = tpu.concatenate %232, %197 in 1 : vector<8x128xf32>, vector<8x128xf32> -> vector<8x256xf32>
    %c0_66 = arith.constant 0 : index
    %c0_67 = arith.constant 0 : index
    %234 = vector.load %arg3[%c0_66, %c0_67] : memref<256x512xf32, #tpu.memory_space<vmem>>, vector<256x512xf32>
    %cst_68 = arith.constant dense<0.000000e+00> : vector<8x512xf32>
    %235 = tpu.matmul %233, %234, %cst_68 {dimension_numbers = #tpu.dot_dimension_numbers<[1], [0], [0], [1], [0, 0, 1, 1], [], []>} : vector<8x256xf32>, vector<256x512xf32>, vector<8x512xf32> -> vector<8x512xf32>
    %236 = arith.addf %235, %5 : vector<8x512xf32>
    %237 = vector.extract_strided_slice %236 {offsets = [0, 0], sizes = [8, 128], strides = [1, 1]} : vector<8x512xf32> to vector<8x128xf32>
    %238 = arith.negf %237 : vector<8x128xf32>
    %239 = math.exp %238 : vector<8x128xf32>
    %cst_69 = arith.constant 1.000000e+00 : f32
    %240 = vector.broadcast %cst_69 : f32 to vector<8x128xf32>
    %241 = arith.addf %240, %239 : vector<8x128xf32>
    %242 = arith.divf %240, %241 : vector<8x128xf32>
    %243 = vector.extract_strided_slice %236 {offsets = [0, 128], sizes = [8, 128], strides = [1, 1]} : vector<8x512xf32> to vector<8x128xf32>
    %244 = arith.negf %243 : vector<8x128xf32>
    %245 = math.exp %244 : vector<8x128xf32>
    %cst_70 = arith.constant 1.000000e+00 : f32
    %246 = vector.broadcast %cst_70 : f32 to vector<8x128xf32>
    %247 = arith.addf %246, %245 : vector<8x128xf32>
    %248 = arith.divf %246, %247 : vector<8x128xf32>
    %249 = vector.extract_strided_slice %236 {offsets = [0, 256], sizes = [8, 128], strides = [1, 1]} : vector<8x512xf32> to vector<8x128xf32>
    %250 = math.tanh %249 : vector<8x128xf32>
    %251 = vector.extract_strided_slice %236 {offsets = [0, 384], sizes = [8, 128], strides = [1, 1]} : vector<8x512xf32> to vector<8x128xf32>
    %252 = arith.negf %251 : vector<8x128xf32>
    %253 = math.exp %252 : vector<8x128xf32>
    %cst_71 = arith.constant 1.000000e+00 : f32
    %254 = vector.broadcast %cst_71 : f32 to vector<8x128xf32>
    %255 = arith.addf %254, %253 : vector<8x128xf32>
    %256 = arith.divf %254, %255 : vector<8x128xf32>
    %257 = arith.mulf %248, %195 : vector<8x128xf32>
    %258 = arith.mulf %242, %250 : vector<8x128xf32>
    %259 = arith.addf %257, %258 : vector<8x128xf32>
    %260 = math.tanh %259 : vector<8x128xf32>
    %261 = arith.mulf %256, %260 : vector<8x128xf32>
    %262 = arith.index_cast %c3_i32 : i32 to index
    %c0_72 = arith.constant 0 : index
    %c0_73 = arith.constant 0 : index
    %263 = vector.load %arg5[%262, %c0_72, %c0_73] : memref<8x8x128xf32, #tpu.memory_space<vmem>>, vector<1x8x128xf32>
    %264 = vector.shape_cast %263 : vector<1x8x128xf32> to vector<8x128xf32>
    %265 = vector.shape_cast %261 : vector<8x128xf32> to vector<1x8x128xf32>
    tpu.vector_store %arg5[%262, %c0_72, %c0_73], %265 {strides = array<i32>} : memref<8x8x128xf32, #tpu.memory_space<vmem>>, vector<1x8x128xf32>,
    %c4_i32 = arith.constant 4 : i32
    %266 = arith.index_cast %c4_i32 : i32 to index
    %c0_74 = arith.constant 0 : index
    %c0_75 = arith.constant 0 : index
    %267 = vector.load %arg1[%266, %c0_74, %c0_75] : memref<8x8x512xf32, #tpu.memory_space<vmem>>, vector<1x8x512xf32>
    %268 = vector.shape_cast %267 : vector<1x8x512xf32> to vector<8x512xf32>
    %c0_76 = arith.constant 0 : index
    %c0_77 = arith.constant 0 : index
    %269 = vector.load %arg2[%c0_76, %c0_77] : memref<128x512xf32, #tpu.memory_space<vmem>>, vector<128x512xf32>
    %cst_78 = arith.constant dense<0.000000e+00> : vector<8x512xf32>
    %270 = tpu.matmul %232, %269, %cst_78 {dimension_numbers = #tpu.dot_dimension_numbers<[1], [0], [0], [1], [0, 0, 1, 1], [], []>} : vector<8x128xf32>, vector<128x512xf32>, vector<8x512xf32> -> vector<8x512xf32>
    %271 = arith.addf %268, %270 : vector<8x512xf32>
    %272 = vector.extract_strided_slice %271 {offsets = [0, 0], sizes = [8, 128], strides = [1, 1]} : vector<8x512xf32> to vector<8x128xf32>
    %273 = arith.negf %272 : vector<8x128xf32>
    %274 = math.exp %273 : vector<8x128xf32>
    %cst_79 = arith.constant 1.000000e+00 : f32
    %275 = vector.broadcast %cst_79 : f32 to vector<8x128xf32>
    %276 = arith.addf %275, %274 : vector<8x128xf32>
    %277 = arith.divf %275, %276 : vector<8x128xf32>
    %278 = vector.extract_strided_slice %271 {offsets = [0, 128], sizes = [8, 128], strides = [1, 1]} : vector<8x512xf32> to vector<8x128xf32>
    %279 = arith.negf %278 : vector<8x128xf32>
    %280 = math.exp %279 : vector<8x128xf32>
    %cst_80 = arith.constant 1.000000e+00 : f32
    %281 = vector.broadcast %cst_80 : f32 to vector<8x128xf32>
    %282 = arith.addf %281, %280 : vector<8x128xf32>
    %283 = arith.divf %281, %282 : vector<8x128xf32>
    %284 = vector.extract_strided_slice %271 {offsets = [0, 256], sizes = [8, 128], strides = [1, 1]} : vector<8x512xf32> to vector<8x128xf32>
    %285 = math.tanh %284 : vector<8x128xf32>
    %286 = vector.extract_strided_slice %271 {offsets = [0, 384], sizes = [8, 128], strides = [1, 1]} : vector<8x512xf32> to vector<8x128xf32>
    %287 = arith.negf %286 : vector<8x128xf32>
    %288 = math.exp %287 : vector<8x128xf32>
    %cst_81 = arith.constant 1.000000e+00 : f32
    %289 = vector.broadcast %cst_81 : f32 to vector<8x128xf32>
    %290 = arith.addf %289, %288 : vector<8x128xf32>
    %291 = arith.divf %289, %290 : vector<8x128xf32>
    %292 = arith.mulf %283, %230 : vector<8x128xf32>
    %293 = arith.mulf %277, %285 : vector<8x128xf32>
    %294 = arith.addf %292, %293 : vector<8x128xf32>
    %295 = math.tanh %294 : vector<8x128xf32>
    %296 = arith.mulf %291, %295 : vector<8x128xf32>
    %297 = tpu.concatenate %296, %261 in 1 : vector<8x128xf32>, vector<8x128xf32> -> vector<8x256xf32>
    %c0_82 = arith.constant 0 : index
    %c0_83 = arith.constant 0 : index
    %298 = vector.load %arg3[%c0_82, %c0_83] : memref<256x512xf32, #tpu.memory_space<vmem>>, vector<256x512xf32>
    %cst_84 = arith.constant dense<0.000000e+00> : vector<8x512xf32>
    %299 = tpu.matmul %297, %298, %cst_84 {dimension_numbers = #tpu.dot_dimension_numbers<[1], [0], [0], [1], [0, 0, 1, 1], [], []>} : vector<8x256xf32>, vector<256x512xf32>, vector<8x512xf32> -> vector<8x512xf32>
    %300 = arith.addf %299, %5 : vector<8x512xf32>
    %301 = vector.extract_strided_slice %300 {offsets = [0, 0], sizes = [8, 128], strides = [1, 1]} : vector<8x512xf32> to vector<8x128xf32>
    %302 = arith.negf %301 : vector<8x128xf32>
    %303 = math.exp %302 : vector<8x128xf32>
    %cst_85 = arith.constant 1.000000e+00 : f32
    %304 = vector.broadcast %cst_85 : f32 to vector<8x128xf32>
    %305 = arith.addf %304, %303 : vector<8x128xf32>
    %306 = arith.divf %304, %305 : vector<8x128xf32>
    %307 = vector.extract_strided_slice %300 {offsets = [0, 128], sizes = [8, 128], strides = [1, 1]} : vector<8x512xf32> to vector<8x128xf32>
    %308 = arith.negf %307 : vector<8x128xf32>
    %309 = math.exp %308 : vector<8x128xf32>
    %cst_86 = arith.constant 1.000000e+00 : f32
    %310 = vector.broadcast %cst_86 : f32 to vector<8x128xf32>
    %311 = arith.addf %310, %309 : vector<8x128xf32>
    %312 = arith.divf %310, %311 : vector<8x128xf32>
    %313 = vector.extract_strided_slice %300 {offsets = [0, 256], sizes = [8, 128], strides = [1, 1]} : vector<8x512xf32> to vector<8x128xf32>
    %314 = math.tanh %313 : vector<8x128xf32>
    %315 = vector.extract_strided_slice %300 {offsets = [0, 384], sizes = [8, 128], strides = [1, 1]} : vector<8x512xf32> to vector<8x128xf32>
    %316 = arith.negf %315 : vector<8x128xf32>
    %317 = math.exp %316 : vector<8x128xf32>
    %cst_87 = arith.constant 1.000000e+00 : f32
    %318 = vector.broadcast %cst_87 : f32 to vector<8x128xf32>
    %319 = arith.addf %318, %317 : vector<8x128xf32>
    %320 = arith.divf %318, %319 : vector<8x128xf32>
    %321 = arith.mulf %312, %259 : vector<8x128xf32>
    %322 = arith.mulf %306, %314 : vector<8x128xf32>
    %323 = arith.addf %321, %322 : vector<8x128xf32>
    %324 = math.tanh %323 : vector<8x128xf32>
    %325 = arith.mulf %320, %324 : vector<8x128xf32>
    %326 = arith.index_cast %c4_i32 : i32 to index
    %c0_88 = arith.constant 0 : index
    %c0_89 = arith.constant 0 : index
    %327 = vector.load %arg5[%326, %c0_88, %c0_89] : memref<8x8x128xf32, #tpu.memory_space<vmem>>, vector<1x8x128xf32>
    %328 = vector.shape_cast %327 : vector<1x8x128xf32> to vector<8x128xf32>
    %329 = vector.shape_cast %325 : vector<8x128xf32> to vector<1x8x128xf32>
    tpu.vector_store %arg5[%326, %c0_88, %c0_89], %329 {strides = array<i32>} : memref<8x8x128xf32, #tpu.memory_space<vmem>>, vector<1x8x128xf32>,
    %c5_i32 = arith.constant 5 : i32
    %330 = arith.index_cast %c5_i32 : i32 to index
    %c0_90 = arith.constant 0 : index
    %c0_91 = arith.constant 0 : index
    %331 = vector.load %arg1[%330, %c0_90, %c0_91] : memref<8x8x512xf32, #tpu.memory_space<vmem>>, vector<1x8x512xf32>
    %332 = vector.shape_cast %331 : vector<1x8x512xf32> to vector<8x512xf32>
    %c0_92 = arith.constant 0 : index
    %c0_93 = arith.constant 0 : index
    %333 = vector.load %arg2[%c0_92, %c0_93] : memref<128x512xf32, #tpu.memory_space<vmem>>, vector<128x512xf32>
    %cst_94 = arith.constant dense<0.000000e+00> : vector<8x512xf32>
    %334 = tpu.matmul %296, %333, %cst_94 {dimension_numbers = #tpu.dot_dimension_numbers<[1], [0], [0], [1], [0, 0, 1, 1], [], []>} : vector<8x128xf32>, vector<128x512xf32>, vector<8x512xf32> -> vector<8x512xf32>
    %335 = arith.addf %332, %334 : vector<8x512xf32>
    %336 = vector.extract_strided_slice %335 {offsets = [0, 0], sizes = [8, 128], strides = [1, 1]} : vector<8x512xf32> to vector<8x128xf32>
    %337 = arith.negf %336 : vector<8x128xf32>
    %338 = math.exp %337 : vector<8x128xf32>
    %cst_95 = arith.constant 1.000000e+00 : f32
    %339 = vector.broadcast %cst_95 : f32 to vector<8x128xf32>
    %340 = arith.addf %339, %338 : vector<8x128xf32>
    %341 = arith.divf %339, %340 : vector<8x128xf32>
    %342 = vector.extract_strided_slice %335 {offsets = [0, 128], sizes = [8, 128], strides = [1, 1]} : vector<8x512xf32> to vector<8x128xf32>
    %343 = arith.negf %342 : vector<8x128xf32>
    %344 = math.exp %343 : vector<8x128xf32>
    %cst_96 = arith.constant 1.000000e+00 : f32
    %345 = vector.broadcast %cst_96 : f32 to vector<8x128xf32>
    %346 = arith.addf %345, %344 : vector<8x128xf32>
    %347 = arith.divf %345, %346 : vector<8x128xf32>
    %348 = vector.extract_strided_slice %335 {offsets = [0, 256], sizes = [8, 128], strides = [1, 1]} : vector<8x512xf32> to vector<8x128xf32>
    %349 = math.tanh %348 : vector<8x128xf32>
    %350 = vector.extract_strided_slice %335 {offsets = [0, 384], sizes = [8, 128], strides = [1, 1]} : vector<8x512xf32> to vector<8x128xf32>
    %351 = arith.negf %350 : vector<8x128xf32>
    %352 = math.exp %351 : vector<8x128xf32>
    %cst_97 = arith.constant 1.000000e+00 : f32
    %353 = vector.broadcast %cst_97 : f32 to vector<8x128xf32>
    %354 = arith.addf %353, %352 : vector<8x128xf32>
    %355 = arith.divf %353, %354 : vector<8x128xf32>
    %356 = arith.mulf %347, %294 : vector<8x128xf32>
    %357 = arith.mulf %341, %349 : vector<8x128xf32>
    %358 = arith.addf %356, %357 : vector<8x128xf32>
    %359 = math.tanh %358 : vector<8x128xf32>
    %360 = arith.mulf %355, %359 : vector<8x128xf32>
    %361 = tpu.concatenate %360, %325 in 1 : vector<8x128xf32>, vector<8x128xf32> -> vector<8x256xf32>
    %c0_98 = arith.constant 0 : index
    %c0_99 = arith.constant 0 : index
    %362 = vector.load %arg3[%c0_98, %c0_99] : memref<256x512xf32, #tpu.memory_space<vmem>>, vector<256x512xf32>
    %cst_100 = arith.constant dense<0.000000e+00> : vector<8x512xf32>
    %363 = tpu.matmul %361, %362, %cst_100 {dimension_numbers = #tpu.dot_dimension_numbers<[1], [0], [0], [1], [0, 0, 1, 1], [], []>} : vector<8x256xf32>, vector<256x512xf32>, vector<8x512xf32> -> vector<8x512xf32>
    %364 = arith.addf %363, %5 : vector<8x512xf32>
    %365 = vector.extract_strided_slice %364 {offsets = [0, 0], sizes = [8, 128], strides = [1, 1]} : vector<8x512xf32> to vector<8x128xf32>
    %366 = arith.negf %365 : vector<8x128xf32>
    %367 = math.exp %366 : vector<8x128xf32>
    %cst_101 = arith.constant 1.000000e+00 : f32
    %368 = vector.broadcast %cst_101 : f32 to vector<8x128xf32>
    %369 = arith.addf %368, %367 : vector<8x128xf32>
    %370 = arith.divf %368, %369 : vector<8x128xf32>
    %371 = vector.extract_strided_slice %364 {offsets = [0, 128], sizes = [8, 128], strides = [1, 1]} : vector<8x512xf32> to vector<8x128xf32>
    %372 = arith.negf %371 : vector<8x128xf32>
    %373 = math.exp %372 : vector<8x128xf32>
    %cst_102 = arith.constant 1.000000e+00 : f32
    %374 = vector.broadcast %cst_102 : f32 to vector<8x128xf32>
    %375 = arith.addf %374, %373 : vector<8x128xf32>
    %376 = arith.divf %374, %375 : vector<8x128xf32>
    %377 = vector.extract_strided_slice %364 {offsets = [0, 256], sizes = [8, 128], strides = [1, 1]} : vector<8x512xf32> to vector<8x128xf32>
    %378 = math.tanh %377 : vector<8x128xf32>
    %379 = vector.extract_strided_slice %364 {offsets = [0, 384], sizes = [8, 128], strides = [1, 1]} : vector<8x512xf32> to vector<8x128xf32>
    %380 = arith.negf %379 : vector<8x128xf32>
    %381 = math.exp %380 : vector<8x128xf32>
    %cst_103 = arith.constant 1.000000e+00 : f32
    %382 = vector.broadcast %cst_103 : f32 to vector<8x128xf32>
    %383 = arith.addf %382, %381 : vector<8x128xf32>
    %384 = arith.divf %382, %383 : vector<8x128xf32>
    %385 = arith.mulf %376, %323 : vector<8x128xf32>
    %386 = arith.mulf %370, %378 : vector<8x128xf32>
    %387 = arith.addf %385, %386 : vector<8x128xf32>
    %388 = math.tanh %387 : vector<8x128xf32>
    %389 = arith.mulf %384, %388 : vector<8x128xf32>
    %390 = arith.index_cast %c5_i32 : i32 to index
    %c0_104 = arith.constant 0 : index
    %c0_105 = arith.constant 0 : index
    %391 = vector.load %arg5[%390, %c0_104, %c0_105] : memref<8x8x128xf32, #tpu.memory_space<vmem>>, vector<1x8x128xf32>
    %392 = vector.shape_cast %391 : vector<1x8x128xf32> to vector<8x128xf32>
    %393 = vector.shape_cast %389 : vector<8x128xf32> to vector<1x8x128xf32>
    tpu.vector_store %arg5[%390, %c0_104, %c0_105], %393 {strides = array<i32>} : memref<8x8x128xf32, #tpu.memory_space<vmem>>, vector<1x8x128xf32>,
    %c6_i32 = arith.constant 6 : i32
    %394 = arith.index_cast %c6_i32 : i32 to index
    %c0_106 = arith.constant 0 : index
    %c0_107 = arith.constant 0 : index
    %395 = vector.load %arg1[%394, %c0_106, %c0_107] : memref<8x8x512xf32, #tpu.memory_space<vmem>>, vector<1x8x512xf32>
    %396 = vector.shape_cast %395 : vector<1x8x512xf32> to vector<8x512xf32>
    %c0_108 = arith.constant 0 : index
    %c0_109 = arith.constant 0 : index
    %397 = vector.load %arg2[%c0_108, %c0_109] : memref<128x512xf32, #tpu.memory_space<vmem>>, vector<128x512xf32>
    %cst_110 = arith.constant dense<0.000000e+00> : vector<8x512xf32>
    %398 = tpu.matmul %360, %397, %cst_110 {dimension_numbers = #tpu.dot_dimension_numbers<[1], [0], [0], [1], [0, 0, 1, 1], [], []>} : vector<8x128xf32>, vector<128x512xf32>, vector<8x512xf32> -> vector<8x512xf32>
    %399 = arith.addf %396, %398 : vector<8x512xf32>
    %400 = vector.extract_strided_slice %399 {offsets = [0, 0], sizes = [8, 128], strides = [1, 1]} : vector<8x512xf32> to vector<8x128xf32>
    %401 = arith.negf %400 : vector<8x128xf32>
    %402 = math.exp %401 : vector<8x128xf32>
    %cst_111 = arith.constant 1.000000e+00 : f32
    %403 = vector.broadcast %cst_111 : f32 to vector<8x128xf32>
    %404 = arith.addf %403, %402 : vector<8x128xf32>
    %405 = arith.divf %403, %404 : vector<8x128xf32>
    %406 = vector.extract_strided_slice %399 {offsets = [0, 128], sizes = [8, 128], strides = [1, 1]} : vector<8x512xf32> to vector<8x128xf32>
    %407 = arith.negf %406 : vector<8x128xf32>
    %408 = math.exp %407 : vector<8x128xf32>
    %cst_112 = arith.constant 1.000000e+00 : f32
    %409 = vector.broadcast %cst_112 : f32 to vector<8x128xf32>
    %410 = arith.addf %409, %408 : vector<8x128xf32>
    %411 = arith.divf %409, %410 : vector<8x128xf32>
    %412 = vector.extract_strided_slice %399 {offsets = [0, 256], sizes = [8, 128], strides = [1, 1]} : vector<8x512xf32> to vector<8x128xf32>
    %413 = math.tanh %412 : vector<8x128xf32>
    %414 = vector.extract_strided_slice %399 {offsets = [0, 384], sizes = [8, 128], strides = [1, 1]} : vector<8x512xf32> to vector<8x128xf32>
    %415 = arith.negf %414 : vector<8x128xf32>
    %416 = math.exp %415 : vector<8x128xf32>
    %cst_113 = arith.constant 1.000000e+00 : f32
    %417 = vector.broadcast %cst_113 : f32 to vector<8x128xf32>
    %418 = arith.addf %417, %416 : vector<8x128xf32>
    %419 = arith.divf %417, %418 : vector<8x128xf32>
    %420 = arith.mulf %411, %358 : vector<8x128xf32>
    %421 = arith.mulf %405, %413 : vector<8x128xf32>
    %422 = arith.addf %420, %421 : vector<8x128xf32>
    %423 = math.tanh %422 : vector<8x128xf32>
    %424 = arith.mulf %419, %423 : vector<8x128xf32>
    %425 = tpu.concatenate %424, %389 in 1 : vector<8x128xf32>, vector<8x128xf32> -> vector<8x256xf32>
    %c0_114 = arith.constant 0 : index
    %c0_115 = arith.constant 0 : index
    %426 = vector.load %arg3[%c0_114, %c0_115] : memref<256x512xf32, #tpu.memory_space<vmem>>, vector<256x512xf32>
    %cst_116 = arith.constant dense<0.000000e+00> : vector<8x512xf32>
    %427 = tpu.matmul %425, %426, %cst_116 {dimension_numbers = #tpu.dot_dimension_numbers<[1], [0], [0], [1], [0, 0, 1, 1], [], []>} : vector<8x256xf32>, vector<256x512xf32>, vector<8x512xf32> -> vector<8x512xf32>
    %428 = arith.addf %427, %5 : vector<8x512xf32>
    %429 = vector.extract_strided_slice %428 {offsets = [0, 0], sizes = [8, 128], strides = [1, 1]} : vector<8x512xf32> to vector<8x128xf32>
    %430 = arith.negf %429 : vector<8x128xf32>
    %431 = math.exp %430 : vector<8x128xf32>
    %cst_117 = arith.constant 1.000000e+00 : f32
    %432 = vector.broadcast %cst_117 : f32 to vector<8x128xf32>
    %433 = arith.addf %432, %431 : vector<8x128xf32>
    %434 = arith.divf %432, %433 : vector<8x128xf32>
    %435 = vector.extract_strided_slice %428 {offsets = [0, 128], sizes = [8, 128], strides = [1, 1]} : vector<8x512xf32> to vector<8x128xf32>
    %436 = arith.negf %435 : vector<8x128xf32>
    %437 = math.exp %436 : vector<8x128xf32>
    %cst_118 = arith.constant 1.000000e+00 : f32
    %438 = vector.broadcast %cst_118 : f32 to vector<8x128xf32>
    %439 = arith.addf %438, %437 : vector<8x128xf32>
    %440 = arith.divf %438, %439 : vector<8x128xf32>
    %441 = vector.extract_strided_slice %428 {offsets = [0, 256], sizes = [8, 128], strides = [1, 1]} : vector<8x512xf32> to vector<8x128xf32>
    %442 = math.tanh %441 : vector<8x128xf32>
    %443 = vector.extract_strided_slice %428 {offsets = [0, 384], sizes = [8, 128], strides = [1, 1]} : vector<8x512xf32> to vector<8x128xf32>
    %444 = arith.negf %443 : vector<8x128xf32>
    %445 = math.exp %444 : vector<8x128xf32>
    %cst_119 = arith.constant 1.000000e+00 : f32
    %446 = vector.broadcast %cst_119 : f32 to vector<8x128xf32>
    %447 = arith.addf %446, %445 : vector<8x128xf32>
    %448 = arith.divf %446, %447 : vector<8x128xf32>
    %449 = arith.mulf %440, %387 : vector<8x128xf32>
    %450 = arith.mulf %434, %442 : vector<8x128xf32>
    %451 = arith.addf %449, %450 : vector<8x128xf32>
    %452 = math.tanh %451 : vector<8x128xf32>
    %453 = arith.mulf %448, %452 : vector<8x128xf32>
    %454 = arith.index_cast %c6_i32 : i32 to index
    %c0_120 = arith.constant 0 : index
    %c0_121 = arith.constant 0 : index
    %455 = vector.load %arg5[%454, %c0_120, %c0_121] : memref<8x8x128xf32, #tpu.memory_space<vmem>>, vector<1x8x128xf32>
    %456 = vector.shape_cast %455 : vector<1x8x128xf32> to vector<8x128xf32>
    %457 = vector.shape_cast %453 : vector<8x128xf32> to vector<1x8x128xf32>
    tpu.vector_store %arg5[%454, %c0_120, %c0_121], %457 {strides = array<i32>} : memref<8x8x128xf32, #tpu.memory_space<vmem>>, vector<1x8x128xf32>,
    %c7_i32 = arith.constant 7 : i32
    %458 = arith.index_cast %c7_i32 : i32 to index
    %c0_122 = arith.constant 0 : index
    %c0_123 = arith.constant 0 : index
    %459 = vector.load %arg1[%458, %c0_122, %c0_123] : memref<8x8x512xf32, #tpu.memory_space<vmem>>, vector<1x8x512xf32>
    %460 = vector.shape_cast %459 : vector<1x8x512xf32> to vector<8x512xf32>
    %c0_124 = arith.constant 0 : index
    %c0_125 = arith.constant 0 : index
    %461 = vector.load %arg2[%c0_124, %c0_125] : memref<128x512xf32, #tpu.memory_space<vmem>>, vector<128x512xf32>
    %cst_126 = arith.constant dense<0.000000e+00> : vector<8x512xf32>
    %462 = tpu.matmul %424, %461, %cst_126 {dimension_numbers = #tpu.dot_dimension_numbers<[1], [0], [0], [1], [0, 0, 1, 1], [], []>} : vector<8x128xf32>, vector<128x512xf32>, vector<8x512xf32> -> vector<8x512xf32>
    %463 = arith.addf %460, %462 : vector<8x512xf32>
    %464 = vector.extract_strided_slice %463 {offsets = [0, 0], sizes = [8, 128], strides = [1, 1]} : vector<8x512xf32> to vector<8x128xf32>
    %465 = arith.negf %464 : vector<8x128xf32>
    %466 = math.exp %465 : vector<8x128xf32>
    %cst_127 = arith.constant 1.000000e+00 : f32
    %467 = vector.broadcast %cst_127 : f32 to vector<8x128xf32>
    %468 = arith.addf %467, %466 : vector<8x128xf32>
    %469 = arith.divf %467, %468 : vector<8x128xf32>
    %470 = vector.extract_strided_slice %463 {offsets = [0, 128], sizes = [8, 128], strides = [1, 1]} : vector<8x512xf32> to vector<8x128xf32>
    %471 = arith.negf %470 : vector<8x128xf32>
    %472 = math.exp %471 : vector<8x128xf32>
    %cst_128 = arith.constant 1.000000e+00 : f32
    %473 = vector.broadcast %cst_128 : f32 to vector<8x128xf32>
    %474 = arith.addf %473, %472 : vector<8x128xf32>
    %475 = arith.divf %473, %474 : vector<8x128xf32>
    %476 = vector.extract_strided_slice %463 {offsets = [0, 256], sizes = [8, 128], strides = [1, 1]} : vector<8x512xf32> to vector<8x128xf32>
    %477 = math.tanh %476 : vector<8x128xf32>
    %478 = vector.extract_strided_slice %463 {offsets = [0, 384], sizes = [8, 128], strides = [1, 1]} : vector<8x512xf32> to vector<8x128xf32>
    %479 = arith.negf %478 : vector<8x128xf32>
    %480 = math.exp %479 : vector<8x128xf32>
    %cst_129 = arith.constant 1.000000e+00 : f32
    %481 = vector.broadcast %cst_129 : f32 to vector<8x128xf32>
    %482 = arith.addf %481, %480 : vector<8x128xf32>
    %483 = arith.divf %481, %482 : vector<8x128xf32>
    %484 = arith.mulf %475, %422 : vector<8x128xf32>
    %485 = arith.mulf %469, %477 : vector<8x128xf32>
    %486 = arith.addf %484, %485 : vector<8x128xf32>
    %487 = math.tanh %486 : vector<8x128xf32>
    %488 = arith.mulf %483, %487 : vector<8x128xf32>
    %489 = tpu.concatenate %488, %453 in 1 : vector<8x128xf32>, vector<8x128xf32> -> vector<8x256xf32>
    %c0_130 = arith.constant 0 : index
    %c0_131 = arith.constant 0 : index
    %490 = vector.load %arg3[%c0_130, %c0_131] : memref<256x512xf32, #tpu.memory_space<vmem>>, vector<256x512xf32>
    %cst_132 = arith.constant dense<0.000000e+00> : vector<8x512xf32>
    %491 = tpu.matmul %489, %490, %cst_132 {dimension_numbers = #tpu.dot_dimension_numbers<[1], [0], [0], [1], [0, 0, 1, 1], [], []>} : vector<8x256xf32>, vector<256x512xf32>, vector<8x512xf32> -> vector<8x512xf32>
    %492 = arith.addf %491, %5 : vector<8x512xf32>
    %493 = vector.extract_strided_slice %492 {offsets = [0, 0], sizes = [8, 128], strides = [1, 1]} : vector<8x512xf32> to vector<8x128xf32>
    %494 = arith.negf %493 : vector<8x128xf32>
    %495 = math.exp %494 : vector<8x128xf32>
    %cst_133 = arith.constant 1.000000e+00 : f32
    %496 = vector.broadcast %cst_133 : f32 to vector<8x128xf32>
    %497 = arith.addf %496, %495 : vector<8x128xf32>
    %498 = arith.divf %496, %497 : vector<8x128xf32>
    %499 = vector.extract_strided_slice %492 {offsets = [0, 128], sizes = [8, 128], strides = [1, 1]} : vector<8x512xf32> to vector<8x128xf32>
    %500 = arith.negf %499 : vector<8x128xf32>
    %501 = math.exp %500 : vector<8x128xf32>
    %cst_134 = arith.constant 1.000000e+00 : f32
    %502 = vector.broadcast %cst_134 : f32 to vector<8x128xf32>
    %503 = arith.addf %502, %501 : vector<8x128xf32>
    %504 = arith.divf %502, %503 : vector<8x128xf32>
    %505 = vector.extract_strided_slice %492 {offsets = [0, 256], sizes = [8, 128], strides = [1, 1]} : vector<8x512xf32> to vector<8x128xf32>
    %506 = math.tanh %505 : vector<8x128xf32>
    %507 = vector.extract_strided_slice %492 {offsets = [0, 384], sizes = [8, 128], strides = [1, 1]} : vector<8x512xf32> to vector<8x128xf32>
    %508 = arith.negf %507 : vector<8x128xf32>
    %509 = math.exp %508 : vector<8x128xf32>
    %cst_135 = arith.constant 1.000000e+00 : f32
    %510 = vector.broadcast %cst_135 : f32 to vector<8x128xf32>
    %511 = arith.addf %510, %509 : vector<8x128xf32>
    %512 = arith.divf %510, %511 : vector<8x128xf32>
    %513 = arith.mulf %504, %451 : vector<8x128xf32>
    %514 = arith.mulf %498, %506 : vector<8x128xf32>
    %515 = arith.addf %513, %514 : vector<8x128xf32>
    %516 = math.tanh %515 : vector<8x128xf32>
    %517 = arith.mulf %512, %516 : vector<8x128xf32>
    %518 = arith.index_cast %c7_i32 : i32 to index
    %c0_136 = arith.constant 0 : index
    %c0_137 = arith.constant 0 : index
    %519 = vector.load %arg5[%518, %c0_136, %c0_137] : memref<8x8x128xf32, #tpu.memory_space<vmem>>, vector<1x8x128xf32>
    %520 = vector.shape_cast %519 : vector<1x8x128xf32> to vector<8x128xf32>
    %521 = vector.shape_cast %517 : vector<8x128xf32> to vector<1x8x128xf32>
    tpu.vector_store %arg5[%518, %c0_136, %c0_137], %521 {strides = array<i32>} : memref<8x8x128xf32, #tpu.memory_space<vmem>>, vector<1x8x128xf32>,
    %c8_i32 = arith.constant 8 : i32
    %c0_138 = arith.constant 0 : index
    %c0_139 = arith.constant 0 : index
    %522 = vector.load %arg6[%c0_138, %c0_139] : memref<8x128xf32, #tpu.memory_space<vmem>>, vector<8x128xf32>
    tpu.vector_store %arg6[%c0_138, %c0_139], %488 {strides = array<i32>} : memref<8x128xf32, #tpu.memory_space<vmem>>, vector<8x128xf32>,
    %c0_140 = arith.constant 0 : index
    %c0_141 = arith.constant 0 : index
    %523 = vector.load %arg7[%c0_140, %c0_141] : memref<8x128xf32, #tpu.memory_space<vmem>>, vector<8x128xf32>
    tpu.vector_store %arg7[%c0_140, %c0_141], %486 {strides = array<i32>} : memref<8x128xf32, #tpu.memory_space<vmem>>, vector<8x128xf32>,
    %c0_142 = arith.constant 0 : index
    %c0_143 = arith.constant 0 : index
    %524 = vector.load %arg8[%c0_142, %c0_143] : memref<8x128xf32, #tpu.memory_space<vmem>>, vector<8x128xf32>
    tpu.vector_store %arg8[%c0_142, %c0_143], %517 {strides = array<i32>} : memref<8x128xf32, #tpu.memory_space<vmem>>, vector<8x128xf32>,
    %c0_144 = arith.constant 0 : index
    %c0_145 = arith.constant 0 : index
    %525 = vector.load %arg9[%c0_144, %c0_145] : memref<8x128xf32, #tpu.memory_space<vmem>>, vector<8x128xf32>
    tpu.vector_store %arg9[%c0_144, %c0_145], %515 {strides = array<i32>} : memref<8x128xf32, #tpu.memory_space<vmem>>, vector<8x128xf32>,
    return
  }
  func.func @transform_0(%arg0: i32) -> (i32, i32, i32) {
    %c0_i32 = arith.constant 0 : i32
    %c0_i32_0 = arith.constant 0 : i32
    %c0_i32_1 = arith.constant 0 : i32
    return %arg0, %c0_i32, %c0_i32_0 : i32, i32, i32
  }
  func.func @transform_1(%arg0: i32) -> (i32, i32) {
    %c0_i32 = arith.constant 0 : i32
    %c0_i32_0 = arith.constant 0 : i32
    %c0_i32_1 = arith.constant 0 : i32
    return %c0_i32, %c0_i32_0 : i32, i32
  }
  func.func @transform_2(%arg0: i32) -> (i32, i32) {
    %c0_i32 = arith.constant 0 : i32
    %c0_i32_0 = arith.constant 0 : i32
    %c0_i32_1 = arith.constant 0 : i32
    return %c0_i32, %c0_i32_0 : i32, i32
  }
  func.func @transform_3(%arg0: i32) -> (i32, i32) {
    %c0_i32 = arith.constant 0 : i32
    %c0_i32_0 = arith.constant 0 : i32
    %c0_i32_1 = arith.constant 0 : i32
    return %c0_i32, %c0_i32_0 : i32, i32
  }
  func.func @transform_4(%arg0: i32) -> (i32, i32, i32) {
    %c0_i32 = arith.constant 0 : i32
    %c0_i32_0 = arith.constant 0 : i32
    %c0_i32_1 = arith.constant 0 : i32
    return %arg0, %c0_i32, %c0_i32_0 : i32, i32, i32
  }
}

</mosaic_0001>

<llo_original>
// kernel: tpu_custom_call.1
$region0: #{tpu_custom_call.1}
  #allocation0 [shape = 'u32[]', space=smem, size = 0x4, offset = 0x4, fixed_abs, tag = 'smem constant byte address 0x4 - core index']
  #allocation1 [shape = 'u32[72,128]{1,0:T(1,128)}', space=vmem, size = 0x9000, scoped, tag = 'internal scratch']
  #allocation2 [shape = 'f32[8,128]{1,0:T(8,128)}', space=vmem, size = 0x1000, scoped, tag = 'scratch operand']
  #allocation3 [shape = 'f32[8,128]{1,0:T(8,128)}', space=vmem, size = 0x1000, scoped, tag = 'scratch operand']
  #allocation4 [shape = 'f32[8,128]{1,0:T(8,128)}', space=vmem, size = 0x1000, scoped, tag = 'scratch operand']
  #allocation5 [shape = 'f32[8,128]{1,0:T(8,128)}', space=vmem, size = 0x1000, scoped, tag = 'scratch operand']
  %s0 = inlined_call_operand.hbm [shape: f32[8,8,512], index: 0, kind: input, shape index: {}]
  %s1 = inlined_call_operand.hbm [shape: f32[128,512], index: 1, kind: input, shape index: {}]
  %s2 = inlined_call_operand.hbm [shape: f32[256,512], index: 2, kind: input, shape index: {}]
  %s3 = inlined_call_operand.hbm [shape: f32[1,512], index: 3, kind: input, shape index: {}]
  %s4 = inlined_call_operand.hbm [shape: f32[8,8,128], index: 4, kind: output, shape index: {}]
  %s5 = sld [smem:[#allocation0]]
  $region46: #{tpu_custom_call.1} parent=0
    _
  %s7 = ssub.s32 1, %s5
  %s8 = scalar_select 0, %s7, %s5
  $region1: #{tpu_custom_call.1} parent=0
    #allocation6 [shape = 'u8[131072]{0}', space=vmem, size = 0x20000, scoped, tag = 'input window, operand 0, single buffered']
    #allocation7 [shape = 's32[1]{0}', space=sflag, size = 0x4, scoped, tag = 'scoped memory for tpu_custom_call.1']
    #allocation8 [shape = 's32[1]{0}', space=sflag, size = 0x4, scoped, tag = 'scoped memory for tpu_custom_call.1']
    #allocation9 [shape = 'u8[262144]{0}', space=vmem, size = 0x40000, scoped, tag = 'input window, operand 1, single buffered']
    #allocation10 [shape = 's32[1]{0}', space=sflag, size = 0x4, scoped, tag = 'scoped memory for tpu_custom_call.1']
    #allocation11 [shape = 'u8[524288]{0}', space=vmem, size = 0x80000, scoped, tag = 'input window, operand 2, single buffered']
    #allocation12 [shape = 'u8[2048]{0}', space=vmem, size = 0x800, scoped, tag = 'input window, operand 3, single buffered']
    #allocation13 [shape = 's32[1]{0}', space=sflag, size = 0x4, scoped, tag = 'scoped memory for tpu_custom_call.1']
    #allocation14 [shape = 'u8[32768]{0}', space=vmem, size = 0x8000, scoped, tag = 'output window, operand 0, single buffered']
    %9 = vsyncpa [#allocation7], 0
    %10 = vsyncpa [#allocation10], 0
    %11 = vsyncpa [#allocation13], 0
    %12 = vsyncpa [#allocation8], 0
    // Predicated region
    $region2: #{tpu_custom_call.1} parent=1 // pred_check
      _
    $region3: #{tpu_custom_call.1} parent=1 // pred_check_branch
      %14 = sbr.rel (0) target = $region5
    $region4: #{tpu_custom_call.1} parent=1 // pred_region
      %16 = vsyncadd [#allocation7], 0
      %s17 = sshll.u32 %s0, 4
      %s18 = int_to_ptr.hbm [resolvable:$true] %s17
      %s19 = sshll.u32 [#allocation6], 4
      %s20 = int_to_ptr.vmem [resolvable:$true] %s19
      %25 = dma.hbm_to_vmem [thread:$0]  %s18, 4096, %s20, [#allocation7], 512, 512, 32
    $region5: #{tpu_custom_call.1} parent=1 // pred_fallthru
      _
    // Predicated region
    $region6: #{tpu_custom_call.1} parent=1 // pred_check
      _
    $region7: #{tpu_custom_call.1} parent=1 // pred_check_branch
      %27 = sbr.rel (0) target = $region9
    $region8: #{tpu_custom_call.1} parent=1 // pred_region
      %29 = vsyncadd [#allocation10], 0
      %s30 = sshll.u32 %s1, 4
      %s31 = int_to_ptr.hbm [resolvable:$true] %s30
      %s32 = sshll.u32 [#allocation9], 4
      %s33 = int_to_ptr.vmem [resolvable:$true] %s32
      %38 = dma.hbm_to_vmem [thread:$0]  %s31, 8192, %s33, [#allocation10], 512, 512, 32
    $region9: #{tpu_custom_call.1} parent=1 // pred_fallthru
      _
    // Predicated region
    $region10: #{tpu_custom_call.1} parent=1 // pred_check
      _
    $region11: #{tpu_custom_call.1} parent=1 // pred_check_branch
      %40 = sbr.rel (0) target = $region13
    $region12: #{tpu_custom_call.1} parent=1 // pred_region
      %42 = vsyncadd [#allocation10], 0
      %s43 = sshll.u32 %s2, 4
      %s44 = int_to_ptr.hbm [resolvable:$true] %s43
      %s45 = sshll.u32 [#allocation11], 4
      %s46 = int_to_ptr.vmem [resolvable:$true] %s45
      %51 = dma.hbm_to_vmem [thread:$0]  %s44, 16384, %s46, [#allocation10], 512, 512, 32
    $region13: #{tpu_custom_call.1} parent=1 // pred_fallthru
      _
    // Predicated region
    $region14: #{tpu_custom_call.1} parent=1 // pred_check
      _
    $region15: #{tpu_custom_call.1} parent=1 // pred_check_branch
      %53 = sbr.rel (0) target = $region17
    $region16: #{tpu_custom_call.1} parent=1 // pred_region
      %55 = vsyncadd [#allocation13], 0
      %s57 = sshll.u32 %s3, 4
      %s58 = int_to_ptr.hbm [resolvable:$true] %s57
      %s59 = sshll.u32 [#allocation12], 4
      %s60 = int_to_ptr.vmem [resolvable:$true] %s59
      %62 = dma.hbm_to_vmem [thread:$0]  %s58, 64, %s60, [#allocation13]
    $region17: #{tpu_custom_call.1} parent=1 // pred_fallthru
      _
    // Predicated region
    $region18: #{tpu_custom_call.1} parent=1 // pred_check
      _
    $region19: #{tpu_custom_call.1} parent=1 // pred_check_branch
      %64 = sbr.rel (0) target = $region21
    $region20: #{tpu_custom_call.1} parent=1 // pred_region
      %66 = dma.done [#allocation7], 4096
    $region21: #{tpu_custom_call.1} parent=1 // pred_fallthru
      _
    // Predicated region
    $region22: #{tpu_custom_call.1} parent=1 // pred_check
      _
    $region23: #{tpu_custom_call.1} parent=1 // pred_check_branch
      %68 = sbr.rel (0) target = $region25
    $region24: #{tpu_custom_call.1} parent=1 // pred_region
      %70 = dma.done [#allocation10], 8192
    $region25: #{tpu_custom_call.1} parent=1 // pred_fallthru
      _
    // Predicated region
    $region26: #{tpu_custom_call.1} parent=1 // pred_check
      _
    $region27: #{tpu_custom_call.1} parent=1 // pred_check_branch
      %72 = sbr.rel (0) target = $region29
    $region28: #{tpu_custom_call.1} parent=1 // pred_region
      %74 = dma.done [#allocation10], 16384
    $region29: #{tpu_custom_call.1} parent=1 // pred_fallthru
      _
    // Predicated region
    $region30: #{tpu_custom_call.1} parent=1 // pred_check
      _
    $region31: #{tpu_custom_call.1} parent=1 // pred_check_branch
      %76 = sbr.rel (0) target = $region33
    $region32: #{tpu_custom_call.1} parent=1 // pred_region
      %78 = dma.done [#allocation13], 64
    $region33: #{tpu_custom_call.1} parent=1 // pred_fallthru
      _
    %p79 = scmp.eq.s32.totalorder 0, 0
    // Predicated region
    $region34: #{tpu_custom_call.1} parent=1 // pred_check
      %p80 = pneg %p79
    $region35: #{tpu_custom_call.1} parent=1 // pred_check_branch
      %82 = sbr.rel (%p80) target = $region37
    $region36: #{tpu_custom_call.1} parent=1 // pred_region
      %83 = vst [vmem:[#allocation2] sm:$0xff] 0.0
      %84 = vst [vmem:[#allocation3] sm:$0xff] 0.0
      %85 = vst [vmem:[#allocation4] sm:$0xff] 0.0
      %86 = vst [vmem:[#allocation5] sm:$0xff] 0.0
    $region37: #{tpu_custom_call.1} parent=1 // pred_fallthru
      _
    %v87 = vld [vmem:[#allocation12] sm:$0xf]
    %v89 = vperm.slane %v87, 0
    %v90 = vperm.slane %v87, 1
    %v91 = vperm.slane %v87, 2
    %v92 = vperm.slane %v87, 3
    %v97 = vld [vmem:[#allocation2] sm:$0xff]
    %v98 = vld [vmem:[#allocation3] sm:$0xff]
    %v99 = vld [vmem:[#allocation4] sm:$0xff]
    %v100 = vld [vmem:[#allocation5] sm:$0xff]
    %v101 = vld [vmem:[#allocation6] sm:$0xff]
    %v102 = vld [vmem:[#allocation6 + $0x8] sm:$0xff]
    %v103 = vld [vmem:[#allocation6 + $0x10] sm:$0xff]
    %v104 = vld [vmem:[#allocation6 + $0x18] sm:$0xff]
    %v105 = vld [vmem:[#allocation9] sm:$0xff]
    %v106 = vld [vmem:[#allocation9 + $0x8] sm:$0xff]
    %v107 = vld [vmem:[#allocation9 + $0x10] sm:$0xff]
    %v108 = vld [vmem:[#allocation9 + $0x18] sm:$0xff]
    %v109 = vld [vmem:[#allocation9 + $0x20] sm:$0xff]
    %v110 = vld [vmem:[#allocation9 + $0x28] sm:$0xff]
    %v111 = vld [vmem:[#allocation9 + $0x30] sm:$0xff]
    %v112 = vld [vmem:[#allocation9 + $0x38] sm:$0xff]
    %v113 = vld [vmem:[#allocation9 + $0x40] sm:$0xff]
    %v114 = vld [vmem:[#allocation9 + $0x48] sm:$0xff]
    %v115 = vld [vmem:[#allocation9 + $0x50] sm:$0xff]
    %v116 = vld [vmem:[#allocation9 + $0x58] sm:$0xff]
    %v117 = vld [vmem:[#allocation9 + $0x60] sm:$0xff]
    %v118 = vld [vmem:[#allocation9 + $0x68] sm:$0xff]
    %v119 = vld [vmem:[#allocation9 + $0x70] sm:$0xff]
    %v120 = vld [vmem:[#allocation9 + $0x78] sm:$0xff]
    %v121 = vld [vmem:[#allocation9 + $0x80] sm:$0xff]
    %v122 = vld [vmem:[#allocation9 + $0x88] sm:$0xff]
    %v123 = vld [vmem:[#allocation9 + $0x90] sm:$0xff]
    %v124 = vld [vmem:[#allocation9 + $0x98] sm:$0xff]
    %v125 = vld [vmem:[#allocation9 + $0xa0] sm:$0xff]
    %v126 = vld [vmem:[#allocation9 + $0xa8] sm:$0xff]
    %v127 = vld [vmem:[#allocation9 + $0xb0] sm:$0xff]
    %v128 = vld [vmem:[#allocation9 + $0xb8] sm:$0xff]
    %v129 = vld [vmem:[#allocation9 + $0xc0] sm:$0xff]
    %v130 = vld [vmem:[#allocation9 + $0xc8] sm:$0xff]
    %v131 = vld [vmem:[#allocation9 + $0xd0] sm:$0xff]
    %v132 = vld [vmem:[#allocation9 + $0xd8] sm:$0xff]
    %v133 = vld [vmem:[#allocation9 + $0xe0] sm:$0xff]
    %v134 = vld [vmem:[#allocation9 + $0xe8] sm:$0xff]
    %v135 = vld [vmem:[#allocation9 + $0xf0] sm:$0xff]
    %v136 = vld [vmem:[#allocation9 + $0xf8] sm:$0xff]
    %v137 = vld [vmem:[#allocation9 + $0x100] sm:$0xff]
    %v138 = vld [vmem:[#allocation9 + $0x108] sm:$0xff]
    %v139 = vld [vmem:[#allocation9 + $0x110] sm:$0xff]
    %v140 = vld [vmem:[#allocation9 + $0x118] sm:$0xff]
    %v141 = vld [vmem:[#allocation9 + $0x120] sm:$0xff]
    %v142 = vld [vmem:[#allocation9 + $0x128] sm:$0xff]
    %v143 = vld [vmem:[#allocation9 + $0x130] sm:$0xff]
    %v144 = vld [vmem:[#allocation9 + $0x138] sm:$0xff]
    %v145 = vld [vmem:[#allocation9 + $0x140] sm:$0xff]
    %v146 = vld [vmem:[#allocation9 + $0x148] sm:$0xff]
    %v147 = vld [vmem:[#allocation9 + $0x150] sm:$0xff]
    %v148 = vld [vmem:[#allocation9 + $0x158] sm:$0xff]
    %v149 = vld [vmem:[#allocation9 + $0x160] sm:$0xff]
    %v150 = vld [vmem:[#allocation9 + $0x168] sm:$0xff]
    %v151 = vld [vmem:[#allocation9 + $0x170] sm:$0xff]
    %v152 = vld [vmem:[#allocation9 + $0x178] sm:$0xff]
    %v153 = vld [vmem:[#allocation9 + $0x180] sm:$0xff]
    %v154 = vld [vmem:[#allocation9 + $0x188] sm:$0xff]
    %v155 = vld [vmem:[#allocation9 + $0x190] sm:$0xff]
    %v156 = vld [vmem:[#allocation9 + $0x198] sm:$0xff]
    %v157 = vld [vmem:[#allocation9 + $0x1a0] sm:$0xff]
    %v158 = vld [vmem:[#allocation9 + $0x1a8] sm:$0xff]
    %v159 = vld [vmem:[#allocation9 + $0x1b0] sm:$0xff]
    %v160 = vld [vmem:[#allocation9 + $0x1b8] sm:$0xff]
    %v161 = vld [vmem:[#allocation9 + $0x1c0] sm:$0xff]
    %v162 = vld [vmem:[#allocation9 + $0x1c8] sm:$0xff]
    %v163 = vld [vmem:[#allocation9 + $0x1d0] sm:$0xff]
    %v164 = vld [vmem:[#allocation9 + $0x1d8] sm:$0xff]
    %v165 = vld [vmem:[#allocation9 + $0x1e0] sm:$0xff]
    %v166 = vld [vmem:[#allocation9 + $0x1e8] sm:$0xff]
    %v167 = vld [vmem:[#allocation9 + $0x1f0] sm:$0xff]
    %v168 = vld [vmem:[#allocation9 + $0x1f8] sm:$0xff]
    %169 = vmatpush.msra.mxu0 %v165
    %170 = vmatpush.msra.mxu0 %v161
    %171 = vmatpush.msra.mxu0 %v157
    %172 = vmatpush.msra.mxu0 %v153
    %173 = vmatpush.msra.mxu0 %v149
    %174 = vmatpush.msra.mxu0 %v145
    %175 = vmatpush.msra.mxu0 %v141
    %176 = vmatpush.msra.mxu0 %v137
    %177 = vmatpush.msra.mxu0 %v133
    %178 = vmatpush.msra.mxu0 %v129
    %179 = vmatpush.msra.mxu0 %v125
    %180 = vmatpush.msra.mxu0 %v121
    %181 = vmatpush.msra.mxu0 %v117
    %182 = vmatpush.msra.mxu0 %v113
    %183 = vmatpush.msra.mxu0 %v109
    %184 = vmatpush.msra.mxu0 %v105
    %185 = vmatmul.f32.gmra.mxu0 %v97
    %v186 = vpop.f32.mrf.mxu0
    %v187 = vadd.f32 0.0, %v186
    %188 = vdwg.mxu0
    %189 = vmatpush.msra.mxu0 %v166
    %190 = vmatpush.msra.mxu0 %v162
    %191 = vmatpush.msra.mxu0 %v158
    %192 = vmatpush.msra.mxu0 %v154
    %193 = vmatpush.msra.mxu0 %v150
    %194 = vmatpush.msra.mxu0 %v146
    %195 = vmatpush.msra.mxu0 %v142
    %196 = vmatpush.msra.mxu0 %v138
    %197 = vmatpush.msra.mxu0 %v134
    %198 = vmatpush.msra.mxu0 %v130
    %199 = vmatpush.msra.mxu0 %v126
    %200 = vmatpush.msra.mxu0 %v122
    %201 = vmatpush.msra.mxu0 %v118
    %202 = vmatpush.msra.mxu0 %v114
    %203 = vmatpush.msra.mxu0 %v110
    %204 = vmatpush.msra.mxu0 %v106
    %205 = vmatmul.f32.gmra.mxu0 %v97
    %v206 = vpop.f32.mrf.mxu0
    %v207 = vadd.f32 0.0, %v206
    %208 = vdwg.mxu0
    %209 = vmatpush.msra.mxu0 %v167
    %210 = vmatpush.msra.mxu0 %v163
    %211 = vmatpush.msra.mxu0 %v159
    %212 = vmatpush.msra.mxu0 %v155
    %213 = vmatpush.msra.mxu0 %v151
    %214 = vmatpush.msra.mxu0 %v147
    %215 = vmatpush.msra.mxu0 %v143
    %216 = vmatpush.msra.mxu0 %v139
    %217 = vmatpush.msra.mxu0 %v135
    %218 = vmatpush.msra.mxu0 %v131
    %219 = vmatpush.msra.mxu0 %v127
    %220 = vmatpush.msra.mxu0 %v123
    %221 = vmatpush.msra.mxu0 %v119
    %222 = vmatpush.msra.mxu0 %v115
    %223 = vmatpush.msra.mxu0 %v111
    %224 = vmatpush.msra.mxu0 %v107
    %225 = vmatmul.f32.gmra.mxu0 %v97
    %v226 = vpop.f32.mrf.mxu0
    %v227 = vadd.f32 0.0, %v226
    %228 = vdwg.mxu0
    %229 = vmatpush.msra.mxu0 %v168
    %230 = vmatpush.msra.mxu0 %v164
    %231 = vmatpush.msra.mxu0 %v160
    %232 = vmatpush.msra.mxu0 %v156
    %233 = vmatpush.msra.mxu0 %v152
    %234 = vmatpush.msra.mxu0 %v148
    %235 = vmatpush.msra.mxu0 %v144
    %236 = vmatpush.msra.mxu0 %v140
    %237 = vmatpush.msra.mxu0 %v136
    %238 = vmatpush.msra.mxu0 %v132
    %239 = vmatpush.msra.mxu0 %v128
    %240 = vmatpush.msra.mxu0 %v124
    %241 = vmatpush.msra.mxu0 %v120
    %242 = vmatpush.msra.mxu0 %v116
    %243 = vmatpush.msra.mxu0 %v112
    %244 = vmatpush.msra.mxu0 %v108
    %245 = vmatmul.f32.gmra.mxu0 %v97
    %v246 = vpop.f32.mrf.mxu0
    %v247 = vadd.f32 0.0, %v246
    %248 = vdwg.mxu0
    %v249 = vadd.f32 %v101, %v187
    %v250 = vadd.f32 %v102, %v207
    %v251 = vadd.f32 %v103, %v227
    %v252 = vadd.f32 %v104, %v247
    %v253 = vxor.u32 %v249, 2147483648
    %v254 = vmul.f32 %v253, 1.442695
    %v255 = vpow.pop %v254
    %v256 = vadd.f32 %v255, 1.0
    %v257 = vrcp.pop %v256
    %v258 = vmul.f32 %v256, %v257
    %v259 = vsub.f32 1.0, %v258
    %v260 = vmul.f32 %v257, %v259
    %v261 = vadd.f32 %v257, %v260
    %vm262 = vweird.f32 %v256
    %vm263 = vweird.f32 %v257
    %vm264 = vmor %vm262, %vm263
    %v265 = vsel %vm264, %v257, %v261
    %v266 = vand.u32 2147483647, %v256
    %vm267 = vcmp.eq.f32.partialorder %v266, 8.507059e+37
    %v268 = vand.u32 %v256, 2147483648
    %v269 = vor.u32 1.1754944e-38, %v268
    %v270 = vsel %vm267, %v269, %v265
    %v271 = vmul.f32 1.0, %v270
    %v272 = vxor.u32 %v250, 2147483648
    %v273 = vmul.f32 %v272, 1.442695
    %v274 = vpow.pop %v273
    %v275 = vadd.f32 %v274, 1.0
    %v276 = vrcp.pop %v275
    %v277 = vmul.f32 %v275, %v276
    %v278 = vsub.f32 1.0, %v277
    %v279 = vmul.f32 %v276, %v278
    %v280 = vadd.f32 %v276, %v279
    %vm281 = vweird.f32 %v275
    %vm282 = vweird.f32 %v276
    %vm283 = vmor %vm281, %vm282
    %v284 = vsel %vm283, %v276, %v280
    %v285 = vand.u32 2147483647, %v275
    %vm286 = vcmp.eq.f32.partialorder %v285, 8.507059e+37
    %v287 = vand.u32 %v275, 2147483648
    %v288 = vor.u32 1.1754944e-38, %v287
    %v289 = vsel %vm286, %v288, %v284
    %v290 = vmul.f32 1.0, %v289
    %v291 = vtanh.pop %v251
    %v292 = vxor.u32 %v252, 2147483648
    %v293 = vmul.f32 %v292, 1.442695
    %v294 = vpow.pop %v293
    %v295 = vadd.f32 %v294, 1.0
    %v296 = vrcp.pop %v295
    %v297 = vmul.f32 %v295, %v296
    %v298 = vsub.f32 1.0, %v297
    %v299 = vmul.f32 %v296, %v298
    %v300 = vadd.f32 %v296, %v299
    %vm301 = vweird.f32 %v295
    %vm302 = vweird.f32 %v296
    %vm303 = vmor %vm301, %vm302
    %v304 = vsel %vm303, %v296, %v300
    %v305 = vand.u32 2147483647, %v295
    %vm306 = vcmp.eq.f32.partialorder %v305, 8.507059e+37
    %v307 = vand.u32 %v295, 2147483648
    %v308 = vor.u32 1.1754944e-38, %v307
    %v309 = vsel %vm306, %v308, %v304
    %v310 = vmul.f32 1.0, %v309
    %v311 = vmul.f32 %v290, %v98
    %v312 = vmul.f32 %v271, %v291
    %v313 = vadd.f32 %v311, %v312
    %v314 = vtanh.pop %v313
    %v315 = vmul.f32 %v310, %v314
    %v316 = vld [vmem:[#allocation11] sm:$0xff]
    %v317 = vld [vmem:[#allocation11 + $0x8] sm:$0xff]
    %v318 = vld [vmem:[#allocation11 + $0x10] sm:$0xff]
    %v319 = vld [vmem:[#allocation11 + $0x18] sm:$0xff]
    %v320 = vld [vmem:[#allocation11 + $0x20] sm:$0xff]
    %v321 = vld [vmem:[#allocation11 + $0x28] sm:$0xff]
    %v322 = vld [vmem:[#allocation11 + $0x30] sm:$0xff]
    %v323 = vld [vmem:[#allocation11 + $0x38] sm:$0xff]
    %v324 = vld [vmem:[#allocation11 + $0x40] sm:$0xff]
    %v325 = vld [vmem:[#allocation11 + $0x48] sm:$0xff]
    %v326 = vld [vmem:[#allocation11 + $0x50] sm:$0xff]
    %v327 = vld [vmem:[#allocation11 + $0x58] sm:$0xff]
    %v328 = vld [vmem:[#allocation11 + $0x60] sm:$0xff]
    %v329 = vld [vmem:[#allocation11 + $0x68] sm:$0xff]
    %v330 = vld [vmem:[#allocation11 + $0x70] sm:$0xff]
    %v331 = vld [vmem:[#allocation11 + $0x78] sm:$0xff]
    %v332 = vld [vmem:[#allocation11 + $0x80] sm:$0xff]
    %v333 = vld [vmem:[#allocation11 + $0x88] sm:$0xff]
    %v334 = vld [vmem:[#allocation11 + $0x90] sm:$0xff]
    %v335 = vld [vmem:[#allocation11 + $0x98] sm:$0xff]
    %v336 = vld [vmem:[#allocation11 + $0xa0] sm:$0xff]
    %v337 = vld [vmem:[#allocation11 + $0xa8] sm:$0xff]
    %v338 = vld [vmem:[#allocation11 + $0xb0] sm:$0xff]
    %v339 = vld [vmem:[#allocation11 + $0xb8] sm:$0xff]
    %v340 = vld [vmem:[#allocation11 + $0xc0] sm:$0xff]
    %v341 = vld [vmem:[#allocation11 + $0xc8] sm:$0xff]
    %v342 = vld [vmem:[#allocation11 + $0xd0] sm:$0xff]
    %v343 = vld [vmem:[#allocation11 + $0xd8] sm:$0xff]
    %v344 = vld [vmem:[#allocation11 + $0xe0] sm:$0xff]
    %v345 = vld [vmem:[#allocation11 + $0xe8] sm:$0xff]
    %v346 = vld [vmem:[#allocation11 + $0xf0] sm:$0xff]
    %v347 = vld [vmem:[#allocation11 + $0xf8] sm:$0xff]
    %v348 = vld [vmem:[#allocation11 + $0x100] sm:$0xff]
    %v349 = vld [vmem:[#allocation11 + $0x108] sm:$0xff]
    %v350 = vld [vmem:[#allocation11 + $0x110] sm:$0xff]
    %v351 = vld [vmem:[#allocation11 + $0x118] sm:$0xff]
    %v352 = vld [vmem:[#allocation11 + $0x120] sm:$0xff]
    %v353 = vld [vmem:[#allocation11 + $0x128] sm:$0xff]
    %v354 = vld [vmem:[#allocation11 + $0x130] sm:$0xff]
    %v355 = vld [vmem:[#allocation11 + $0x138] sm:$0xff]
    %v356 = vld [vmem:[#allocation11 + $0x140] sm:$0xff]
    %v357 = vld [vmem:[#allocation11 + $0x148] sm:$0xff]
    %v358 = vld [vmem:[#allocation11 + $0x150] sm:$0xff]
    %v359 = vld [vmem:[#allocation11 + $0x158] sm:$0xff]
    %v360 = vld [vmem:[#allocation11 + $0x160] sm:$0xff]
    %v361 = vld [vmem:[#allocation11 + $0x168] sm:$0xff]
    %v362 = vld [vmem:[#allocation11 + $0x170] sm:$0xff]
    %v363 = vld [vmem:[#allocation11 + $0x178] sm:$0xff]
    %v364 = vld [vmem:[#allocation11 + $0x180] sm:$0xff]
    %v365 = vld [vmem:[#allocation11 + $0x188] sm:$0xff]
    %v366 = vld [vmem:[#allocation11 + $0x190] sm:$0xff]
    %v367 = vld [vmem:[#allocation11 + $0x198] sm:$0xff]
    %v368 = vld [vmem:[#allocation11 + $0x1a0] sm:$0xff]
    %v369 = vld [vmem:[#allocation11 + $0x1a8] sm:$0xff]
    %v370 = vld [vmem:[#allocation11 + $0x1b0] sm:$0xff]
    %v371 = vld [vmem:[#allocation11 + $0x1b8] sm:$0xff]
    %v372 = vld [vmem:[#allocation11 + $0x1c0] sm:$0xff]
    %v373 = vld [vmem:[#allocation11 + $0x1c8] sm:$0xff]
    %v374 = vld [vmem:[#allocation11 + $0x1d0] sm:$0xff]
    %v375 = vld [vmem:[#allocation11 + $0x1d8] sm:$0xff]
    %v376 = vld [vmem:[#allocation11 + $0x1e0] sm:$0xff]
    %v377 = vld [vmem:[#allocation11 + $0x1e8] sm:$0xff]
    %v378 = vld [vmem:[#allocation11 + $0x1f0] sm:$0xff]
    %v379 = vld [vmem:[#allocation11 + $0x1f8] sm:$0xff]
    %v380 = vld [vmem:[#allocation11 + $0x200] sm:$0xff]
    %v381 = vld [vmem:[#allocation11 + $0x208] sm:$0xff]
    %v382 = vld [vmem:[#allocation11 + $0x210] sm:$0xff]
    %v383 = vld [vmem:[#allocation11 + $0x218] sm:$0xff]
    %v384 = vld [vmem:[#allocation11 + $0x220] sm:$0xff]
    %v385 = vld [vmem:[#allocation11 + $0x228] sm:$0xff]
    %v386 = vld [vmem:[#allocation11 + $0x230] sm:$0xff]
    %v387 = vld [vmem:[#allocation11 + $0x238] sm:$0xff]
    %v388 = vld [vmem:[#allocation11 + $0x240] sm:$0xff]
    %v389 = vld [vmem:[#allocation11 + $0x248] sm:$0xff]
    %v390 = vld [vmem:[#allocation11 + $0x250] sm:$0xff]
    %v391 = vld [vmem:[#allocation11 + $0x258] sm:$0xff]
    %v392 = vld [vmem:[#allocation11 + $0x260] sm:$0xff]
    %v393 = vld [vmem:[#allocation11 + $0x268] sm:$0xff]
    %v394 = vld [vmem:[#allocation11 + $0x270] sm:$0xff]
    %v395 = vld [vmem:[#allocation11 + $0x278] sm:$0xff]
    %v396 = vld [vmem:[#allocation11 + $0x280] sm:$0xff]
    %v397 = vld [vmem:[#allocation11 + $0x288] sm:$0xff]
    %v398 = vld [vmem:[#allocation11 + $0x290] sm:$0xff]
    %v399 = vld [vmem:[#allocation11 + $0x298] sm:$0xff]
    %v400 = vld [vmem:[#allocation11 + $0x2a0] sm:$0xff]
    %v401 = vld [vmem:[#allocation11 + $0x2a8] sm:$0xff]
    %v402 = vld [vmem:[#allocation11 + $0x2b0] sm:$0xff]
    %v403 = vld [vmem:[#allocation11 + $0x2b8] sm:$0xff]
    %v404 = vld [vmem:[#allocation11 + $0x2c0] sm:$0xff]
    %v405 = vld [vmem:[#allocation11 + $0x2c8] sm:$0xff]
    %v406 = vld [vmem:[#allocation11 + $0x2d0] sm:$0xff]
    %v407 = vld [vmem:[#allocation11 + $0x2d8] sm:$0xff]
    %v408 = vld [vmem:[#allocation11 + $0x2e0] sm:$0xff]
    %v409 = vld [vmem:[#allocation11 + $0x2e8] sm:$0xff]
    %v410 = vld [vmem:[#allocation11 + $0x2f0] sm:$0xff]
    %v411 = vld [vmem:[#allocation11 + $0x2f8] sm:$0xff]
    %v412 = vld [vmem:[#allocation11 + $0x300] sm:$0xff]
    %v413 = vld [vmem:[#allocation11 + $0x308] sm:$0xff]
    %v414 = vld [vmem:[#allocation11 + $0x310] sm:$0xff]
    %v415 = vld [vmem:[#allocation11 + $0x318] sm:$0xff]
    %v416 = vld [vmem:[#allocation11 + $0x320] sm:$0xff]
    %v417 = vld [vmem:[#allocation11 + $0x328] sm:$0xff]
    %v418 = vld [vmem:[#allocation11 + $0x330] sm:$0xff]
    %v419 = vld [vmem:[#allocation11 + $0x338] sm:$0xff]
    %v420 = vld [vmem:[#allocation11 + $0x340] sm:$0xff]
    %v421 = vld [vmem:[#allocation11 + $0x348] sm:$0xff]
    %v422 = vld [vmem:[#allocation11 + $0x350] sm:$0xff]
    %v423 = vld [vmem:[#allocation11 + $0x358] sm:$0xff]
    %v424 = vld [vmem:[#allocation11 + $0x360] sm:$0xff]
    %v425 = vld [vmem:[#allocation11 + $0x368] sm:$0xff]
    %v426 = vld [vmem:[#allocation11 + $0x370] sm:$0xff]
    %v427 = vld [vmem:[#allocation11 + $0x378] sm:$0xff]
    %v428 = vld [vmem:[#allocation11 + $0x380] sm:$0xff]
    %v429 = vld [vmem:[#allocation11 + $0x388] sm:$0xff]
    %v430 = vld [vmem:[#allocation11 + $0x390] sm:$0xff]
    %v431 = vld [vmem:[#allocation11 + $0x398] sm:$0xff]
    %v432 = vld [vmem:[#allocation11 + $0x3a0] sm:$0xff]
    %v433 = vld [vmem:[#allocation11 + $0x3a8] sm:$0xff]
    %v434 = vld [vmem:[#allocation11 + $0x3b0] sm:$0xff]
    %v435 = vld [vmem:[#allocation11 + $0x3b8] sm:$0xff]
    %v436 = vld [vmem:[#allocation11 + $0x3c0] sm:$0xff]
    %v437 = vld [vmem:[#allocation11 + $0x3c8] sm:$0xff]
    %v438 = vld [vmem:[#allocation11 + $0x3d0] sm:$0xff]
    %v439 = vld [vmem:[#allocation11 + $0x3d8] sm:$0xff]
    %v440 = vld [vmem:[#allocation11 + $0x3e0] sm:$0xff]
    %v441 = vld [vmem:[#allocation11 + $0x3e8] sm:$0xff]
    %v442 = vld [vmem:[#allocation11 + $0x3f0] sm:$0xff]
    %v443 = vld [vmem:[#allocation11 + $0x3f8] sm:$0xff]
    %444 = vmatpush.msra.mxu0 %v376
    %445 = vmatpush.msra.mxu0 %v372
    %446 = vmatpush.msra.mxu0 %v368
    %447 = vmatpush.msra.mxu0 %v364
    %448 = vmatpush.msra.mxu0 %v360
    %449 = vmatpush.msra.mxu0 %v356
    %450 = vmatpush.msra.mxu0 %v352
    %451 = vmatpush.msra.mxu0 %v348
    %452 = vmatpush.msra.mxu0 %v344
    %453 = vmatpush.msra.mxu0 %v340
    %454 = vmatpush.msra.mxu0 %v336
    %455 = vmatpush.msra.mxu0 %v332
    %456 = vmatpush.msra.mxu0 %v328
    %457 = vmatpush.msra.mxu0 %v324
    %458 = vmatpush.msra.mxu0 %v320
    %459 = vmatpush.msra.mxu0 %v316
    %460 = vmatmul.f32.gmra.mxu0 %v315
    %v461 = vpop.f32.mrf.mxu0
    %v462 = vadd.f32 %v89, %v461
    %463 = vdwg.mxu0
    %464 = vmatpush.msra.mxu0 %v440
    %465 = vmatpush.msra.mxu0 %v436
    %466 = vmatpush.msra.mxu0 %v432
    %467 = vmatpush.msra.mxu0 %v428
    %468 = vmatpush.msra.mxu0 %v424
    %469 = vmatpush.msra.mxu0 %v420
    %470 = vmatpush.msra.mxu0 %v416
    %471 = vmatpush.msra.mxu0 %v412
    %472 = vmatpush.msra.mxu0 %v408
    %473 = vmatpush.msra.mxu0 %v404
    %474 = vmatpush.msra.mxu0 %v400
    %475 = vmatpush.msra.mxu0 %v396
    %476 = vmatpush.msra.mxu0 %v392
    %477 = vmatpush.msra.mxu0 %v388
    %478 = vmatpush.msra.mxu0 %v384
    %479 = vmatpush.msra.mxu0 %v380
    %480 = vmatmul.f32.gmra.mxu0 %v99
    %v481 = vpop.f32.mrf.mxu0
    %v482 = vadd.f32 %v462, %v481
    %483 = vdwg.mxu0
    %484 = vmatpush.msra.mxu0 %v377
    %485 = vmatpush.msra.mxu0 %v373
    %486 = vmatpush.msra.mxu0 %v369
    %487 = vmatpush.msra.mxu0 %v365
    %488 = vmatpush.msra.mxu0 %v361
    %489 = vmatpush.msra.mxu0 %v357
    %490 = vmatpush.msra.mxu0 %v353
    %491 = vmatpush.msra.mxu0 %v349
    %492 = vmatpush.msra.mxu0 %v345
    %493 = vmatpush.msra.mxu0 %v341
    %494 = vmatpush.msra.mxu0 %v337
    %495 = vmatpush.msra.mxu0 %v333
    %496 = vmatpush.msra.mxu0 %v329
    %497 = vmatpush.msra.mxu0 %v325
    %498 = vmatpush.msra.mxu0 %v321
    %499 = vmatpush.msra.mxu0 %v317
    %500 = vmatmul.f32.gmra.mxu0 %v315
    %v501 = vpop.f32.mrf.mxu0
    %v502 = vadd.f32 %v90, %v501
    %503 = vdwg.mxu0
    %504 = vmatpush.msra.mxu0 %v441
    %505 = vmatpush.msra.mxu0 %v437
    %506 = vmatpush.msra.mxu0 %v433
    %507 = vmatpush.msra.mxu0 %v429
    %508 = vmatpush.msra.mxu0 %v425
    %509 = vmatpush.msra.mxu0 %v421
    %510 = vmatpush.msra.mxu0 %v417
    %511 = vmatpush.msra.mxu0 %v413
    %512 = vmatpush.msra.mxu0 %v409
    %513 = vmatpush.msra.mxu0 %v405
    %514 = vmatpush.msra.mxu0 %v401
    %515 = vmatpush.msra.mxu0 %v397
    %516 = vmatpush.msra.mxu0 %v393
    %517 = vmatpush.msra.mxu0 %v389
    %518 = vmatpush.msra.mxu0 %v385
    %519 = vmatpush.msra.mxu0 %v381
    %520 = vmatmul.f32.gmra.mxu0 %v99
    %v521 = vpop.f32.mrf.mxu0
    %v522 = vadd.f32 %v502, %v521
    %523 = vdwg.mxu0
    %524 = vmatpush.msra.mxu0 %v378
    %525 = vmatpush.msra.mxu0 %v374
    %526 = vmatpush.msra.mxu0 %v370
    %527 = vmatpush.msra.mxu0 %v366
    %528 = vmatpush.msra.mxu0 %v362
    %529 = vmatpush.msra.mxu0 %v358
    %530 = vmatpush.msra.mxu0 %v354
    %531 = vmatpush.msra.mxu0 %v350
    %532 = vmatpush.msra.mxu0 %v346
    %533 = vmatpush.msra.mxu0 %v342
    %534 = vmatpush.msra.mxu0 %v338
    %535 = vmatpush.msra.mxu0 %v334
    %536 = vmatpush.msra.mxu0 %v330
    %537 = vmatpush.msra.mxu0 %v326
    %538 = vmatpush.msra.mxu0 %v322
    %539 = vmatpush.msra.mxu0 %v318
    %540 = vmatmul.f32.gmra.mxu0 %v315
    %v541 = vpop.f32.mrf.mxu0
    %v542 = vadd.f32 %v91, %v541
    %543 = vdwg.mxu0
    %544 = vmatpush.msra.mxu0 %v442
    %545 = vmatpush.msra.mxu0 %v438
    %546 = vmatpush.msra.mxu0 %v434
    %547 = vmatpush.msra.mxu0 %v430
    %548 = vmatpush.msra.mxu0 %v426
    %549 = vmatpush.msra.mxu0 %v422
    %550 = vmatpush.msra.mxu0 %v418
    %551 = vmatpush.msra.mxu0 %v414
    %552 = vmatpush.msra.mxu0 %v410
    %553 = vmatpush.msra.mxu0 %v406
    %554 = vmatpush.msra.mxu0 %v402
    %555 = vmatpush.msra.mxu0 %v398
    %556 = vmatpush.msra.mxu0 %v394
    %557 = vmatpush.msra.mxu0 %v390
    %558 = vmatpush.msra.mxu0 %v386
    %559 = vmatpush.msra.mxu0 %v382
    %560 = vmatmul.f32.gmra.mxu0 %v99
    %v561 = vpop.f32.mrf.mxu0
    %v562 = vadd.f32 %v542, %v561
    %563 = vdwg.mxu0
    %564 = vmatpush.msra.mxu0 %v379
    %565 = vmatpush.msra.mxu0 %v375
    %566 = vmatpush.msra.mxu0 %v371
    %567 = vmatpush.msra.mxu0 %v367
    %568 = vmatpush.msra.mxu0 %v363
    %569 = vmatpush.msra.mxu0 %v359
    %570 = vmatpush.msra.mxu0 %v355
    %571 = vmatpush.msra.mxu0 %v351
    %572 = vmatpush.msra.mxu0 %v347
    %573 = vmatpush.msra.mxu0 %v343
    %574 = vmatpush.msra.mxu0 %v339
    %575 = vmatpush.msra.mxu0 %v335
    %576 = vmatpush.msra.mxu0 %v331
    %577 = vmatpush.msra.mxu0 %v327
    %578 = vmatpush.msra.mxu0 %v323
    %579 = vmatpush.msra.mxu0 %v319
    %580 = vmatmul.f32.gmra.mxu0 %v315
    %v581 = vpop.f32.mrf.mxu0
    %v582 = vadd.f32 %v92, %v581
    %583 = vdwg.mxu0
    %584 = vmatpush.msra.mxu0 %v443
    %585 = vmatpush.msra.mxu0 %v439
    %586 = vmatpush.msra.mxu0 %v435
    %587 = vmatpush.msra.mxu0 %v431
    %588 = vmatpush.msra.mxu0 %v427
    %589 = vmatpush.msra.mxu0 %v423
    %590 = vmatpush.msra.mxu0 %v419
    %591 = vmatpush.msra.mxu0 %v415
    %592 = vmatpush.msra.mxu0 %v411
    %593 = vmatpush.msra.mxu0 %v407
    %594 = vmatpush.msra.mxu0 %v403
    %595 = vmatpush.msra.mxu0 %v399
    %596 = vmatpush.msra.mxu0 %v395
    %597 = vmatpush.msra.mxu0 %v391
    %598 = vmatpush.msra.mxu0 %v387
    %599 = vmatpush.msra.mxu0 %v383
    %600 = vmatmul.f32.gmra.mxu0 %v99
    %v601 = vpop.f32.mrf.mxu0
    %v602 = vadd.f32 %v582, %v601
    %603 = vdwg.mxu0
    %v604 = vxor.u32 %v482, 2147483648
    %v605 = vmul.f32 %v604, 1.442695
    %v606 = vpow.pop %v605
    %v607 = vadd.f32 %v606, 1.0
    %v608 = vrcp.pop %v607
    %v609 = vmul.f32 %v607, %v608
    %v610 = vsub.f32 1.0, %v609
    %v611 = vmul.f32 %v608, %v610
    %v612 = vadd.f32 %v608, %v611
    %vm613 = vweird.f32 %v607
    %vm614 = vweird.f32 %v608
    %vm615 = vmor %vm613, %vm614
    %v616 = vsel %vm615, %v608, %v612
    %v617 = vand.u32 2147483647, %v607
    %vm618 = vcmp.eq.f32.partialorder %v617, 8.507059e+37
    %v619 = vand.u32 %v607, 2147483648
    %v620 = vor.u32 1.1754944e-38, %v619
    %v621 = vsel %vm618, %v620, %v616
    %v622 = vmul.f32 1.0, %v621
    %v623 = vxor.u32 %v522, 2147483648
    %v624 = vmul.f32 %v623, 1.442695
    %v625 = vpow.pop %v624
    %v626 = vadd.f32 %v625, 1.0
    %v627 = vrcp.pop %v626
    %v628 = vmul.f32 %v626, %v627
    %v629 = vsub.f32 1.0, %v628
    %v630 = vmul.f32 %v627, %v629
    %v631 = vadd.f32 %v627, %v630
    %vm632 = vweird.f32 %v626
    %vm633 = vweird.f32 %v627
    %vm634 = vmor %vm632, %vm633
    %v635 = vsel %vm634, %v627, %v631
    %v636 = vand.u32 2147483647, %v626
    %vm637 = vcmp.eq.f32.partialorder %v636, 8.507059e+37
    %v638 = vand.u32 %v626, 2147483648
    %v639 = vor.u32 1.1754944e-38, %v638
    %v640 = vsel %vm637, %v639, %v635
    %v641 = vmul.f32 1.0, %v640
    %v642 = vtanh.pop %v562
    %v643 = vxor.u32 %v602, 2147483648
    %v644 = vmul.f32 %v643, 1.442695
    %v645 = vpow.pop %v644
    %v646 = vadd.f32 %v645, 1.0
    %v647 = vrcp.pop %v646
    %v648 = vmul.f32 %v646, %v647
    %v649 = vsub.f32 1.0, %v648
    %v650 = vmul.f32 %v647, %v649
    %v651 = vadd.f32 %v647, %v650
    %vm652 = vweird.f32 %v646
    %vm653 = vweird.f32 %v647
    %vm654 = vmor %vm652, %vm653
    %v655 = vsel %vm654, %v647, %v651
    %v656 = vand.u32 2147483647, %v646
    %vm657 = vcmp.eq.f32.partialorder %v656, 8.507059e+37
    %v658 = vand.u32 %v646, 2147483648
    %v659 = vor.u32 1.1754944e-38, %v658
    %v660 = vsel %vm657, %v659, %v655
    %v661 = vmul.f32 1.0, %v660
    %v662 = vmul.f32 %v641, %v100
    %v663 = vmul.f32 %v622, %v642
    %v664 = vadd.f32 %v662, %v663
    %v665 = vtanh.pop %v664
    %v666 = vmul.f32 %v661, %v665
    %667 = vst [vmem:[#allocation14] sm:$0xff] %v666
    %s668 = scalar_lea.vmem [#allocation6], 32
    %v669 = vld [vmem:[%s668] sm:$0xff]
    %v670 = vld [vmem:[%s668 + $0x8] sm:$0xff]
    %v671 = vld [vmem:[%s668 + $0x10] sm:$0xff]
    %v672 = vld [vmem:[%s668 + $0x18] sm:$0xff]
    %v673 = vld [vmem:[#allocation9] sm:$0xff]
    %v674 = vld [vmem:[#allocation9 + $0x8] sm:$0xff]
    %v675 = vld [vmem:[#allocation9 + $0x10] sm:$0xff]
    %v676 = vld [vmem:[#allocation9 + $0x18] sm:$0xff]
    %v677 = vld [vmem:[#allocation9 + $0x20] sm:$0xff]
    %v678 = vld [vmem:[#allocation9 + $0x28] sm:$0xff]
    %v679 = vld [vmem:[#allocation9 + $0x30] sm:$0xff]
    %v680 = vld [vmem:[#allocation9 + $0x38] sm:$0xff]
    %v681 = vld [vmem:[#allocation9 + $0x40] sm:$0xff]
    %v682 = vld [vmem:[#allocation9 + $0x48] sm:$0xff]
    %v683 = vld [vmem:[#allocation9 + $0x50] sm:$0xff]
    %v684 = vld [vmem:[#allocation9 + $0x58] sm:$0xff]
    %v685 = vld [vmem:[#allocation9 + $0x60] sm:$0xff]
    %v686 = vld [vmem:[#allocation9 + $0x68] sm:$0xff]
    %v687 = vld [vmem:[#allocation9 + $0x70] sm:$0xff]
    %v688 = vld [vmem:[#allocation9 + $0x78] sm:$0xff]
    %v689 = vld [vmem:[#allocation9 + $0x80] sm:$0xff]
    %v690 = vld [vmem:[#allocation9 + $0x88] sm:$0xff]
    %v691 = vld [vmem:[#allocation9 + $0x90] sm:$0xff]
    %v692 = vld [vmem:[#allocation9 + $0x98] sm:$0xff]
    %v693 = vld [vmem:[#allocation9 + $0xa0] sm:$0xff]
    %v694 = vld [vmem:[#allocation9 + $0xa8] sm:$0xff]
    %v695 = vld [vmem:[#allocation9 + $0xb0] sm:$0xff]
    %v696 = vld [vmem:[#allocation9 + $0xb8] sm:$0xff]
    %v697 = vld [vmem:[#allocation9 + $0xc0] sm:$0xff]
    %v698 = vld [vmem:[#allocation9 + $0xc8] sm:$0xff]
    %v699 = vld [vmem:[#allocation9 + $0xd0] sm:$0xff]
    %v700 = vld [vmem:[#allocation9 + $0xd8] sm:$0xff]
    %v701 = vld [vmem:[#allocation9 + $0xe0] sm:$0xff]
    %v702 = vld [vmem:[#allocation9 + $0xe8] sm:$0xff]
    %v703 = vld [vmem:[#allocation9 + $0xf0] sm:$0xff]
    %v704 = vld [vmem:[#allocation9 + $0xf8] sm:$0xff]
    %v705 = vld [vmem:[#allocation9 + $0x100] sm:$0xff]
    %v706 = vld [vmem:[#allocation9 + $0x108] sm:$0xff]
    %v707 = vld [vmem:[#allocation9 + $0x110] sm:$0xff]
    %v708 = vld [vmem:[#allocation9 + $0x118] sm:$0xff]
    %v709 = vld [vmem:[#allocation9 + $0x120] sm:$0xff]
    %v710 = vld [vmem:[#allocation9 + $0x128] sm:$0xff]
    %v711 = vld [vmem:[#allocation9 + $0x130] sm:$0xff]
    %v712 = vld [vmem:[#allocation9 + $0x138] sm:$0xff]
    %v713 = vld [vmem:[#allocation9 + $0x140] sm:$0xff]
    %v714 = vld [vmem:[#allocation9 + $0x148] sm:$0xff]
    %v715 = vld [vmem:[#allocation9 + $0x150] sm:$0xff]
    %v716 = vld [vmem:[#allocation9 + $0x158] sm:$0xff]
    %v717 = vld [vmem:[#allocation9 + $0x160] sm:$0xff]
    %v718 = vld [vmem:[#allocation9 + $0x168] sm:$0xff]
    %v719 = vld [vmem:[#allocation9 + $0x170] sm:$0xff]
    %v720 = vld [vmem:[#allocation9 + $0x178] sm:$0xff]
    %v721 = vld [vmem:[#allocation9 + $0x180] sm:$0xff]
    %v722 = vld [vmem:[#allocation9 + $0x188] sm:$0xff]
    %v723 = vld [vmem:[#allocation9 + $0x190] sm:$0xff]
    %v724 = vld [vmem:[#allocation9 + $0x198] sm:$0xff]
    %v725 = vld [vmem:[#allocation9 + $0x1a0] sm:$0xff]
    %v726 = vld [vmem:[#allocation9 + $0x1a8] sm:$0xff]
    %v727 = vld [vmem:[#allocation9 + $0x1b0] sm:$0xff]
    %v728 = vld [vmem:[#allocation9 + $0x1b8] sm:$0xff]
    %v729 = vld [vmem:[#allocation9 + $0x1c0] sm:$0xff]
    %v730 = vld [vmem:[#allocation9 + $0x1c8] sm:$0xff]
    %v731 = vld [vmem:[#allocation9 + $0x1d0] sm:$0xff]
    %v732 = vld [vmem:[#allocation9 + $0x1d8] sm:$0xff]
    %v733 = vld [vmem:[#allocation9 + $0x1e0] sm:$0xff]
    %v734 = vld [vmem:[#allocation9 + $0x1e8] sm:$0xff]
    %v735 = vld [vmem:[#allocation9 + $0x1f0] sm:$0xff]
    %v736 = vld [vmem:[#allocation9 + $0x1f8] sm:$0xff]
    %737 = vmatpush.msra.mxu0 %v733
    %738 = vmatpush.msra.mxu0 %v729
    %739 = vmatpush.msra.mxu0 %v725
    %740 = vmatpush.msra.mxu0 %v721
    %741 = vmatpush.msra.mxu0 %v717
    %742 = vmatpush.msra.mxu0 %v713
    %743 = vmatpush.msra.mxu0 %v709
    %744 = vmatpush.msra.mxu0 %v705
    %745 = vmatpush.msra.mxu0 %v701
    %746 = vmatpush.msra.mxu0 %v697
    %747 = vmatpush.msra.mxu0 %v693
    %748 = vmatpush.msra.mxu0 %v689
    %749 = vmatpush.msra.mxu0 %v685
    %750 = vmatpush.msra.mxu0 %v681
    %751 = vmatpush.msra.mxu0 %v677
    %752 = vmatpush.msra.mxu0 %v673
    %753 = vmatmul.f32.gmra.mxu0 %v315
    %v754 = vpop.f32.mrf.mxu0
    %v755 = vadd.f32 0.0, %v754
    %756 = vdwg.mxu0
    %757 = vmatpush.msra.mxu0 %v734
    %758 = vmatpush.msra.mxu0 %v730
    %759 = vmatpush.msra.mxu0 %v726
    %760 = vmatpush.msra.mxu0 %v722
    %761 = vmatpush.msra.mxu0 %v718
    %762 = vmatpush.msra.mxu0 %v714
    %763 = vmatpush.msra.mxu0 %v710
    %764 = vmatpush.msra.mxu0 %v706
    %765 = vmatpush.msra.mxu0 %v702
    %766 = vmatpush.msra.mxu0 %v698
    %767 = vmatpush.msra.mxu0 %v694
    %768 = vmatpush.msra.mxu0 %v690
    %769 = vmatpush.msra.mxu0 %v686
    %770 = vmatpush.msra.mxu0 %v682
    %771 = vmatpush.msra.mxu0 %v678
    %772 = vmatpush.msra.mxu0 %v674
    %773 = vmatmul.f32.gmra.mxu0 %v315
    %v774 = vpop.f32.mrf.mxu0
    %v775 = vadd.f32 0.0, %v774
    %776 = vdwg.mxu0
    %777 = vmatpush.msra.mxu0 %v735
    %778 = vmatpush.msra.mxu0 %v731
    %779 = vmatpush.msra.mxu0 %v727
    %780 = vmatpush.msra.mxu0 %v723
    %781 = vmatpush.msra.mxu0 %v719
    %782 = vmatpush.msra.mxu0 %v715
    %783 = vmatpush.msra.mxu0 %v711
    %784 = vmatpush.msra.mxu0 %v707
    %785 = vmatpush.msra.mxu0 %v703
    %786 = vmatpush.msra.mxu0 %v699
    %787 = vmatpush.msra.mxu0 %v695
    %788 = vmatpush.msra.mxu0 %v691
    %789 = vmatpush.msra.mxu0 %v687
    %790 = vmatpush.msra.mxu0 %v683
    %791 = vmatpush.msra.mxu0 %v679
    %792 = vmatpush.msra.mxu0 %v675
    %793 = vmatmul.f32.gmra.mxu0 %v315
    %v794 = vpop.f32.mrf.mxu0
    %v795 = vadd.f32 0.0, %v794
    %796 = vdwg.mxu0
    %797 = vmatpush.msra.mxu0 %v736
    %798 = vmatpush.msra.mxu0 %v732
    %799 = vmatpush.msra.mxu0 %v728
    %800 = vmatpush.msra.mxu0 %v724
    %801 = vmatpush.msra.mxu0 %v720
    %802 = vmatpush.msra.mxu0 %v716
    %803 = vmatpush.msra.mxu0 %v712
    %804 = vmatpush.msra.mxu0 %v708
    %805 = vmatpush.msra.mxu0 %v704
    %806 = vmatpush.msra.mxu0 %v700
    %807 = vmatpush.msra.mxu0 %v696
    %808 = vmatpush.msra.mxu0 %v692
    %809 = vmatpush.msra.mxu0 %v688
    %810 = vmatpush.msra.mxu0 %v684
    %811 = vmatpush.msra.mxu0 %v680
    %812 = vmatpush.msra.mxu0 %v676
    %813 = vmatmul.f32.gmra.mxu0 %v315
    %v814 = vpop.f32.mrf.mxu0
    %v815 = vadd.f32 0.0, %v814
    %816 = vdwg.mxu0
    %v817 = vadd.f32 %v669, %v755
    %v818 = vadd.f32 %v670, %v775
    %v819 = vadd.f32 %v671, %v795
    %v820 = vadd.f32 %v672, %v815
    %v821 = vxor.u32 %v817, 2147483648
    %v822 = vmul.f32 %v821, 1.442695
    %v823 = vpow.pop %v822
    %v824 = vadd.f32 %v823, 1.0
    %v825 = vrcp.pop %v824
    %v826 = vmul.f32 %v824, %v825
    %v827 = vsub.f32 1.0, %v826
    %v828 = vmul.f32 %v825, %v827
    %v829 = vadd.f32 %v825, %v828
    %vm830 = vweird.f32 %v824
    %vm831 = vweird.f32 %v825
    %vm832 = vmor %vm830, %vm831
    %v833 = vsel %vm832, %v825, %v829
    %v834 = vand.u32 2147483647, %v824
    %vm835 = vcmp.eq.f32.partialorder %v834, 8.507059e+37
    %v836 = vand.u32 %v824, 2147483648
    %v837 = vor.u32 1.1754944e-38, %v836
    %v838 = vsel %vm835, %v837, %v833
    %v839 = vmul.f32 1.0, %v838
    %v840 = vxor.u32 %v818, 2147483648
    %v841 = vmul.f32 %v840, 1.442695
    %v842 = vpow.pop %v841
    %v843 = vadd.f32 %v842, 1.0
    %v844 = vrcp.pop %v843
    %v845 = vmul.f32 %v843, %v844
    %v846 = vsub.f32 1.0, %v845
    %v847 = vmul.f32 %v844, %v846
    %v848 = vadd.f32 %v844, %v847
    %vm849 = vweird.f32 %v843
    %vm850 = vweird.f32 %v844
    %vm851 = vmor %vm849, %vm850
    %v852 = vsel %vm851, %v844, %v848
    %v853 = vand.u32 2147483647, %v843
    %vm854 = vcmp.eq.f32.partialorder %v853, 8.507059e+37
    %v855 = vand.u32 %v843, 2147483648
    %v856 = vor.u32 1.1754944e-38, %v855
    %v857 = vsel %vm854, %v856, %v852
    %v858 = vmul.f32 1.0, %v857
    %v859 = vtanh.pop %v819
    %v860 = vxor.u32 %v820, 2147483648
    %v861 = vmul.f32 %v860, 1.442695
    %v862 = vpow.pop %v861
    %v863 = vadd.f32 %v862, 1.0
    %v864 = vrcp.pop %v863
    %v865 = vmul.f32 %v863, %v864
    %v866 = vsub.f32 1.0, %v865
    %v867 = vmul.f32 %v864, %v866
    %v868 = vadd.f32 %v864, %v867
    %vm869 = vweird.f32 %v863
    %vm870 = vweird.f32 %v864
    %vm871 = vmor %vm869, %vm870
    %v872 = vsel %vm871, %v864, %v868
    %v873 = vand.u32 2147483647, %v863
    %vm874 = vcmp.eq.f32.partialorder %v873, 8.507059e+37
    %v875 = vand.u32 %v863, 2147483648
    %v876 = vor.u32 1.1754944e-38, %v875
    %v877 = vsel %vm874, %v876, %v872
    %v878 = vmul.f32 1.0, %v877
    %v879 = vmul.f32 %v858, %v313
    %v880 = vmul.f32 %v839, %v859
    %v881 = vadd.f32 %v879, %v880
    %v882 = vtanh.pop %v881
    %v883 = vmul.f32 %v878, %v882
    %v884 = vld [vmem:[#allocation11] sm:$0xff]
    %v885 = vld [vmem:[#allocation11 + $0x8] sm:$0xff]
    %v886 = vld [vmem:[#allocation11 + $0x10] sm:$0xff]
    %v887 = vld [vmem:[#allocation11 + $0x18] sm:$0xff]
    %v888 = vld [vmem:[#allocation11 + $0x20] sm:$0xff]
    %v889 = vld [vmem:[#allocation11 + $0x28] sm:$0xff]
    %v890 = vld [vmem:[#allocation11 + $0x30] sm:$0xff]
    %v891 = vld [vmem:[#allocation11 + $0x38] sm:$0xff]
    %v892 = vld [vmem:[#allocation11 + $0x40] sm:$0xff]
    %v893 = vld [vmem:[#allocation11 + $0x48] sm:$0xff]
    %v894 = vld [vmem:[#allocation11 + $0x50] sm:$0xff]
    %v895 = vld [vmem:[#allocation11 + $0x58] sm:$0xff]
    %v896 = vld [vmem:[#allocation11 + $0x60] sm:$0xff]
    %v897 = vld [vmem:[#allocation11 + $0x68] sm:$0xff]
    %v898 = vld [vmem:[#allocation11 + $0x70] sm:$0xff]
    %v899 = vld [vmem:[#allocation11 + $0x78] sm:$0xff]
    %v900 = vld [vmem:[#allocation11 + $0x80] sm:$0xff]
    %v901 = vld [vmem:[#allocation11 + $0x88] sm:$0xff]
    %v902 = vld [vmem:[#allocation11 + $0x90] sm:$0xff]
    %v903 = vld [vmem:[#allocation11 + $0x98] sm:$0xff]
    %v904 = vld [vmem:[#allocation11 + $0xa0] sm:$0xff]
    %v905 = vld [vmem:[#allocation11 + $0xa8] sm:$0xff]
    %v906 = vld [vmem:[#allocation11 + $0xb0] sm:$0xff]
    %v907 = vld [vmem:[#allocation11 + $0xb8] sm:$0xff]
    %v908 = vld [vmem:[#allocation11 + $0xc0] sm:$0xff]
    %v909 = vld [vmem:[#allocation11 + $0xc8] sm:$0xff]
    %v910 = vld [vmem:[#allocation11 + $0xd0] sm:$0xff]
    %v911 = vld [vmem:[#allocation11 + $0xd8] sm:$0xff]
    %v912 = vld [vmem:[#allocation11 + $0xe0] sm:$0xff]
    %v913 = vld [vmem:[#allocation11 + $0xe8] sm:$0xff]
    %v914 = vld [vmem:[#allocation11 + $0xf0] sm:$0xff]
    %v915 = vld [vmem:[#allocation11 + $0xf8] sm:$0xff]
    %v916 = vld [vmem:[#allocation11 + $0x100] sm:$0xff]
    %v917 = vld [vmem:[#allocation11 + $0x108] sm:$0xff]
    %v918 = vld [vmem:[#allocation11 + $0x110] sm:$0xff]
    %v919 = vld [vmem:[#allocation11 + $0x118] sm:$0xff]
    %v920 = vld [vmem:[#allocation11 + $0x120] sm:$0xff]
    %v921 = vld [vmem:[#allocation11 + $0x128] sm:$0xff]
    %v922 = vld [vmem:[#allocation11 + $0x130] sm:$0xff]
    %v923 = vld [vmem:[#allocation11 + $0x138] sm:$0xff]
    %v924 = vld [vmem:[#allocation11 + $0x140] sm:$0xff]
    %v925 = vld [vmem:[#allocation11 + $0x148] sm:$0xff]
    %v926 = vld [vmem:[#allocation11 + $0x150] sm:$0xff]
    %v927 = vld [vmem:[#allocation11 + $0x158] sm:$0xff]
    %v928 = vld [vmem:[#allocation11 + $0x160] sm:$0xff]
    %v929 = vld [vmem:[#allocation11 + $0x168] sm:$0xff]
    %v930 = vld [vmem:[#allocation11 + $0x170] sm:$0xff]
    %v931 = vld [vmem:[#allocation11 + $0x178] sm:$0xff]
    %v932 = vld [vmem:[#allocation11 + $0x180] sm:$0xff]
    %v933 = vld [vmem:[#allocation11 + $0x188] sm:$0xff]
    %v934 = vld [vmem:[#allocation11 + $0x190] sm:$0xff]
    %v935 = vld [vmem:[#allocation11 + $0x198] sm:$0xff]
    %v936 = vld [vmem:[#allocation11 + $0x1a0] sm:$0xff]
    %v937 = vld [vmem:[#allocation11 + $0x1a8] sm:$0xff]
    %v938 = vld [vmem:[#allocation11 + $0x1b0] sm:$0xff]
    %v939 = vld [vmem:[#allocation11 + $0x1b8] sm:$0xff]
    %v940 = vld [vmem:[#allocation11 + $0x1c0] sm:$0xff]
    %v941 = vld [vmem:[#allocation11 + $0x1c8] sm:$0xff]
    %v942 = vld [vmem:[#allocation11 + $0x1d0] sm:$0xff]
    %v943 = vld [vmem:[#allocation11 + $0x1d8] sm:$0xff]
    %v944 = vld [vmem:[#allocation11 + $0x1e0] sm:$0xff]
    %v945 = vld [vmem:[#allocation11 + $0x1e8] sm:$0xff]
    %v946 = vld [vmem:[#allocation11 + $0x1f0] sm:$0xff]
    %v947 = vld [vmem:[#allocation11 + $0x1f8] sm:$0xff]
    %v948 = vld [vmem:[#allocation11 + $0x200] sm:$0xff]
    %v949 = vld [vmem:[#allocation11 + $0x208] sm:$0xff]
    %v950 = vld [vmem:[#allocation11 + $0x210] sm:$0xff]
    %v951 = vld [vmem:[#allocation11 + $0x218] sm:$0xff]
    %v952 = vld [vmem:[#allocation11 + $0x220] sm:$0xff]
    %v953 = vld [vmem:[#allocation11 + $0x228] sm:$0xff]
    %v954 = vld [vmem:[#allocation11 + $0x230] sm:$0xff]
    %v955 = vld [vmem:[#allocation11 + $0x238] sm:$0xff]
    %v956 = vld [vmem:[#allocation11 + $0x240] sm:$0xff]
    %v957 = vld [vmem:[#allocation11 + $0x248] sm:$0xff]
    %v958 = vld [vmem:[#allocation11 + $0x250] sm:$0xff]
    %v959 = vld [vmem:[#allocation11 + $0x258] sm:$0xff]
    %v960 = vld [vmem:[#allocation11 + $0x260] sm:$0xff]
    %v961 = vld [vmem:[#allocation11 + $0x268] sm:$0xff]
    %v962 = vld [vmem:[#allocation11 + $0x270] sm:$0xff]
    %v963 = vld [vmem:[#allocation11 + $0x278] sm:$0xff]
    %v964 = vld [vmem:[#allocation11 + $0x280] sm:$0xff]
    %v965 = vld [vmem:[#allocation11 + $0x288] sm:$0xff]
    %v966 = vld [vmem:[#allocation11 + $0x290] sm:$0xff]
    %v967 = vld [vmem:[#allocation11 + $0x298] sm:$0xff]
    %v968 = vld [vmem:[#allocation11 + $0x2a0] sm:$0xff]
    %v969 = vld [vmem:[#allocation11 + $0x2a8] sm:$0xff]
    %v970 = vld [vmem:[#allocation11 + $0x2b0] sm:$0xff]
    %v971 = vld [vmem:[#allocation11 + $0x2b8] sm:$0xff]
    %v972 = vld [vmem:[#allocation11 + $0x2c0] sm:$0xff]
    %v973 = vld [vmem:[#allocation11 + $0x2c8] sm:$0xff]
    %v974 = vld [vmem:[#allocation11 + $0x2d0] sm:$0xff]
    %v975 = vld [vmem:[#allocation11 + $0x2d8] sm:$0xff]
    %v976 = vld [vmem:[#allocation11 + $0x2e0] sm:$0xff]
    %v977 = vld [vmem:[#allocation11 + $0x2e8] sm:$0xff]
    %v978 = vld [vmem:[#allocation11 + $0x2f0] sm:$0xff]
    %v979 = vld [vmem:[#allocation11 + $0x2f8] sm:$0xff]
    %v980 = vld [vmem:[#allocation11 + $0x300] sm:$0xff]
    %v981 = vld [vmem:[#allocation11 + $0x308] sm:$0xff]
    %v982 = vld [vmem:[#allocation11 + $0x310] sm:$0xff]
    %v983 = vld [vmem:[#allocation11 + $0x318] sm:$0xff]
    %v984 = vld [vmem:[#allocation11 + $0x320] sm:$0xff]
    %v985 = vld [vmem:[#allocation11 + $0x328] sm:$0xff]
    %v986 = vld [vmem:[#allocation11 + $0x330] sm:$0xff]
    %v987 = vld [vmem:[#allocation11 + $0x338] sm:$0xff]
    %v988 = vld [vmem:[#allocation11 + $0x340] sm:$0xff]
    %v989 = vld [vmem:[#allocation11 + $0x348] sm:$0xff]
    %v990 = vld [vmem:[#allocation11 + $0x350] sm:$0xff]
    %v991 = vld [vmem:[#allocation11 + $0x358] sm:$0xff]
    %v992 = vld [vmem:[#allocation11 + $0x360] sm:$0xff]
    %v993 = vld [vmem:[#allocation11 + $0x368] sm:$0xff]
    %v994 = vld [vmem:[#allocation11 + $0x370] sm:$0xff]
    %v995 = vld [vmem:[#allocation11 + $0x378] sm:$0xff]
    %v996 = vld [vmem:[#allocation11 + $0x380] sm:$0xff]
    %v997 = vld [vmem:[#allocation11 + $0x388] sm:$0xff]
    %v998 = vld [vmem:[#allocation11 + $0x390] sm:$0xff]
    %v999 = vld [vmem:[#allocation11 + $0x398] sm:$0xff]
    %v1000 = vld [vmem:[#allocation11 + $0x3a0] sm:$0xff]
    %v1001 = vld [vmem:[#allocation11 + $0x3a8] sm:$0xff]
    %v1002 = vld [vmem:[#allocation11 + $0x3b0] sm:$0xff]
    %v1003 = vld [vmem:[#allocation11 + $0x3b8] sm:$0xff]
    %v1004 = vld [vmem:[#allocation11 + $0x3c0] sm:$0xff]
    %v1005 = vld [vmem:[#allocation11 + $0x3c8] sm:$0xff]
    %v1006 = vld [vmem:[#allocation11 + $0x3d0] sm:$0xff]
    %v1007 = vld [vmem:[#allocation11 + $0x3d8] sm:$0xff]
    %v1008 = vld [vmem:[#allocation11 + $0x3e0] sm:$0xff]
    %v1009 = vld [vmem:[#allocation11 + $0x3e8] sm:$0xff]
    %v1010 = vld [vmem:[#allocation11 + $0x3f0] sm:$0xff]
    %v1011 = vld [vmem:[#allocation11 + $0x3f8] sm:$0xff]
    %1012 = vmatpush.msra.mxu0 %v944
    %1013 = vmatpush.msra.mxu0 %v940
    %1014 = vmatpush.msra.mxu0 %v936
    %1015 = vmatpush.msra.mxu0 %v932
    %1016 = vmatpush.msra.mxu0 %v928
    %1017 = vmatpush.msra.mxu0 %v924
    %1018 = vmatpush.msra.mxu0 %v920
    %1019 = vmatpush.msra.mxu0 %v916
    %1020 = vmatpush.msra.mxu0 %v912
    %1021 = vmatpush.msra.mxu0 %v908
    %1022 = vmatpush.msra.mxu0 %v904
    %1023 = vmatpush.msra.mxu0 %v900
    %1024 = vmatpush.msra.mxu0 %v896
    %1025 = vmatpush.msra.mxu0 %v892
    %1026 = vmatpush.msra.mxu0 %v888
    %1027 = vmatpush.msra.mxu0 %v884
    %1028 = vmatmul.f32.gmra.mxu0 %v883
    %v1029 = vpop.f32.mrf.mxu0
    %v1030 = vadd.f32 %v89, %v1029
    %1031 = vdwg.mxu0
    %1032 = vmatpush.msra.mxu0 %v1008
    %1033 = vmatpush.msra.mxu0 %v1004
    %1034 = vmatpush.msra.mxu0 %v1000
    %1035 = vmatpush.msra.mxu0 %v996
    %1036 = vmatpush.msra.mxu0 %v992
    %1037 = vmatpush.msra.mxu0 %v988
    %1038 = vmatpush.msra.mxu0 %v984
    %1039 = vmatpush.msra.mxu0 %v980
    %1040 = vmatpush.msra.mxu0 %v976
    %1041 = vmatpush.msra.mxu0 %v972
    %1042 = vmatpush.msra.mxu0 %v968
    %1043 = vmatpush.msra.mxu0 %v964
    %1044 = vmatpush.msra.mxu0 %v960
    %1045 = vmatpush.msra.mxu0 %v956
    %1046 = vmatpush.msra.mxu0 %v952
    %1047 = vmatpush.msra.mxu0 %v948
    %1048 = vmatmul.f32.gmra.mxu0 %v666
    %v1049 = vpop.f32.mrf.mxu0
    %v1050 = vadd.f32 %v1030, %v1049
    %1051 = vdwg.mxu0
    %1052 = vmatpush.msra.mxu0 %v945
    %1053 = vmatpush.msra.mxu0 %v941
    %1054 = vmatpush.msra.mxu0 %v937
    %1055 = vmatpush.msra.mxu0 %v933
    %1056 = vmatpush.msra.mxu0 %v929
    %1057 = vmatpush.msra.mxu0 %v925
    %1058 = vmatpush.msra.mxu0 %v921
    %1059 = vmatpush.msra.mxu0 %v917
    %1060 = vmatpush.msra.mxu0 %v913
    %1061 = vmatpush.msra.mxu0 %v909
    %1062 = vmatpush.msra.mxu0 %v905
    %1063 = vmatpush.msra.mxu0 %v901
    %1064 = vmatpush.msra.mxu0 %v897
    %1065 = vmatpush.msra.mxu0 %v893
    %1066 = vmatpush.msra.mxu0 %v889
    %1067 = vmatpush.msra.mxu0 %v885
    %1068 = vmatmul.f32.gmra.mxu0 %v883
    %v1069 = vpop.f32.mrf.mxu0
    %v1070 = vadd.f32 %v90, %v1069
    %1071 = vdwg.mxu0
    %1072 = vmatpush.msra.mxu0 %v1009
    %1073 = vmatpush.msra.mxu0 %v1005
    %1074 = vmatpush.msra.mxu0 %v1001
    %1075 = vmatpush.msra.mxu0 %v997
    %1076 = vmatpush.msra.mxu0 %v993
    %1077 = vmatpush.msra.mxu0 %v989
    %1078 = vmatpush.msra.mxu0 %v985
    %1079 = vmatpush.msra.mxu0 %v981
    %1080 = vmatpush.msra.mxu0 %v977
    %1081 = vmatpush.msra.mxu0 %v973
    %1082 = vmatpush.msra.mxu0 %v969
    %1083 = vmatpush.msra.mxu0 %v965
    %1084 = vmatpush.msra.mxu0 %v961
    %1085 = vmatpush.msra.mxu0 %v957
    %1086 = vmatpush.msra.mxu0 %v953
    %1087 = vmatpush.msra.mxu0 %v949
    %1088 = vmatmul.f32.gmra.mxu0 %v666
    %v1089 = vpop.f32.mrf.mxu0
    %v1090 = vadd.f32 %v1070, %v1089
    %1091 = vdwg.mxu0
    %1092 = vmatpush.msra.mxu0 %v946
    %1093 = vmatpush.msra.mxu0 %v942
    %1094 = vmatpush.msra.mxu0 %v938
    %1095 = vmatpush.msra.mxu0 %v934
    %1096 = vmatpush.msra.mxu0 %v930
    %1097 = vmatpush.msra.mxu0 %v926
    %1098 = vmatpush.msra.mxu0 %v922
    %1099 = vmatpush.msra.mxu0 %v918
    %1100 = vmatpush.msra.mxu0 %v914
    %1101 = vmatpush.msra.mxu0 %v910
    %1102 = vmatpush.msra.mxu0 %v906
    %1103 = vmatpush.msra.mxu0 %v902
    %1104 = vmatpush.msra.mxu0 %v898
    %1105 = vmatpush.msra.mxu0 %v894
    %1106 = vmatpush.msra.mxu0 %v890
    %1107 = vmatpush.msra.mxu0 %v886
    %1108 = vmatmul.f32.gmra.mxu0 %v883
    %v1109 = vpop.f32.mrf.mxu0
    %v1110 = vadd.f32 %v91, %v1109
    %1111 = vdwg.mxu0
    %1112 = vmatpush.msra.mxu0 %v1010
    %1113 = vmatpush.msra.mxu0 %v1006
    %1114 = vmatpush.msra.mxu0 %v1002
    %1115 = vmatpush.msra.mxu0 %v998
    %1116 = vmatpush.msra.mxu0 %v994
    %1117 = vmatpush.msra.mxu0 %v990
    %1118 = vmatpush.msra.mxu0 %v986
    %1119 = vmatpush.msra.mxu0 %v982
    %1120 = vmatpush.msra.mxu0 %v978
    %1121 = vmatpush.msra.mxu0 %v974
    %1122 = vmatpush.msra.mxu0 %v970
    %1123 = vmatpush.msra.mxu0 %v966
    %1124 = vmatpush.msra.mxu0 %v962
    %1125 = vmatpush.msra.mxu0 %v958
    %1126 = vmatpush.msra.mxu0 %v954
    %1127 = vmatpush.msra.mxu0 %v950
    %1128 = vmatmul.f32.gmra.mxu0 %v666
    %v1129 = vpop.f32.mrf.mxu0
    %v1130 = vadd.f32 %v1110, %v1129
    %1131 = vdwg.mxu0
    %1132 = vmatpush.msra.mxu0 %v947
    %1133 = vmatpush.msra.mxu0 %v943
    %1134 = vmatpush.msra.mxu0 %v939
    %1135 = vmatpush.msra.mxu0 %v935
    %1136 = vmatpush.msra.mxu0 %v931
    %1137 = vmatpush.msra.mxu0 %v927
    %1138 = vmatpush.msra.mxu0 %v923
    %1139 = vmatpush.msra.mxu0 %v919
    %1140 = vmatpush.msra.mxu0 %v915
    %1141 = vmatpush.msra.mxu0 %v911
    %1142 = vmatpush.msra.mxu0 %v907
    %1143 = vmatpush.msra.mxu0 %v903
    %1144 = vmatpush.msra.mxu0 %v899
    %1145 = vmatpush.msra.mxu0 %v895
    %1146 = vmatpush.msra.mxu0 %v891
    %1147 = vmatpush.msra.mxu0 %v887
    %1148 = vmatmul.f32.gmra.mxu0 %v883
    %v1149 = vpop.f32.mrf.mxu0
    %v1150 = vadd.f32 %v92, %v1149
    %1151 = vdwg.mxu0
    %1152 = vmatpush.msra.mxu0 %v1011
    %1153 = vmatpush.msra.mxu0 %v1007
    %1154 = vmatpush.msra.mxu0 %v1003
    %1155 = vmatpush.msra.mxu0 %v999
    %1156 = vmatpush.msra.mxu0 %v995
    %1157 = vmatpush.msra.mxu0 %v991
    %1158 = vmatpush.msra.mxu0 %v987
    %1159 = vmatpush.msra.mxu0 %v983
    %1160 = vmatpush.msra.mxu0 %v979
    %1161 = vmatpush.msra.mxu0 %v975
    %1162 = vmatpush.msra.mxu0 %v971
    %1163 = vmatpush.msra.mxu0 %v967
    %1164 = vmatpush.msra.mxu0 %v963
    %1165 = vmatpush.msra.mxu0 %v959
    %1166 = vmatpush.msra.mxu0 %v955
    %1167 = vmatpush.msra.mxu0 %v951
    %1168 = vmatmul.f32.gmra.mxu0 %v666
    %v1169 = vpop.f32.mrf.mxu0
    %v1170 = vadd.f32 %v1150, %v1169
    %1171 = vdwg.mxu0
    %v1172 = vxor.u32 %v1050, 2147483648
    %v1173 = vmul.f32 %v1172, 1.442695
    %v1174 = vpow.pop %v1173
    %v1175 = vadd.f32 %v1174, 1.0
    %v1176 = vrcp.pop %v1175
    %v1177 = vmul.f32 %v1175, %v1176
    %v1178 = vsub.f32 1.0, %v1177
    %v1179 = vmul.f32 %v1176, %v1178
    %v1180 = vadd.f32 %v1176, %v1179
    %vm1181 = vweird.f32 %v1175
    %vm1182 = vweird.f32 %v1176
    %vm1183 = vmor %vm1181, %vm1182
    %v1184 = vsel %vm1183, %v1176, %v1180
    %v1185 = vand.u32 2147483647, %v1175
    %vm1186 = vcmp.eq.f32.partialorder %v1185, 8.507059e+37
    %v1187 = vand.u32 %v1175, 2147483648
    %v1188 = vor.u32 1.1754944e-38, %v1187
    %v1189 = vsel %vm1186, %v1188, %v1184
    %v1190 = vmul.f32 1.0, %v1189
    %v1191 = vxor.u32 %v1090, 2147483648
    %v1192 = vmul.f32 %v1191, 1.442695
    %v1193 = vpow.pop %v1192
    %v1194 = vadd.f32 %v1193, 1.0
    %v1195 = vrcp.pop %v1194
    %v1196 = vmul.f32 %v1194, %v1195
    %v1197 = vsub.f32 1.0, %v1196
    %v1198 = vmul.f32 %v1195, %v1197
    %v1199 = vadd.f32 %v1195, %v1198
    %vm1200 = vweird.f32 %v1194
    %vm1201 = vweird.f32 %v1195
    %vm1202 = vmor %vm1200, %vm1201
    %v1203 = vsel %vm1202, %v1195, %v1199
    %v1204 = vand.u32 2147483647, %v1194
    %vm1205 = vcmp.eq.f32.partialorder %v1204, 8.507059e+37
    %v1206 = vand.u32 %v1194, 2147483648
    %v1207 = vor.u32 1.1754944e-38, %v1206
    %v1208 = vsel %vm1205, %v1207, %v1203
    %v1209 = vmul.f32 1.0, %v1208
    %v1210 = vtanh.pop %v1130
    %v1211 = vxor.u32 %v1170, 2147483648
    %v1212 = vmul.f32 %v1211, 1.442695
    %v1213 = vpow.pop %v1212
    %v1214 = vadd.f32 %v1213, 1.0
    %v1215 = vrcp.pop %v1214
    %v1216 = vmul.f32 %v1214, %v1215
    %v1217 = vsub.f32 1.0, %v1216
    %v1218 = vmul.f32 %v1215, %v1217
    %v1219 = vadd.f32 %v1215, %v1218
    %vm1220 = vweird.f32 %v1214
    %vm1221 = vweird.f32 %v1215
    %vm1222 = vmor %vm1220, %vm1221
    %v1223 = vsel %vm1222, %v1215, %v1219
    %v1224 = vand.u32 2147483647, %v1214
    %vm1225 = vcmp.eq.f32.partialorder %v1224, 8.507059e+37
    %v1226 = vand.u32 %v1214, 2147483648
    %v1227 = vor.u32 1.1754944e-38, %v1226
    %v1228 = vsel %vm1225, %v1227, %v1223
    %v1229 = vmul.f32 1.0, %v1228
    %v1230 = vmul.f32 %v1209, %v664
    %v1231 = vmul.f32 %v1190, %v1210
    %v1232 = vadd.f32 %v1230, %v1231
    %v1233 = vtanh.pop %v1232
    %v1234 = vmul.f32 %v1229, %v1233
    %s1235 = scalar_lea.vmem [#allocation14], 8
    %1236 = vst [vmem:[%s1235] sm:$0xff] %v1234
    %s1237 = scalar_lea.vmem [#allocation6], 64
    %v1238 = vld [vmem:[%s1237] sm:$0xff]
    %v1239 = vld [vmem:[%s1237 + $0x8] sm:$0xff]
    %v1240 = vld [vmem:[%s1237 + $0x10] sm:$0xff]
    %v1241 = vld [vmem:[%s1237 + $0x18] sm:$0xff]
    %v1242 = vld [vmem:[#allocation9] sm:$0xff]
    %v1243 = vld [vmem:[#allocation9 + $0x8] sm:$0xff]
    %v1244 = vld [vmem:[#allocation9 + $0x10] sm:$0xff]
    %v1245 = vld [vmem:[#allocation9 + $0x18] sm:$0xff]
    %v1246 = vld [vmem:[#allocation9 + $0x20] sm:$0xff]
    %v1247 = vld [vmem:[#allocation9 + $0x28] sm:$0xff]
    %v1248 = vld [vmem:[#allocation9 + $0x30] sm:$0xff]
    %v1249 = vld [vmem:[#allocation9 + $0x38] sm:$0xff]
    %v1250 = vld [vmem:[#allocation9 + $0x40] sm:$0xff]
    %v1251 = vld [vmem:[#allocation9 + $0x48] sm:$0xff]
    %v1252 = vld [vmem:[#allocation9 + $0x50] sm:$0xff]
    %v1253 = vld [vmem:[#allocation9 + $0x58] sm:$0xff]
    %v1254 = vld [vmem:[#allocation9 + $0x60] sm:$0xff]
    %v1255 = vld [vmem:[#allocation9 + $0x68] sm:$0xff]
    %v1256 = vld [vmem:[#allocation9 + $0x70] sm:$0xff]
    %v1257 = vld [vmem:[#allocation9 + $0x78] sm:$0xff]
    %v1258 = vld [vmem:[#allocation9 + $0x80] sm:$0xff]
    %v1259 = vld [vmem:[#allocation9 + $0x88] sm:$0xff]
    %v1260 = vld [vmem:[#allocation9 + $0x90] sm:$0xff]
    %v1261 = vld [vmem:[#allocation9 + $0x98] sm:$0xff]
    %v1262 = vld [vmem:[#allocation9 + $0xa0] sm:$0xff]
    %v1263 = vld [vmem:[#allocation9 + $0xa8] sm:$0xff]
    %v1264 = vld [vmem:[#allocation9 + $0xb0] sm:$0xff]
    %v1265 = vld [vmem:[#allocation9 + $0xb8] sm:$0xff]
    %v1266 = vld [vmem:[#allocation9 + $0xc0] sm:$0xff]
    %v1267 = vld [vmem:[#allocation9 + $0xc8] sm:$0xff]
    %v1268 = vld [vmem:[#allocation9 + $0xd0] sm:$0xff]
    %v1269 = vld [vmem:[#allocation9 + $0xd8] sm:$0xff]
    %v1270 = vld [vmem:[#allocation9 + $0xe0] sm:$0xff]
    %v1271 = vld [vmem:[#allocation9 + $0xe8] sm:$0xff]
    %v1272 = vld [vmem:[#allocation9 + $0xf0] sm:$0xff]
    %v1273 = vld [vmem:[#allocation9 + $0xf8] sm:$0xff]
    %v1274 = vld [vmem:[#allocation9 + $0x100] sm:$0xff]
    %v1275 = vld [vmem:[#allocation9 + $0x108] sm:$0xff]
    %v1276 = vld [vmem:[#allocation9 + $0x110] sm:$0xff]
    %v1277 = vld [vmem:[#allocation9 + $0x118] sm:$0xff]
    %v1278 = vld [vmem:[#allocation9 + $0x120] sm:$0xff]
    %v1279 = vld [vmem:[#allocation9 + $0x128] sm:$0xff]
    %v1280 = vld [vmem:[#allocation9 + $0x130] sm:$0xff]
    %v1281 = vld [vmem:[#allocation9 + $0x138] sm:$0xff]
    %v1282 = vld [vmem:[#allocation9 + $0x140] sm:$0xff]
    %v1283 = vld [vmem:[#allocation9 + $0x148] sm:$0xff]
    %v1284 = vld [vmem:[#allocation9 + $0x150] sm:$0xff]
    %v1285 = vld [vmem:[#allocation9 + $0x158] sm:$0xff]
    %v1286 = vld [vmem:[#allocation9 + $0x160] sm:$0xff]
    %v1287 = vld [vmem:[#allocation9 + $0x168] sm:$0xff]
    %v1288 = vld [vmem:[#allocation9 + $0x170] sm:$0xff]
    %v1289 = vld [vmem:[#allocation9 + $0x178] sm:$0xff]
    %v1290 = vld [vmem:[#allocation9 + $0x180] sm:$0xff]
    %v1291 = vld [vmem:[#allocation9 + $0x188] sm:$0xff]
    %v1292 = vld [vmem:[#allocation9 + $0x190] sm:$0xff]
    %v1293 = vld [vmem:[#allocation9 + $0x198] sm:$0xff]
    %v1294 = vld [vmem:[#allocation9 + $0x1a0] sm:$0xff]
    %v1295 = vld [vmem:[#allocation9 + $0x1a8] sm:$0xff]
    %v1296 = vld [vmem:[#allocation9 + $0x1b0] sm:$0xff]
    %v1297 = vld [vmem:[#allocation9 + $0x1b8] sm:$0xff]
    %v1298 = vld [vmem:[#allocation9 + $0x1c0] sm:$0xff]
    %v1299 = vld [vmem:[#allocation9 + $0x1c8] sm:$0xff]
    %v1300 = vld [vmem:[#allocation9 + $0x1d0] sm:$0xff]
    %v1301 = vld [vmem:[#allocation9 + $0x1d8] sm:$0xff]
    %v1302 = vld [vmem:[#allocation9 + $0x1e0] sm:$0xff]
    %v1303 = vld [vmem:[#allocation9 + $0x1e8] sm:$0xff]
    %v1304 = vld [vmem:[#allocation9 + $0x1f0] sm:$0xff]
    %v1305 = vld [vmem:[#allocation9 + $0x1f8] sm:$0xff]
    %1306 = vmatpush.msra.mxu0 %v1302
    %1307 = vmatpush.msra.mxu0 %v1298
    %1308 = vmatpush.msra.mxu0 %v1294
    %1309 = vmatpush.msra.mxu0 %v1290
    %1310 = vmatpush.msra.mxu0 %v1286
    %1311 = vmatpush.msra.mxu0 %v1282
    %1312 = vmatpush.msra.mxu0 %v1278
    %1313 = vmatpush.msra.mxu0 %v1274
    %1314 = vmatpush.msra.mxu0 %v1270
    %1315 = vmatpush.msra.mxu0 %v1266
    %1316 = vmatpush.msra.mxu0 %v1262
    %1317 = vmatpush.msra.mxu0 %v1258
    %1318 = vmatpush.msra.mxu0 %v1254
    %1319 = vmatpush.msra.mxu0 %v1250
    %1320 = vmatpush.msra.mxu0 %v1246
    %1321 = vmatpush.msra.mxu0 %v1242
    %1322 = vmatmul.f32.gmra.mxu0 %v883
    %v1323 = vpop.f32.mrf.mxu0
    %v1324 = vadd.f32 0.0, %v1323
    %1325 = vdwg.mxu0
    %1326 = vmatpush.msra.mxu0 %v1303
    %1327 = vmatpush.msra.mxu0 %v1299
    %1328 = vmatpush.msra.mxu0 %v1295
    %1329 = vmatpush.msra.mxu0 %v1291
    %1330 = vmatpush.msra.mxu0 %v1287
    %1331 = vmatpush.msra.mxu0 %v1283
    %1332 = vmatpush.msra.mxu0 %v1279
    %1333 = vmatpush.msra.mxu0 %v1275
    %1334 = vmatpush.msra.mxu0 %v1271
    %1335 = vmatpush.msra.mxu0 %v1267
    %1336 = vmatpush.msra.mxu0 %v1263
    %1337 = vmatpush.msra.mxu0 %v1259
    %1338 = vmatpush.msra.mxu0 %v1255
    %1339 = vmatpush.msra.mxu0 %v1251
    %1340 = vmatpush.msra.mxu0 %v1247
    %1341 = vmatpush.msra.mxu0 %v1243
    %1342 = vmatmul.f32.gmra.mxu0 %v883
    %v1343 = vpop.f32.mrf.mxu0
    %v1344 = vadd.f32 0.0, %v1343
    %1345 = vdwg.mxu0
    %1346 = vmatpush.msra.mxu0 %v1304
    %1347 = vmatpush.msra.mxu0 %v1300
    %1348 = vmatpush.msra.mxu0 %v1296
    %1349 = vmatpush.msra.mxu0 %v1292
    %1350 = vmatpush.msra.mxu0 %v1288
    %1351 = vmatpush.msra.mxu0 %v1284
    %1352 = vmatpush.msra.mxu0 %v1280
    %1353 = vmatpush.msra.mxu0 %v1276
    %1354 = vmatpush.msra.mxu0 %v1272
    %1355 = vmatpush.msra.mxu0 %v1268
    %1356 = vmatpush.msra.mxu0 %v1264
    %1357 = vmatpush.msra.mxu0 %v1260
    %1358 = vmatpush.msra.mxu0 %v1256
    %1359 = vmatpush.msra.mxu0 %v1252
    %1360 = vmatpush.msra.mxu0 %v1248
    %1361 = vmatpush.msra.mxu0 %v1244
    %1362 = vmatmul.f32.gmra.mxu0 %v883
    %v1363 = vpop.f32.mrf.mxu0
    %v1364 = vadd.f32 0.0, %v1363
    %1365 = vdwg.mxu0
    %1366 = vmatpush.msra.mxu0 %v1305
    %1367 = vmatpush.msra.mxu0 %v1301
    %1368 = vmatpush.msra.mxu0 %v1297
    %1369 = vmatpush.msra.mxu0 %v1293
    %1370 = vmatpush.msra.mxu0 %v1289
    %1371 = vmatpush.msra.mxu0 %v1285
    %1372 = vmatpush.msra.mxu0 %v1281
    %1373 = vmatpush.msra.mxu0 %v1277
    %1374 = vmatpush.msra.mxu0 %v1273
    %1375 = vmatpush.msra.mxu0 %v1269
    %1376 = vmatpush.msra.mxu0 %v1265
    %1377 = vmatpush.msra.mxu0 %v1261
    %1378 = vmatpush.msra.mxu0 %v1257
    %1379 = vmatpush.msra.mxu0 %v1253
    %1380 = vmatpush.msra.mxu0 %v1249
    %1381 = vmatpush.msra.mxu0 %v1245
    %1382 = vmatmul.f32.gmra.mxu0 %v883
    %v1383 = vpop.f32.mrf.mxu0
    %v1384 = vadd.f32 0.0, %v1383
    %1385 = vdwg.mxu0
    %v1386 = vadd.f32 %v1238, %v1324
    %v1387 = vadd.f32 %v1239, %v1344
    %v1388 = vadd.f32 %v1240, %v1364
    %v1389 = vadd.f32 %v1241, %v1384
    %v1390 = vxor.u32 %v1386, 2147483648
    %v1391 = vmul.f32 %v1390, 1.442695
    %v1392 = vpow.pop %v1391
    %v1393 = vadd.f32 %v1392, 1.0
    %v1394 = vrcp.pop %v1393
    %v1395 = vmul.f32 %v1393, %v1394
    %v1396 = vsub.f32 1.0, %v1395
    %v1397 = vmul.f32 %v1394, %v1396
    %v1398 = vadd.f32 %v1394, %v1397
    %vm1399 = vweird.f32 %v1393
    %vm1400 = vweird.f32 %v1394
    %vm1401 = vmor %vm1399, %vm1400
    %v1402 = vsel %vm1401, %v1394, %v1398
    %v1403 = vand.u32 2147483647, %v1393
    %vm1404 = vcmp.eq.f32.partialorder %v1403, 8.507059e+37
    %v1405 = vand.u32 %v1393, 2147483648
    %v1406 = vor.u32 1.1754944e-38, %v1405
    %v1407 = vsel %vm1404, %v1406, %v1402
    %v1408 = vmul.f32 1.0, %v1407
    %v1409 = vxor.u32 %v1387, 2147483648
    %v1410 = vmul.f32 %v1409, 1.442695
    %v1411 = vpow.pop %v1410
    %v1412 = vadd.f32 %v1411, 1.0
    %v1413 = vrcp.pop %v1412
    %v1414 = vmul.f32 %v1412, %v1413
    %v1415 = vsub.f32 1.0, %v1414
    %v1416 = vmul.f32 %v1413, %v1415
    %v1417 = vadd.f32 %v1413, %v1416
    %vm1418 = vweird.f32 %v1412
    %vm1419 = vweird.f32 %v1413
    %vm1420 = vmor %vm1418, %vm1419
    %v1421 = vsel %vm1420, %v1413, %v1417
    %v1422 = vand.u32 2147483647, %v1412
    %vm1423 = vcmp.eq.f32.partialorder %v1422, 8.507059e+37
    %v1424 = vand.u32 %v1412, 2147483648
    %v1425 = vor.u32 1.1754944e-38, %v1424
    %v1426 = vsel %vm1423, %v1425, %v1421
    %v1427 = vmul.f32 1.0, %v1426
    %v1428 = vtanh.pop %v1388
    %v1429 = vxor.u32 %v1389, 2147483648
    %v1430 = vmul.f32 %v1429, 1.442695
    %v1431 = vpow.pop %v1430
    %v1432 = vadd.f32 %v1431, 1.0
    %v1433 = vrcp.pop %v1432
    %v1434 = vmul.f32 %v1432, %v1433
    %v1435 = vsub.f32 1.0, %v1434
    %v1436 = vmul.f32 %v1433, %v1435
    %v1437 = vadd.f32 %v1433, %v1436
    %vm1438 = vweird.f32 %v1432
    %vm1439 = vweird.f32 %v1433
    %vm1440 = vmor %vm1438, %vm1439
    %v1441 = vsel %vm1440, %v1433, %v1437
    %v1442 = vand.u32 2147483647, %v1432
    %vm1443 = vcmp.eq.f32.partialorder %v1442, 8.507059e+37
    %v1444 = vand.u32 %v1432, 2147483648
    %v1445 = vor.u32 1.1754944e-38, %v1444
    %v1446 = vsel %vm1443, %v1445, %v1441
    %v1447 = vmul.f32 1.0, %v1446
    %v1448 = vmul.f32 %v1427, %v881
    %v1449 = vmul.f32 %v1408, %v1428
    %v1450 = vadd.f32 %v1448, %v1449
    %v1451 = vtanh.pop %v1450
    %v1452 = vmul.f32 %v1447, %v1451
    %v1453 = vld [vmem:[#allocation11] sm:$0xff]
    %v1454 = vld [vmem:[#allocation11 + $0x8] sm:$0xff]
    %v1455 = vld [vmem:[#allocation11 + $0x10] sm:$0xff]
    %v1456 = vld [vmem:[#allocation11 + $0x18] sm:$0xff]
    %v1457 = vld [vmem:[#allocation11 + $0x20] sm:$0xff]
    %v1458 = vld [vmem:[#allocation11 + $0x28] sm:$0xff]
    %v1459 = vld [vmem:[#allocation11 + $0x30] sm:$0xff]
    %v1460 = vld [vmem:[#allocation11 + $0x38] sm:$0xff]
    %v1461 = vld [vmem:[#allocation11 + $0x40] sm:$0xff]
    %v1462 = vld [vmem:[#allocation11 + $0x48] sm:$0xff]
    %v1463 = vld [vmem:[#allocation11 + $0x50] sm:$0xff]
    %v1464 = vld [vmem:[#allocation11 + $0x58] sm:$0xff]
    %v1465 = vld [vmem:[#allocation11 + $0x60] sm:$0xff]
    %v1466 = vld [vmem:[#allocation11 + $0x68] sm:$0xff]
    %v1467 = vld [vmem:[#allocation11 + $0x70] sm:$0xff]
    %v1468 = vld [vmem:[#allocation11 + $0x78] sm:$0xff]
    %v1469 = vld [vmem:[#allocation11 + $0x80] sm:$0xff]
    %v1470 = vld [vmem:[#allocation11 + $0x88] sm:$0xff]
    %v1471 = vld [vmem:[#allocation11 + $0x90] sm:$0xff]
    %v1472 = vld [vmem:[#allocation11 + $0x98] sm:$0xff]
    %v1473 = vld [vmem:[#allocation11 + $0xa0] sm:$0xff]
    %v1474 = vld [vmem:[#allocation11 + $0xa8] sm:$0xff]
    %v1475 = vld [vmem:[#allocation11 + $0xb0] sm:$0xff]
    %v1476 = vld [vmem:[#allocation11 + $0xb8] sm:$0xff]
    %v1477 = vld [vmem:[#allocation11 + $0xc0] sm:$0xff]
    %v1478 = vld [vmem:[#allocation11 + $0xc8] sm:$0xff]
    %v1479 = vld [vmem:[#allocation11 + $0xd0] sm:$0xff]
    %v1480 = vld [vmem:[#allocation11 + $0xd8] sm:$0xff]
    %v1481 = vld [vmem:[#allocation11 + $0xe0] sm:$0xff]
    %v1482 = vld [vmem:[#allocation11 + $0xe8] sm:$0xff]
    %v1483 = vld [vmem:[#allocation11 + $0xf0] sm:$0xff]
    %v1484 = vld [vmem:[#allocation11 + $0xf8] sm:$0xff]
    %v1485 = vld [vmem:[#allocation11 + $0x100] sm:$0xff]
    %v1486 = vld [vmem:[#allocation11 + $0x108] sm:$0xff]
    %v1487 = vld [vmem:[#allocation11 + $0x110] sm:$0xff]
    %v1488 = vld [vmem:[#allocation11 + $0x118] sm:$0xff]
    %v1489 = vld [vmem:[#allocation11 + $0x120] sm:$0xff]
    %v1490 = vld [vmem:[#allocation11 + $0x128] sm:$0xff]
    %v1491 = vld [vmem:[#allocation11 + $0x130] sm:$0xff]
    %v1492 = vld [vmem:[#allocation11 + $0x138] sm:$0xff]
    %v1493 = vld [vmem:[#allocation11 + $0x140] sm:$0xff]
    %v1494 = vld [vmem:[#allocation11 + $0x148] sm:$0xff]
    %v1495 = vld [vmem:[#allocation11 + $0x150] sm:$0xff]
    %v1496 = vld [vmem:[#allocation11 + $0x158] sm:$0xff]
    %v1497 = vld [vmem:[#allocation11 + $0x160] sm:$0xff]
    %v1498 = vld [vmem:[#allocation11 + $0x168] sm:$0xff]
    %v1499 = vld [vmem:[#allocation11 + $0x170] sm:$0xff]
    %v1500 = vld [vmem:[#allocation11 + $0x178] sm:$0xff]
    %v1501 = vld [vmem:[#allocation11 + $0x180] sm:$0xff]
    %v1502 = vld [vmem:[#allocation11 + $0x188] sm:$0xff]
    %v1503 = vld [vmem:[#allocation11 + $0x190] sm:$0xff]
    %v1504 = vld [vmem:[#allocation11 + $0x198] sm:$0xff]
    %v1505 = vld [vmem:[#allocation11 + $0x1a0] sm:$0xff]
    %v1506 = vld [vmem:[#allocation11 + $0x1a8] sm:$0xff]
    %v1507 = vld [vmem:[#allocation11 + $0x1b0] sm:$0xff]
    %v1508 = vld [vmem:[#allocation11 + $0x1b8] sm:$0xff]
    %v1509 = vld [vmem:[#allocation11 + $0x1c0] sm:$0xff]
    %v1510 = vld [vmem:[#allocation11 + $0x1c8] sm:$0xff]
    %v1511 = vld [vmem:[#allocation11 + $0x1d0] sm:$0xff]
    %v1512 = vld [vmem:[#allocation11 + $0x1d8] sm:$0xff]
    %v1513 = vld [vmem:[#allocation11 + $0x1e0] sm:$0xff]
    %v1514 = vld [vmem:[#allocation11 + $0x1e8] sm:$0xff]
    %v1515 = vld [vmem:[#allocation11 + $0x1f0] sm:$0xff]
    %v1516 = vld [vmem:[#allocation11 + $0x1f8] sm:$0xff]
    %v1517 = vld [vmem:[#allocation11 + $0x200] sm:$0xff]
    %v1518 = vld [vmem:[#allocation11 + $0x208] sm:$0xff]
    %v1519 = vld [vmem:[#allocation11 + $0x210] sm:$0xff]
    %v1520 = vld [vmem:[#allocation11 + $0x218] sm:$0xff]
    %v1521 = vld [vmem:[#allocation11 + $0x220] sm:$0xff]
    %v1522 = vld [vmem:[#allocation11 + $0x228] sm:$0xff]
    %v1523 = vld [vmem:[#allocation11 + $0x230] sm:$0xff]
    %v1524 = vld [vmem:[#allocation11 + $0x238] sm:$0xff]
    %v1525 = vld [vmem:[#allocation11 + $0x240] sm:$0xff]
    %v1526 = vld [vmem:[#allocation11 + $0x248] sm:$0xff]
    %v1527 = vld [vmem:[#allocation11 + $0x250] sm:$0xff]
    %v1528 = vld [vmem:[#allocation11 + $0x258] sm:$0xff]
    %v1529 = vld [vmem:[#allocation11 + $0x260] sm:$0xff]
    %v1530 = vld [vmem:[#allocation11 + $0x268] sm:$0xff]
    %v1531 = vld [vmem:[#allocation11 + $0x270] sm:$0xff]
    %v1532 = vld [vmem:[#allocation11 + $0x278] sm:$0xff]
    %v1533 = vld [vmem:[#allocation11 + $0x280] sm:$0xff]
    %v1534 = vld [vmem:[#allocation11 + $0x288] sm:$0xff]
    %v1535 = vld [vmem:[#allocation11 + $0x290] sm:$0xff]
    %v1536 = vld [vmem:[#allocation11 + $0x298] sm:$0xff]
    %v1537 = vld [vmem:[#allocation11 + $0x2a0] sm:$0xff]
    %v1538 = vld [vmem:[#allocation11 + $0x2a8] sm:$0xff]
    %v1539 = vld [vmem:[#allocation11 + $0x2b0] sm:$0xff]
    %v1540 = vld [vmem:[#allocation11 + $0x2b8] sm:$0xff]
    %v1541 = vld [vmem:[#allocation11 + $0x2c0] sm:$0xff]
    %v1542 = vld [vmem:[#allocation11 + $0x2c8] sm:$0xff]
    %v1543 = vld [vmem:[#allocation11 + $0x2d0] sm:$0xff]
    %v1544 = vld [vmem:[#allocation11 + $0x2d8] sm:$0xff]
    %v1545 = vld [vmem:[#allocation11 + $0x2e0] sm:$0xff]
    %v1546 = vld [vmem:[#allocation11 + $0x2e8] sm:$0xff]
    %v1547 = vld [vmem:[#allocation11 + $0x2f0] sm:$0xff]
    %v1548 = vld [vmem:[#allocation11 + $0x2f8] sm:$0xff]
    %v1549 = vld [vmem:[#allocation11 + $0x300] sm:$0xff]
    %v1550 = vld [vmem:[#allocation11 + $0x308] sm:$0xff]
    %v1551 = vld [vmem:[#allocation11 + $0x310] sm:$0xff]
    %v1552 = vld [vmem:[#allocation11 + $0x318] sm:$0xff]
    %v1553 = vld [vmem:[#allocation11 + $0x320] sm:$0xff]
    %v1554 = vld [vmem:[#allocation11 + $0x328] sm:$0xff]
    %v1555 = vld [vmem:[#allocation11 + $0x330] sm:$0xff]
    %v1556 = vld [vmem:[#allocation11 + $0x338] sm:$0xff]
    %v1557 = vld [vmem:[#allocation11 + $0x340] sm:$0xff]
    %v1558 = vld [vmem:[#allocation11 + $0x348] sm:$0xff]
    %v1559 = vld [vmem:[#allocation11 + $0x350] sm:$0xff]
    %v1560 = vld [vmem:[#allocation11 + $0x358] sm:$0xff]
    %v1561 = vld [vmem:[#allocation11 + $0x360] sm:$0xff]
    %v1562 = vld [vmem:[#allocation11 + $0x368] sm:$0xff]
    %v1563 = vld [vmem:[#allocation11 + $0x370] sm:$0xff]
    %v1564 = vld [vmem:[#allocation11 + $0x378] sm:$0xff]
    %v1565 = vld [vmem:[#allocation11 + $0x380] sm:$0xff]
    %v1566 = vld [vmem:[#allocation11 + $0x388] sm:$0xff]
    %v1567 = vld [vmem:[#allocation11 + $0x390] sm:$0xff]
    %v1568 = vld [vmem:[#allocation11 + $0x398] sm:$0xff]
    %v1569 = vld [vmem:[#allocation11 + $0x3a0] sm:$0xff]
    %v1570 = vld [vmem:[#allocation11 + $0x3a8] sm:$0xff]
    %v1571 = vld [vmem:[#allocation11 + $0x3b0] sm:$0xff]
    %v1572 = vld [vmem:[#allocation11 + $0x3b8] sm:$0xff]
    %v1573 = vld [vmem:[#allocation11 + $0x3c0] sm:$0xff]
    %v1574 = vld [vmem:[#allocation11 + $0x3c8] sm:$0xff]
    %v1575 = vld [vmem:[#allocation11 + $0x3d0] sm:$0xff]
    %v1576 = vld [vmem:[#allocation11 + $0x3d8] sm:$0xff]
    %v1577 = vld [vmem:[#allocation11 + $0x3e0] sm:$0xff]
    %v1578 = vld [vmem:[#allocation11 + $0x3e8] sm:$0xff]
    %v1579 = vld [vmem:[#allocation11 + $0x3f0] sm:$0xff]
    %v1580 = vld [vmem:[#allocation11 + $0x3f8] sm:$0xff]
    %1581 = vmatpush.msra.mxu0 %v1513
    %1582 = vmatpush.msra.mxu0 %v1509
    %1583 = vmatpush.msra.mxu0 %v1505
    %1584 = vmatpush.msra.mxu0 %v1501
    %1585 = vmatpush.msra.mxu0 %v1497
    %1586 = vmatpush.msra.mxu0 %v1493
    %1587 = vmatpush.msra.mxu0 %v1489
    %1588 = vmatpush.msra.mxu0 %v1485
    %1589 = vmatpush.msra.mxu0 %v1481
    %1590 = vmatpush.msra.mxu0 %v1477
    %1591 = vmatpush.msra.mxu0 %v1473
    %1592 = vmatpush.msra.mxu0 %v1469
    %1593 = vmatpush.msra.mxu0 %v1465
    %1594 = vmatpush.msra.mxu0 %v1461
    %1595 = vmatpush.msra.mxu0 %v1457
    %1596 = vmatpush.msra.mxu0 %v1453
    %1597 = vmatmul.f32.gmra.mxu0 %v1452
    %v1598 = vpop.f32.mrf.mxu0
    %v1599 = vadd.f32 %v89, %v1598
    %1600 = vdwg.mxu0
    %1601 = vmatpush.msra.mxu0 %v1577
    %1602 = vmatpush.msra.mxu0 %v1573
    %1603 = vmatpush.msra.mxu0 %v1569
    %1604 = vmatpush.msra.mxu0 %v1565
    %1605 = vmatpush.msra.mxu0 %v1561
    %1606 = vmatpush.msra.mxu0 %v1557
    %1607 = vmatpush.msra.mxu0 %v1553
    %1608 = vmatpush.msra.mxu0 %v1549
    %1609 = vmatpush.msra.mxu0 %v1545
    %1610 = vmatpush.msra.mxu0 %v1541
    %1611 = vmatpush.msra.mxu0 %v1537
    %1612 = vmatpush.msra.mxu0 %v1533
    %1613 = vmatpush.msra.mxu0 %v1529
    %1614 = vmatpush.msra.mxu0 %v1525
    %1615 = vmatpush.msra.mxu0 %v1521
    %1616 = vmatpush.msra.mxu0 %v1517
    %1617 = vmatmul.f32.gmra.mxu0 %v1234
    %v1618 = vpop.f32.mrf.mxu0
    %v1619 = vadd.f32 %v1599, %v1618
    %1620 = vdwg.mxu0
    %1621 = vmatpush.msra.mxu0 %v1514
    %1622 = vmatpush.msra.mxu0 %v1510
    %1623 = vmatpush.msra.mxu0 %v1506
    %1624 = vmatpush.msra.mxu0 %v1502
    %1625 = vmatpush.msra.mxu0 %v1498
    %1626 = vmatpush.msra.mxu0 %v1494
    %1627 = vmatpush.msra.mxu0 %v1490
    %1628 = vmatpush.msra.mxu0 %v1486
    %1629 = vmatpush.msra.mxu0 %v1482
    %1630 = vmatpush.msra.mxu0 %v1478
    %1631 = vmatpush.msra.mxu0 %v1474
    %1632 = vmatpush.msra.mxu0 %v1470
    %1633 = vmatpush.msra.mxu0 %v1466
    %1634 = vmatpush.msra.mxu0 %v1462
    %1635 = vmatpush.msra.mxu0 %v1458
    %1636 = vmatpush.msra.mxu0 %v1454
    %1637 = vmatmul.f32.gmra.mxu0 %v1452
    %v1638 = vpop.f32.mrf.mxu0
    %v1639 = vadd.f32 %v90, %v1638
    %1640 = vdwg.mxu0
    %1641 = vmatpush.msra.mxu0 %v1578
    %1642 = vmatpush.msra.mxu0 %v1574
    %1643 = vmatpush.msra.mxu0 %v1570
    %1644 = vmatpush.msra.mxu0 %v1566
    %1645 = vmatpush.msra.mxu0 %v1562
    %1646 = vmatpush.msra.mxu0 %v1558
    %1647 = vmatpush.msra.mxu0 %v1554
    %1648 = vmatpush.msra.mxu0 %v1550
    %1649 = vmatpush.msra.mxu0 %v1546
    %1650 = vmatpush.msra.mxu0 %v1542
    %1651 = vmatpush.msra.mxu0 %v1538
    %1652 = vmatpush.msra.mxu0 %v1534
    %1653 = vmatpush.msra.mxu0 %v1530
    %1654 = vmatpush.msra.mxu0 %v1526
    %1655 = vmatpush.msra.mxu0 %v1522
    %1656 = vmatpush.msra.mxu0 %v1518
    %1657 = vmatmul.f32.gmra.mxu0 %v1234
    %v1658 = vpop.f32.mrf.mxu0
    %v1659 = vadd.f32 %v1639, %v1658
    %1660 = vdwg.mxu0
    %1661 = vmatpush.msra.mxu0 %v1515
    %1662 = vmatpush.msra.mxu0 %v1511
    %1663 = vmatpush.msra.mxu0 %v1507
    %1664 = vmatpush.msra.mxu0 %v1503
    %1665 = vmatpush.msra.mxu0 %v1499
    %1666 = vmatpush.msra.mxu0 %v1495
    %1667 = vmatpush.msra.mxu0 %v1491
    %1668 = vmatpush.msra.mxu0 %v1487
    %1669 = vmatpush.msra.mxu0 %v1483
    %1670 = vmatpush.msra.mxu0 %v1479
    %1671 = vmatpush.msra.mxu0 %v1475
    %1672 = vmatpush.msra.mxu0 %v1471
    %1673 = vmatpush.msra.mxu0 %v1467
    %1674 = vmatpush.msra.mxu0 %v1463
    %1675 = vmatpush.msra.mxu0 %v1459
    %1676 = vmatpush.msra.mxu0 %v1455
    %1677 = vmatmul.f32.gmra.mxu0 %v1452
    %v1678 = vpop.f32.mrf.mxu0
    %v1679 = vadd.f32 %v91, %v1678
    %1680 = vdwg.mxu0
    %1681 = vmatpush.msra.mxu0 %v1579
    %1682 = vmatpush.msra.mxu0 %v1575
    %1683 = vmatpush.msra.mxu0 %v1571
    %1684 = vmatpush.msra.mxu0 %v1567
    %1685 = vmatpush.msra.mxu0 %v1563
    %1686 = vmatpush.msra.mxu0 %v1559
    %1687 = vmatpush.msra.mxu0 %v1555
    %1688 = vmatpush.msra.mxu0 %v1551
    %1689 = vmatpush.msra.mxu0 %v1547
    %1690 = vmatpush.msra.mxu0 %v1543
    %1691 = vmatpush.msra.mxu0 %v1539
    %1692 = vmatpush.msra.mxu0 %v1535
    %1693 = vmatpush.msra.mxu0 %v1531
    %1694 = vmatpush.msra.mxu0 %v1527
    %1695 = vmatpush.msra.mxu0 %v1523
    %1696 = vmatpush.msra.mxu0 %v1519
    %1697 = vmatmul.f32.gmra.mxu0 %v1234
    %v1698 = vpop.f32.mrf.mxu0
    %v1699 = vadd.f32 %v1679, %v1698
    %1700 = vdwg.mxu0
    %1701 = vmatpush.msra.mxu0 %v1516
    %1702 = vmatpush.msra.mxu0 %v1512
    %1703 = vmatpush.msra.mxu0 %v1508
    %1704 = vmatpush.msra.mxu0 %v1504
    %1705 = vmatpush.msra.mxu0 %v1500
    %1706 = vmatpush.msra.mxu0 %v1496
    %1707 = vmatpush.msra.mxu0 %v1492
    %1708 = vmatpush.msra.mxu0 %v1488
    %1709 = vmatpush.msra.mxu0 %v1484
    %1710 = vmatpush.msra.mxu0 %v1480
    %1711 = vmatpush.msra.mxu0 %v1476
    %1712 = vmatpush.msra.mxu0 %v1472
    %1713 = vmatpush.msra.mxu0 %v1468
    %1714 = vmatpush.msra.mxu0 %v1464
    %1715 = vmatpush.msra.mxu0 %v1460
    %1716 = vmatpush.msra.mxu0 %v1456
    %1717 = vmatmul.f32.gmra.mxu0 %v1452
    %v1718 = vpop.f32.mrf.mxu0
    %v1719 = vadd.f32 %v92, %v1718
    %1720 = vdwg.mxu0
    %1721 = vmatpush.msra.mxu0 %v1580
    %1722 = vmatpush.msra.mxu0 %v1576
    %1723 = vmatpush.msra.mxu0 %v1572
    %1724 = vmatpush.msra.mxu0 %v1568
    %1725 = vmatpush.msra.mxu0 %v1564
    %1726 = vmatpush.msra.mxu0 %v1560
    %1727 = vmatpush.msra.mxu0 %v1556
    %1728 = vmatpush.msra.mxu0 %v1552
    %1729 = vmatpush.msra.mxu0 %v1548
    %1730 = vmatpush.msra.mxu0 %v1544
    %1731 = vmatpush.msra.mxu0 %v1540
    %1732 = vmatpush.msra.mxu0 %v1536
    %1733 = vmatpush.msra.mxu0 %v1532
    %1734 = vmatpush.msra.mxu0 %v1528
    %1735 = vmatpush.msra.mxu0 %v1524
    %1736 = vmatpush.msra.mxu0 %v1520
    %1737 = vmatmul.f32.gmra.mxu0 %v1234
    %v1738 = vpop.f32.mrf.mxu0
    %v1739 = vadd.f32 %v1719, %v1738
    %1740 = vdwg.mxu0
    %v1741 = vxor.u32 %v1619, 2147483648
    %v1742 = vmul.f32 %v1741, 1.442695
    %v1743 = vpow.pop %v1742
    %v1744 = vadd.f32 %v1743, 1.0
    %v1745 = vrcp.pop %v1744
    %v1746 = vmul.f32 %v1744, %v1745
    %v1747 = vsub.f32 1.0, %v1746
    %v1748 = vmul.f32 %v1745, %v1747
    %v1749 = vadd.f32 %v1745, %v1748
    %vm1750 = vweird.f32 %v1744
    %vm1751 = vweird.f32 %v1745
    %vm1752 = vmor %vm1750, %vm1751
    %v1753 = vsel %vm1752, %v1745, %v1749
    %v1754 = vand.u32 2147483647, %v1744
    %vm1755 = vcmp.eq.f32.partialorder %v1754, 8.507059e+37
    %v1756 = vand.u32 %v1744, 2147483648
    %v1757 = vor.u32 1.1754944e-38, %v1756
    %v1758 = vsel %vm1755, %v1757, %v1753
    %v1759 = vmul.f32 1.0, %v1758
    %v1760 = vxor.u32 %v1659, 2147483648
    %v1761 = vmul.f32 %v1760, 1.442695
    %v1762 = vpow.pop %v1761
    %v1763 = vadd.f32 %v1762, 1.0
    %v1764 = vrcp.pop %v1763
    %v1765 = vmul.f32 %v1763, %v1764
    %v1766 = vsub.f32 1.0, %v1765
    %v1767 = vmul.f32 %v1764, %v1766
    %v1768 = vadd.f32 %v1764, %v1767
    %vm1769 = vweird.f32 %v1763
    %vm1770 = vweird.f32 %v1764
    %vm1771 = vmor %vm1769, %vm1770
    %v1772 = vsel %vm1771, %v1764, %v1768
    %v1773 = vand.u32 2147483647, %v1763
    %vm1774 = vcmp.eq.f32.partialorder %v1773, 8.507059e+37
    %v1775 = vand.u32 %v1763, 2147483648
    %v1776 = vor.u32 1.1754944e-38, %v1775
    %v1777 = vsel %vm1774, %v1776, %v1772
    %v1778 = vmul.f32 1.0, %v1777
    %v1779 = vtanh.pop %v1699
    %v1780 = vxor.u32 %v1739, 2147483648
    %v1781 = vmul.f32 %v1780, 1.442695
    %v1782 = vpow.pop %v1781
    %v1783 = vadd.f32 %v1782, 1.0
    %v1784 = vrcp.pop %v1783
    %v1785 = vmul.f32 %v1783, %v1784
    %v1786 = vsub.f32 1.0, %v1785
    %v1787 = vmul.f32 %v1784, %v1786
    %v1788 = vadd.f32 %v1784, %v1787
    %vm1789 = vweird.f32 %v1783
    %vm1790 = vweird.f32 %v1784
    %vm1791 = vmor %vm1789, %vm1790
    %v1792 = vsel %vm1791, %v1784, %v1788
    %v1793 = vand.u32 2147483647, %v1783
    %vm1794 = vcmp.eq.f32.partialorder %v1793, 8.507059e+37
    %v1795 = vand.u32 %v1783, 2147483648
    %v1796 = vor.u32 1.1754944e-38, %v1795
    %v1797 = vsel %vm1794, %v1796, %v1792
    %v1798 = vmul.f32 1.0, %v1797
    %v1799 = vmul.f32 %v1778, %v1232
    %v1800 = vmul.f32 %v1759, %v1779
    %v1801 = vadd.f32 %v1799, %v1800
    %v1802 = vtanh.pop %v1801
    %v1803 = vmul.f32 %v1798, %v1802
    %s1804 = scalar_lea.vmem [#allocation14], 16
    %1805 = vst [vmem:[%s1804] sm:$0xff] %v1803
    %s1806 = scalar_lea.vmem [#allocation6], 96
    %v1807 = vld [vmem:[%s1806] sm:$0xff]
    %v1808 = vld [vmem:[%s1806 + $0x8] sm:$0xff]
    %v1809 = vld [vmem:[%s1806 + $0x10] sm:$0xff]
    %v1810 = vld [vmem:[%s1806 + $0x18] sm:$0xff]
    %v1811 = vld [vmem:[#allocation9] sm:$0xff]
    %v1812 = vld [vmem:[#allocation9 + $0x8] sm:$0xff]
    %v1813 = vld [vmem:[#allocation9 + $0x10] sm:$0xff]
    %v1814 = vld [vmem:[#allocation9 + $0x18] sm:$0xff]
    %v1815 = vld [vmem:[#allocation9 + $0x20] sm:$0xff]
    %v1816 = vld [vmem:[#allocation9 + $0x28] sm:$0xff]
    %v1817 = vld [vmem:[#allocation9 + $0x30] sm:$0xff]
    %v1818 = vld [vmem:[#allocation9 + $0x38] sm:$0xff]
    %v1819 = vld [vmem:[#allocation9 + $0x40] sm:$0xff]
    %v1820 = vld [vmem:[#allocation9 + $0x48] sm:$0xff]
    %v1821 = vld [vmem:[#allocation9 + $0x50] sm:$0xff]
    %v1822 = vld [vmem:[#allocation9 + $0x58] sm:$0xff]
    %v1823 = vld [vmem:[#allocation9 + $0x60] sm:$0xff]
    %v1824 = vld [vmem:[#allocation9 + $0x68] sm:$0xff]
    %v1825 = vld [vmem:[#allocation9 + $0x70] sm:$0xff]
    %v1826 = vld [vmem:[#allocation9 + $0x78] sm:$0xff]
    %v1827 = vld [vmem:[#allocation9 + $0x80] sm:$0xff]
    %v1828 = vld [vmem:[#allocation9 + $0x88] sm:$0xff]
    %v1829 = vld [vmem:[#allocation9 + $0x90] sm:$0xff]
    %v1830 = vld [vmem:[#allocation9 + $0x98] sm:$0xff]
    %v1831 = vld [vmem:[#allocation9 + $0xa0] sm:$0xff]
    %v1832 = vld [vmem:[#allocation9 + $0xa8] sm:$0xff]
    %v1833 = vld [vmem:[#allocation9 + $0xb0] sm:$0xff]
    %v1834 = vld [vmem:[#allocation9 + $0xb8] sm:$0xff]
    %v1835 = vld [vmem:[#allocation9 + $0xc0] sm:$0xff]
    %v1836 = vld [vmem:[#allocation9 + $0xc8] sm:$0xff]
    %v1837 = vld [vmem:[#allocation9 + $0xd0] sm:$0xff]
    %v1838 = vld [vmem:[#allocation9 + $0xd8] sm:$0xff]
    %v1839 = vld [vmem:[#allocation9 + $0xe0] sm:$0xff]
    %v1840 = vld [vmem:[#allocation9 + $0xe8] sm:$0xff]
    %v1841 = vld [vmem:[#allocation9 + $0xf0] sm:$0xff]
    %v1842 = vld [vmem:[#allocation9 + $0xf8] sm:$0xff]
    %v1843 = vld [vmem:[#allocation9 + $0x100] sm:$0xff]
    %v1844 = vld [vmem:[#allocation9 + $0x108] sm:$0xff]
    %v1845 = vld [vmem:[#allocation9 + $0x110] sm:$0xff]
    %v1846 = vld [vmem:[#allocation9 + $0x118] sm:$0xff]
    %v1847 = vld [vmem:[#allocation9 + $0x120] sm:$0xff]
    %v1848 = vld [vmem:[#allocation9 + $0x128] sm:$0xff]
    %v1849 = vld [vmem:[#allocation9 + $0x130] sm:$0xff]
    %v1850 = vld [vmem:[#allocation9 + $0x138] sm:$0xff]
    %v1851 = vld [vmem:[#allocation9 + $0x140] sm:$0xff]
    %v1852 = vld [vmem:[#allocation9 + $0x148] sm:$0xff]
    %v1853 = vld [vmem:[#allocation9 + $0x150] sm:$0xff]
    %v1854 = vld [vmem:[#allocation9 + $0x158] sm:$0xff]
    %v1855 = vld [vmem:[#allocation9 + $0x160] sm:$0xff]
    %v1856 = vld [vmem:[#allocation9 + $0x168] sm:$0xff]
    %v1857 = vld [vmem:[#allocation9 + $0x170] sm:$0xff]
    %v1858 = vld [vmem:[#allocation9 + $0x178] sm:$0xff]
    %v1859 = vld [vmem:[#allocation9 + $0x180] sm:$0xff]
    %v1860 = vld [vmem:[#allocation9 + $0x188] sm:$0xff]
    %v1861 = vld [vmem:[#allocation9 + $0x190] sm:$0xff]
    %v1862 = vld [vmem:[#allocation9 + $0x198] sm:$0xff]
    %v1863 = vld [vmem:[#allocation9 + $0x1a0] sm:$0xff]
    %v1864 = vld [vmem:[#allocation9 + $0x1a8] sm:$0xff]
    %v1865 = vld [vmem:[#allocation9 + $0x1b0] sm:$0xff]
    %v1866 = vld [vmem:[#allocation9 + $0x1b8] sm:$0xff]
    %v1867 = vld [vmem:[#allocation9 + $0x1c0] sm:$0xff]
    %v1868 = vld [vmem:[#allocation9 + $0x1c8] sm:$0xff]
    %v1869 = vld [vmem:[#allocation9 + $0x1d0] sm:$0xff]
    %v1870 = vld [vmem:[#allocation9 + $0x1d8] sm:$0xff]
    %v1871 = vld [vmem:[#allocation9 + $0x1e0] sm:$0xff]
    %v1872 = vld [vmem:[#allocation9 + $0x1e8] sm:$0xff]
    %v1873 = vld [vmem:[#allocation9 + $0x1f0] sm:$0xff]
    %v1874 = vld [vmem:[#allocation9 + $0x1f8] sm:$0xff]
    %1875 = vmatpush.msra.mxu0 %v1871
    %1876 = vmatpush.msra.mxu0 %v1867
    %1877 = vmatpush.msra.mxu0 %v1863
    %1878 = vmatpush.msra.mxu0 %v1859
    %1879 = vmatpush.msra.mxu0 %v1855
    %1880 = vmatpush.msra.mxu0 %v1851
    %1881 = vmatpush.msra.mxu0 %v1847
    %1882 = vmatpush.msra.mxu0 %v1843
    %1883 = vmatpush.msra.mxu0 %v1839
    %1884 = vmatpush.msra.mxu0 %v1835
    %1885 = vmatpush.msra.mxu0 %v1831
    %1886 = vmatpush.msra.mxu0 %v1827
    %1887 = vmatpush.msra.mxu0 %v1823
    %1888 = vmatpush.msra.mxu0 %v1819
    %1889 = vmatpush.msra.mxu0 %v1815
    %1890 = vmatpush.msra.mxu0 %v1811
    %1891 = vmatmul.f32.gmra.mxu0 %v1452
    %v1892 = vpop.f32.mrf.mxu0
    %v1893 = vadd.f32 0.0, %v1892
    %1894 = vdwg.mxu0
    %1895 = vmatpush.msra.mxu0 %v1872
    %1896 = vmatpush.msra.mxu0 %v1868
    %1897 = vmatpush.msra.mxu0 %v1864
    %1898 = vmatpush.msra.mxu0 %v1860
    %1899 = vmatpush.msra.mxu0 %v1856
    %1900 = vmatpush.msra.mxu0 %v1852
    %1901 = vmatpush.msra.mxu0 %v1848
    %1902 = vmatpush.msra.mxu0 %v1844
    %1903 = vmatpush.msra.mxu0 %v1840
    %1904 = vmatpush.msra.mxu0 %v1836
    %1905 = vmatpush.msra.mxu0 %v1832
    %1906 = vmatpush.msra.mxu0 %v1828
    %1907 = vmatpush.msra.mxu0 %v1824
    %1908 = vmatpush.msra.mxu0 %v1820
    %1909 = vmatpush.msra.mxu0 %v1816
    %1910 = vmatpush.msra.mxu0 %v1812
    %1911 = vmatmul.f32.gmra.mxu0 %v1452
    %v1912 = vpop.f32.mrf.mxu0
    %v1913 = vadd.f32 0.0, %v1912
    %1914 = vdwg.mxu0
    %1915 = vmatpush.msra.mxu0 %v1873
    %1916 = vmatpush.msra.mxu0 %v1869
    %1917 = vmatpush.msra.mxu0 %v1865
    %1918 = vmatpush.msra.mxu0 %v1861
    %1919 = vmatpush.msra.mxu0 %v1857
    %1920 = vmatpush.msra.mxu0 %v1853
    %1921 = vmatpush.msra.mxu0 %v1849
    %1922 = vmatpush.msra.mxu0 %v1845
    %1923 = vmatpush.msra.mxu0 %v1841
    %1924 = vmatpush.msra.mxu0 %v1837
    %1925 = vmatpush.msra.mxu0 %v1833
    %1926 = vmatpush.msra.mxu0 %v1829
    %1927 = vmatpush.msra.mxu0 %v1825
    %1928 = vmatpush.msra.mxu0 %v1821
    %1929 = vmatpush.msra.mxu0 %v1817
    %1930 = vmatpush.msra.mxu0 %v1813
    %1931 = vmatmul.f32.gmra.mxu0 %v1452
    %v1932 = vpop.f32.mrf.mxu0
    %v1933 = vadd.f32 0.0, %v1932
    %1934 = vdwg.mxu0
    %1935 = vmatpush.msra.mxu0 %v1874
    %1936 = vmatpush.msra.mxu0 %v1870
    %1937 = vmatpush.msra.mxu0 %v1866
    %1938 = vmatpush.msra.mxu0 %v1862
    %1939 = vmatpush.msra.mxu0 %v1858
    %1940 = vmatpush.msra.mxu0 %v1854
    %1941 = vmatpush.msra.mxu0 %v1850
    %1942 = vmatpush.msra.mxu0 %v1846
    %1943 = vmatpush.msra.mxu0 %v1842
    %1944 = vmatpush.msra.mxu0 %v1838
    %1945 = vmatpush.msra.mxu0 %v1834
    %1946 = vmatpush.msra.mxu0 %v1830
    %1947 = vmatpush.msra.mxu0 %v1826
    %1948 = vmatpush.msra.mxu0 %v1822
    %1949 = vmatpush.msra.mxu0 %v1818
    %1950 = vmatpush.msra.mxu0 %v1814
    %1951 = vmatmul.f32.gmra.mxu0 %v1452
    %v1952 = vpop.f32.mrf.mxu0
    %v1953 = vadd.f32 0.0, %v1952
    %1954 = vdwg.mxu0
    %v1955 = vadd.f32 %v1807, %v1893
    %v1956 = vadd.f32 %v1808, %v1913
    %v1957 = vadd.f32 %v1809, %v1933
    %v1958 = vadd.f32 %v1810, %v1953
    %v1959 = vxor.u32 %v1955, 2147483648
    %v1960 = vmul.f32 %v1959, 1.442695
    %v1961 = vpow.pop %v1960
    %v1962 = vadd.f32 %v1961, 1.0
    %v1963 = vrcp.pop %v1962
    %v1964 = vmul.f32 %v1962, %v1963
    %v1965 = vsub.f32 1.0, %v1964
    %v1966 = vmul.f32 %v1963, %v1965
    %v1967 = vadd.f32 %v1963, %v1966
    %vm1968 = vweird.f32 %v1962
    %vm1969 = vweird.f32 %v1963
    %vm1970 = vmor %vm1968, %vm1969
    %v1971 = vsel %vm1970, %v1963, %v1967
    %v1972 = vand.u32 2147483647, %v1962
    %vm1973 = vcmp.eq.f32.partialorder %v1972, 8.507059e+37
    %v1974 = vand.u32 %v1962, 2147483648
    %v1975 = vor.u32 1.1754944e-38, %v1974
    %v1976 = vsel %vm1973, %v1975, %v1971
    %v1977 = vmul.f32 1.0, %v1976
    %v1978 = vxor.u32 %v1956, 2147483648
    %v1979 = vmul.f32 %v1978, 1.442695
    %v1980 = vpow.pop %v1979
    %v1981 = vadd.f32 %v1980, 1.0
    %v1982 = vrcp.pop %v1981
    %v1983 = vmul.f32 %v1981, %v1982
    %v1984 = vsub.f32 1.0, %v1983
    %v1985 = vmul.f32 %v1982, %v1984
    %v1986 = vadd.f32 %v1982, %v1985
    %vm1987 = vweird.f32 %v1981
    %vm1988 = vweird.f32 %v1982
    %vm1989 = vmor %vm1987, %vm1988
    %v1990 = vsel %vm1989, %v1982, %v1986
    %v1991 = vand.u32 2147483647, %v1981
    %vm1992 = vcmp.eq.f32.partialorder %v1991, 8.507059e+37
    %v1993 = vand.u32 %v1981, 2147483648
    %v1994 = vor.u32 1.1754944e-38, %v1993
    %v1995 = vsel %vm1992, %v1994, %v1990
    %v1996 = vmul.f32 1.0, %v1995
    %v1997 = vtanh.pop %v1957
    %v1998 = vxor.u32 %v1958, 2147483648
    %v1999 = vmul.f32 %v1998, 1.442695
    %v2000 = vpow.pop %v1999
    %v2001 = vadd.f32 %v2000, 1.0
    %v2002 = vrcp.pop %v2001
    %v2003 = vmul.f32 %v2001, %v2002
    %v2004 = vsub.f32 1.0, %v2003
    %v2005 = vmul.f32 %v2002, %v2004
    %v2006 = vadd.f32 %v2002, %v2005
    %vm2007 = vweird.f32 %v2001
    %vm2008 = vweird.f32 %v2002
    %vm2009 = vmor %vm2007, %vm2008
    %v2010 = vsel %vm2009, %v2002, %v2006
    %v2011 = vand.u32 2147483647, %v2001
    %vm2012 = vcmp.eq.f32.partialorder %v2011, 8.507059e+37
    %v2013 = vand.u32 %v2001, 2147483648
    %v2014 = vor.u32 1.1754944e-38, %v2013
    %v2015 = vsel %vm2012, %v2014, %v2010
    %v2016 = vmul.f32 1.0, %v2015
    %v2017 = vmul.f32 %v1996, %v1450
    %v2018 = vmul.f32 %v1977, %v1997
    %v2019 = vadd.f32 %v2017, %v2018
    %v2020 = vtanh.pop %v2019
    %v2021 = vmul.f32 %v2016, %v2020
    %v2022 = vld [vmem:[#allocation11] sm:$0xff]
    %v2023 = vld [vmem:[#allocation11 + $0x8] sm:$0xff]
    %v2024 = vld [vmem:[#allocation11 + $0x10] sm:$0xff]
    %v2025 = vld [vmem:[#allocation11 + $0x18] sm:$0xff]
    %v2026 = vld [vmem:[#allocation11 + $0x20] sm:$0xff]
    %v2027 = vld [vmem:[#allocation11 + $0x28] sm:$0xff]
    %v2028 = vld [vmem:[#allocation11 + $0x30] sm:$0xff]
    %v2029 = vld [vmem:[#allocation11 + $0x38] sm:$0xff]
    %v2030 = vld [vmem:[#allocation11 + $0x40] sm:$0xff]
    %v2031 = vld [vmem:[#allocation11 + $0x48] sm:$0xff]
    %v2032 = vld [vmem:[#allocation11 + $0x50] sm:$0xff]
    %v2033 = vld [vmem:[#allocation11 + $0x58] sm:$0xff]
    %v2034 = vld [vmem:[#allocation11 + $0x60] sm:$0xff]
    %v2035 = vld [vmem:[#allocation11 + $0x68] sm:$0xff]
    %v2036 = vld [vmem:[#allocation11 + $0x70] sm:$0xff]
    %v2037 = vld [vmem:[#allocation11 + $0x78] sm:$0xff]
    %v2038 = vld [vmem:[#allocation11 + $0x80] sm:$0xff]
    %v2039 = vld [vmem:[#allocation11 + $0x88] sm:$0xff]
    %v2040 = vld [vmem:[#allocation11 + $0x90] sm:$0xff]
    %v2041 = vld [vmem:[#allocation11 + $0x98] sm:$0xff]
    %v2042 = vld [vmem:[#allocation11 + $0xa0] sm:$0xff]
    %v2043 = vld [vmem:[#allocation11 + $0xa8] sm:$0xff]
    %v2044 = vld [vmem:[#allocation11 + $0xb0] sm:$0xff]
    %v2045 = vld [vmem:[#allocation11 + $0xb8] sm:$0xff]
    %v2046 = vld [vmem:[#allocation11 + $0xc0] sm:$0xff]
    %v2047 = vld [vmem:[#allocation11 + $0xc8] sm:$0xff]
    %v2048 = vld [vmem:[#allocation11 + $0xd0] sm:$0xff]
    %v2049 = vld [vmem:[#allocation11 + $0xd8] sm:$0xff]
    %v2050 = vld [vmem:[#allocation11 + $0xe0] sm:$0xff]
    %v2051 = vld [vmem:[#allocation11 + $0xe8] sm:$0xff]
    %v2052 = vld [vmem:[#allocation11 + $0xf0] sm:$0xff]
    %v2053 = vld [vmem:[#allocation11 + $0xf8] sm:$0xff]
    %v2054 = vld [vmem:[#allocation11 + $0x100] sm:$0xff]
    %v2055 = vld [vmem:[#allocation11 + $0x108] sm:$0xff]
    %v2056 = vld [vmem:[#allocation11 + $0x110] sm:$0xff]
    %v2057 = vld [vmem:[#allocation11 + $0x118] sm:$0xff]
    %v2058 = vld [vmem:[#allocation11 + $0x120] sm:$0xff]
    %v2059 = vld [vmem:[#allocation11 + $0x128] sm:$0xff]
    %v2060 = vld [vmem:[#allocation11 + $0x130] sm:$0xff]
    %v2061 = vld [vmem:[#allocation11 + $0x138] sm:$0xff]
    %v2062 = vld [vmem:[#allocation11 + $0x140] sm:$0xff]
    %v2063 = vld [vmem:[#allocation11 + $0x148] sm:$0xff]
    %v2064 = vld [vmem:[#allocation11 + $0x150] sm:$0xff]
    %v2065 = vld [vmem:[#allocation11 + $0x158] sm:$0xff]
    %v2066 = vld [vmem:[#allocation11 + $0x160] sm:$0xff]
    %v2067 = vld [vmem:[#allocation11 + $0x168] sm:$0xff]
    %v2068 = vld [vmem:[#allocation11 + $0x170] sm:$0xff]
    %v2069 = vld [vmem:[#allocation11 + $0x178] sm:$0xff]
    %v2070 = vld [vmem:[#allocation11 + $0x180] sm:$0xff]
    %v2071 = vld [vmem:[#allocation11 + $0x188] sm:$0xff]
    %v2072 = vld [vmem:[#allocation11 + $0x190] sm:$0xff]
    %v2073 = vld [vmem:[#allocation11 + $0x198] sm:$0xff]
    %v2074 = vld [vmem:[#allocation11 + $0x1a0] sm:$0xff]
    %v2075 = vld [vmem:[#allocation11 + $0x1a8] sm:$0xff]
    %v2076 = vld [vmem:[#allocation11 + $0x1b0] sm:$0xff]
    %v2077 = vld [vmem:[#allocation11 + $0x1b8] sm:$0xff]
    %v2078 = vld [vmem:[#allocation11 + $0x1c0] sm:$0xff]
    %v2079 = vld [vmem:[#allocation11 + $0x1c8] sm:$0xff]
    %v2080 = vld [vmem:[#allocation11 + $0x1d0] sm:$0xff]
    %v2081 = vld [vmem:[#allocation11 + $0x1d8] sm:$0xff]
    %v2082 = vld [vmem:[#allocation11 + $0x1e0] sm:$0xff]
    %v2083 = vld [vmem:[#allocation11 + $0x1e8] sm:$0xff]
    %v2084 = vld [vmem:[#allocation11 + $0x1f0] sm:$0xff]
    %v2085 = vld [vmem:[#allocation11 + $0x1f8] sm:$0xff]
    %v2086 = vld [vmem:[#allocation11 + $0x200] sm:$0xff]
    %v2087 = vld [vmem:[#allocation11 + $0x208] sm:$0xff]
    %v2088 = vld [vmem:[#allocation11 + $0x210] sm:$0xff]
    %v2089 = vld [vmem:[#allocation11 + $0x218] sm:$0xff]
    %v2090 = vld [vmem:[#allocation11 + $0x220] sm:$0xff]
    %v2091 = vld [vmem:[#allocation11 + $0x228] sm:$0xff]
    %v2092 = vld [vmem:[#allocation11 + $0x230] sm:$0xff]
    %v2093 = vld [vmem:[#allocation11 + $0x238] sm:$0xff]
    %v2094 = vld [vmem:[#allocation11 + $0x240] sm:$0xff]
    %v2095 = vld [vmem:[#allocation11 + $0x248] sm:$0xff]
    %v2096 = vld [vmem:[#allocation11 + $0x250] sm:$0xff]
    %v2097 = vld [vmem:[#allocation11 + $0x258] sm:$0xff]
    %v2098 = vld [vmem:[#allocation11 + $0x260] sm:$0xff]
    %v2099 = vld [vmem:[#allocation11 + $0x268] sm:$0xff]
    %v2100 = vld [vmem:[#allocation11 + $0x270] sm:$0xff]
    %v2101 = vld [vmem:[#allocation11 + $0x278] sm:$0xff]
    %v2102 = vld [vmem:[#allocation11 + $0x280] sm:$0xff]
    %v2103 = vld [vmem:[#allocation11 + $0x288] sm:$0xff]
    %v2104 = vld [vmem:[#allocation11 + $0x290] sm:$0xff]
    %v2105 = vld [vmem:[#allocation11 + $0x298] sm:$0xff]
    %v2106 = vld [vmem:[#allocation11 + $0x2a0] sm:$0xff]
    %v2107 = vld [vmem:[#allocation11 + $0x2a8] sm:$0xff]
    %v2108 = vld [vmem:[#allocation11 + $0x2b0] sm:$0xff]
    %v2109 = vld [vmem:[#allocation11 + $0x2b8] sm:$0xff]
    %v2110 = vld [vmem:[#allocation11 + $0x2c0] sm:$0xff]
    %v2111 = vld [vmem:[#allocation11 + $0x2c8] sm:$0xff]
    %v2112 = vld [vmem:[#allocation11 + $0x2d0] sm:$0xff]
    %v2113 = vld [vmem:[#allocation11 + $0x2d8] sm:$0xff]
    %v2114 = vld [vmem:[#allocation11 + $0x2e0] sm:$0xff]
    %v2115 = vld [vmem:[#allocation11 + $0x2e8] sm:$0xff]
    %v2116 = vld [vmem:[#allocation11 + $0x2f0] sm:$0xff]
    %v2117 = vld [vmem:[#allocation11 + $0x2f8] sm:$0xff]
    %v2118 = vld [vmem:[#allocation11 + $0x300] sm:$0xff]
    %v2119 = vld [vmem:[#allocation11 + $0x308] sm:$0xff]
    %v2120 = vld [vmem:[#allocation11 + $0x310] sm:$0xff]
    %v2121 = vld [vmem:[#allocation11 + $0x318] sm:$0xff]
    %v2122 = vld [vmem:[#allocation11 + $0x320] sm:$0xff]
    %v2123 = vld [vmem:[#allocation11 + $0x328] sm:$0xff]
    %v2124 = vld [vmem:[#allocation11 + $0x330] sm:$0xff]
    %v2125 = vld [vmem:[#allocation11 + $0x338] sm:$0xff]
    %v2126 = vld [vmem:[#allocation11 + $0x340] sm:$0xff]
    %v2127 = vld [vmem:[#allocation11 + $0x348] sm:$0xff]
    %v2128 = vld [vmem:[#allocation11 + $0x350] sm:$0xff]
    %v2129 = vld [vmem:[#allocation11 + $0x358] sm:$0xff]
    %v2130 = vld [vmem:[#allocation11 + $0x360] sm:$0xff]
    %v2131 = vld [vmem:[#allocation11 + $0x368] sm:$0xff]
    %v2132 = vld [vmem:[#allocation11 + $0x370] sm:$0xff]
    %v2133 = vld [vmem:[#allocation11 + $0x378] sm:$0xff]
    %v2134 = vld [vmem:[#allocation11 + $0x380] sm:$0xff]
    %v2135 = vld [vmem:[#allocation11 + $0x388] sm:$0xff]
    %v2136 = vld [vmem:[#allocation11 + $0x390] sm:$0xff]
    %v2137 = vld [vmem:[#allocation11 + $0x398] sm:$0xff]
    %v2138 = vld [vmem:[#allocation11 + $0x3a0] sm:$0xff]
    %v2139 = vld [vmem:[#allocation11 + $0x3a8] sm:$0xff]
    %v2140 = vld [vmem:[#allocation11 + $0x3b0] sm:$0xff]
    %v2141 = vld [vmem:[#allocation11 + $0x3b8] sm:$0xff]
    %v2142 = vld [vmem:[#allocation11 + $0x3c0] sm:$0xff]
    %v2143 = vld [vmem:[#allocation11 + $0x3c8] sm:$0xff]
    %v2144 = vld [vmem:[#allocation11 + $0x3d0] sm:$0xff]
    %v2145 = vld [vmem:[#allocation11 + $0x3d8] sm:$0xff]
    %v2146 = vld [vmem:[#allocation11 + $0x3e0] sm:$0xff]
    %v2147 = vld [vmem:[#allocation11 + $0x3e8] sm:$0xff]
    %v2148 = vld [vmem:[#allocation11 + $0x3f0] sm:$0xff]
    %v2149 = vld [vmem:[#allocation11 + $0x3f8] sm:$0xff]
    %2150 = vmatpush.msra.mxu0 %v2082
    %2151 = vmatpush.msra.mxu0 %v2078
    %2152 = vmatpush.msra.mxu0 %v2074
    %2153 = vmatpush.msra.mxu0 %v2070
    %2154 = vmatpush.msra.mxu0 %v2066
    %2155 = vmatpush.msra.mxu0 %v2062
    %2156 = vmatpush.msra.mxu0 %v2058
    %2157 = vmatpush.msra.mxu0 %v2054
    %2158 = vmatpush.msra.mxu0 %v2050
    %2159 = vmatpush.msra.mxu0 %v2046
    %2160 = vmatpush.msra.mxu0 %v2042
    %2161 = vmatpush.msra.mxu0 %v2038
    %2162 = vmatpush.msra.mxu0 %v2034
    %2163 = vmatpush.msra.mxu0 %v2030
    %2164 = vmatpush.msra.mxu0 %v2026
    %2165 = vmatpush.msra.mxu0 %v2022
    %2166 = vmatmul.f32.gmra.mxu0 %v2021
    %v2167 = vpop.f32.mrf.mxu0
    %v2168 = vadd.f32 %v89, %v2167
    %2169 = vdwg.mxu0
    %2170 = vmatpush.msra.mxu0 %v2146
    %2171 = vmatpush.msra.mxu0 %v2142
    %2172 = vmatpush.msra.mxu0 %v2138
    %2173 = vmatpush.msra.mxu0 %v2134
    %2174 = vmatpush.msra.mxu0 %v2130
    %2175 = vmatpush.msra.mxu0 %v2126
    %2176 = vmatpush.msra.mxu0 %v2122
    %2177 = vmatpush.msra.mxu0 %v2118
    %2178 = vmatpush.msra.mxu0 %v2114
    %2179 = vmatpush.msra.mxu0 %v2110
    %2180 = vmatpush.msra.mxu0 %v2106
    %2181 = vmatpush.msra.mxu0 %v2102
    %2182 = vmatpush.msra.mxu0 %v2098
    %2183 = vmatpush.msra.mxu0 %v2094
    %2184 = vmatpush.msra.mxu0 %v2090
    %2185 = vmatpush.msra.mxu0 %v2086
    %2186 = vmatmul.f32.gmra.mxu0 %v1803
    %v2187 = vpop.f32.mrf.mxu0
    %v2188 = vadd.f32 %v2168, %v2187
    %2189 = vdwg.mxu0
    %2190 = vmatpush.msra.mxu0 %v2083
    %2191 = vmatpush.msra.mxu0 %v2079
    %2192 = vmatpush.msra.mxu0 %v2075
    %2193 = vmatpush.msra.mxu0 %v2071
    %2194 = vmatpush.msra.mxu0 %v2067
    %2195 = vmatpush.msra.mxu0 %v2063
    %2196 = vmatpush.msra.mxu0 %v2059
    %2197 = vmatpush.msra.mxu0 %v2055
    %2198 = vmatpush.msra.mxu0 %v2051
    %2199 = vmatpush.msra.mxu0 %v2047
    %2200 = vmatpush.msra.mxu0 %v2043
    %2201 = vmatpush.msra.mxu0 %v2039
    %2202 = vmatpush.msra.mxu0 %v2035
    %2203 = vmatpush.msra.mxu0 %v2031
    %2204 = vmatpush.msra.mxu0 %v2027
    %2205 = vmatpush.msra.mxu0 %v2023
    %2206 = vmatmul.f32.gmra.mxu0 %v2021
    %v2207 = vpop.f32.mrf.mxu0
    %v2208 = vadd.f32 %v90, %v2207
    %2209 = vdwg.mxu0
    %2210 = vmatpush.msra.mxu0 %v2147
    %2211 = vmatpush.msra.mxu0 %v2143
    %2212 = vmatpush.msra.mxu0 %v2139
    %2213 = vmatpush.msra.mxu0 %v2135
    %2214 = vmatpush.msra.mxu0 %v2131
    %2215 = vmatpush.msra.mxu0 %v2127
    %2216 = vmatpush.msra.mxu0 %v2123
    %2217 = vmatpush.msra.mxu0 %v2119
    %2218 = vmatpush.msra.mxu0 %v2115
    %2219 = vmatpush.msra.mxu0 %v2111
    %2220 = vmatpush.msra.mxu0 %v2107
    %2221 = vmatpush.msra.mxu0 %v2103
    %2222 = vmatpush.msra.mxu0 %v2099
    %2223 = vmatpush.msra.mxu0 %v2095
    %2224 = vmatpush.msra.mxu0 %v2091
    %2225 = vmatpush.msra.mxu0 %v2087
    %2226 = vmatmul.f32.gmra.mxu0 %v1803
    %v2227 = vpop.f32.mrf.mxu0
    %v2228 = vadd.f32 %v2208, %v2227
    %2229 = vdwg.mxu0
    %2230 = vmatpush.msra.mxu0 %v2084
    %2231 = vmatpush.msra.mxu0 %v2080
    %2232 = vmatpush.msra.mxu0 %v2076
    %2233 = vmatpush.msra.mxu0 %v2072
    %2234 = vmatpush.msra.mxu0 %v2068
    %2235 = vmatpush.msra.mxu0 %v2064
    %2236 = vmatpush.msra.mxu0 %v2060
    %2237 = vmatpush.msra.mxu0 %v2056
    %2238 = vmatpush.msra.mxu0 %v2052
    %2239 = vmatpush.msra.mxu0 %v2048
    %2240 = vmatpush.msra.mxu0 %v2044
    %2241 = vmatpush.msra.mxu0 %v2040
    %2242 = vmatpush.msra.mxu0 %v2036
    %2243 = vmatpush.msra.mxu0 %v2032
    %2244 = vmatpush.msra.mxu0 %v2028
    %2245 = vmatpush.msra.mxu0 %v2024
    %2246 = vmatmul.f32.gmra.mxu0 %v2021
    %v2247 = vpop.f32.mrf.mxu0
    %v2248 = vadd.f32 %v91, %v2247
    %2249 = vdwg.mxu0
    %2250 = vmatpush.msra.mxu0 %v2148
    %2251 = vmatpush.msra.mxu0 %v2144
    %2252 = vmatpush.msra.mxu0 %v2140
    %2253 = vmatpush.msra.mxu0 %v2136
    %2254 = vmatpush.msra.mxu0 %v2132
    %2255 = vmatpush.msra.mxu0 %v2128
    %2256 = vmatpush.msra.mxu0 %v2124
    %2257 = vmatpush.msra.mxu0 %v2120
    %2258 = vmatpush.msra.mxu0 %v2116
    %2259 = vmatpush.msra.mxu0 %v2112
    %2260 = vmatpush.msra.mxu0 %v2108
    %2261 = vmatpush.msra.mxu0 %v2104
    %2262 = vmatpush.msra.mxu0 %v2100
    %2263 = vmatpush.msra.mxu0 %v2096
    %2264 = vmatpush.msra.mxu0 %v2092
    %2265 = vmatpush.msra.mxu0 %v2088
    %2266 = vmatmul.f32.gmra.mxu0 %v1803
    %v2267 = vpop.f32.mrf.mxu0
    %v2268 = vadd.f32 %v2248, %v2267
    %2269 = vdwg.mxu0
    %2270 = vmatpush.msra.mxu0 %v2085
    %2271 = vmatpush.msra.mxu0 %v2081
    %2272 = vmatpush.msra.mxu0 %v2077
    %2273 = vmatpush.msra.mxu0 %v2073
    %2274 = vmatpush.msra.mxu0 %v2069
    %2275 = vmatpush.msra.mxu0 %v2065
    %2276 = vmatpush.msra.mxu0 %v2061
    %2277 = vmatpush.msra.mxu0 %v2057
    %2278 = vmatpush.msra.mxu0 %v2053
    %2279 = vmatpush.msra.mxu0 %v2049
    %2280 = vmatpush.msra.mxu0 %v2045
    %2281 = vmatpush.msra.mxu0 %v2041
    %2282 = vmatpush.msra.mxu0 %v2037
    %2283 = vmatpush.msra.mxu0 %v2033
    %2284 = vmatpush.msra.mxu0 %v2029
    %2285 = vmatpush.msra.mxu0 %v2025
    %2286 = vmatmul.f32.gmra.mxu0 %v2021
    %v2287 = vpop.f32.mrf.mxu0
    %v2288 = vadd.f32 %v92, %v2287
    %2289 = vdwg.mxu0
    %2290 = vmatpush.msra.mxu0 %v2149
    %2291 = vmatpush.msra.mxu0 %v2145
    %2292 = vmatpush.msra.mxu0 %v2141
    %2293 = vmatpush.msra.mxu0 %v2137
    %2294 = vmatpush.msra.mxu0 %v2133
    %2295 = vmatpush.msra.mxu0 %v2129
    %2296 = vmatpush.msra.mxu0 %v2125
    %2297 = vmatpush.msra.mxu0 %v2121
    %2298 = vmatpush.msra.mxu0 %v2117
    %2299 = vmatpush.msra.mxu0 %v2113
    %2300 = vmatpush.msra.mxu0 %v2109
    %2301 = vmatpush.msra.mxu0 %v2105
    %2302 = vmatpush.msra.mxu0 %v2101
    %2303 = vmatpush.msra.mxu0 %v2097
    %2304 = vmatpush.msra.mxu0 %v2093
    %2305 = vmatpush.msra.mxu0 %v2089
    %2306 = vmatmul.f32.gmra.mxu0 %v1803
    %v2307 = vpop.f32.mrf.mxu0
    %v2308 = vadd.f32 %v2288, %v2307
    %2309 = vdwg.mxu0
    %v2310 = vxor.u32 %v2188, 2147483648
    %v2311 = vmul.f32 %v2310, 1.442695
    %v2312 = vpow.pop %v2311
    %v2313 = vadd.f32 %v2312, 1.0
    %v2314 = vrcp.pop %v2313
    %v2315 = vmul.f32 %v2313, %v2314
    %v2316 = vsub.f32 1.0, %v2315
    %v2317 = vmul.f32 %v2314, %v2316
    %v2318 = vadd.f32 %v2314, %v2317
    %vm2319 = vweird.f32 %v2313
    %vm2320 = vweird.f32 %v2314
    %vm2321 = vmor %vm2319, %vm2320
    %v2322 = vsel %vm2321, %v2314, %v2318
    %v2323 = vand.u32 2147483647, %v2313
    %vm2324 = vcmp.eq.f32.partialorder %v2323, 8.507059e+37
    %v2325 = vand.u32 %v2313, 2147483648
    %v2326 = vor.u32 1.1754944e-38, %v2325
    %v2327 = vsel %vm2324, %v2326, %v2322
    %v2328 = vmul.f32 1.0, %v2327
    %v2329 = vxor.u32 %v2228, 2147483648
    %v2330 = vmul.f32 %v2329, 1.442695
    %v2331 = vpow.pop %v2330
    %v2332 = vadd.f32 %v2331, 1.0
    %v2333 = vrcp.pop %v2332
    %v2334 = vmul.f32 %v2332, %v2333
    %v2335 = vsub.f32 1.0, %v2334
    %v2336 = vmul.f32 %v2333, %v2335
    %v2337 = vadd.f32 %v2333, %v2336
    %vm2338 = vweird.f32 %v2332
    %vm2339 = vweird.f32 %v2333
    %vm2340 = vmor %vm2338, %vm2339
    %v2341 = vsel %vm2340, %v2333, %v2337
    %v2342 = vand.u32 2147483647, %v2332
    %vm2343 = vcmp.eq.f32.partialorder %v2342, 8.507059e+37
    %v2344 = vand.u32 %v2332, 2147483648
    %v2345 = vor.u32 1.1754944e-38, %v2344
    %v2346 = vsel %vm2343, %v2345, %v2341
    %v2347 = vmul.f32 1.0, %v2346
    %v2348 = vtanh.pop %v2268
    %v2349 = vxor.u32 %v2308, 2147483648
    %v2350 = vmul.f32 %v2349, 1.442695
    %v2351 = vpow.pop %v2350
    %v2352 = vadd.f32 %v2351, 1.0
    %v2353 = vrcp.pop %v2352
    %v2354 = vmul.f32 %v2352, %v2353
    %v2355 = vsub.f32 1.0, %v2354
    %v2356 = vmul.f32 %v2353, %v2355
    %v2357 = vadd.f32 %v2353, %v2356
    %vm2358 = vweird.f32 %v2352
    %vm2359 = vweird.f32 %v2353
    %vm2360 = vmor %vm2358, %vm2359
    %v2361 = vsel %vm2360, %v2353, %v2357
    %v2362 = vand.u32 2147483647, %v2352
    %vm2363 = vcmp.eq.f32.partialorder %v2362, 8.507059e+37
    %v2364 = vand.u32 %v2352, 2147483648
    %v2365 = vor.u32 1.1754944e-38, %v2364
    %v2366 = vsel %vm2363, %v2365, %v2361
    %v2367 = vmul.f32 1.0, %v2366
    %v2368 = vmul.f32 %v2347, %v1801
    %v2369 = vmul.f32 %v2328, %v2348
    %v2370 = vadd.f32 %v2368, %v2369
    %v2371 = vtanh.pop %v2370
    %v2372 = vmul.f32 %v2367, %v2371
    %s2373 = scalar_lea.vmem [#allocation14], 24
    %2374 = vst [vmem:[%s2373] sm:$0xff] %v2372
    %s2375 = scalar_lea.vmem [#allocation6], 128
    %v2376 = vld [vmem:[%s2375] sm:$0xff]
    %v2377 = vld [vmem:[%s2375 + $0x8] sm:$0xff]
    %v2378 = vld [vmem:[%s2375 + $0x10] sm:$0xff]
    %v2379 = vld [vmem:[%s2375 + $0x18] sm:$0xff]
    %v2380 = vld [vmem:[#allocation9] sm:$0xff]
    %v2381 = vld [vmem:[#allocation9 + $0x8] sm:$0xff]
    %v2382 = vld [vmem:[#allocation9 + $0x10] sm:$0xff]
    %v2383 = vld [vmem:[#allocation9 + $0x18] sm:$0xff]
    %v2384 = vld [vmem:[#allocation9 + $0x20] sm:$0xff]
    %v2385 = vld [vmem:[#allocation9 + $0x28] sm:$0xff]
    %v2386 = vld [vmem:[#allocation9 + $0x30] sm:$0xff]
    %v2387 = vld [vmem:[#allocation9 + $0x38] sm:$0xff]
    %v2388 = vld [vmem:[#allocation9 + $0x40] sm:$0xff]
    %v2389 = vld [vmem:[#allocation9 + $0x48] sm:$0xff]
    %v2390 = vld [vmem:[#allocation9 + $0x50] sm:$0xff]
    %v2391 = vld [vmem:[#allocation9 + $0x58] sm:$0xff]
    %v2392 = vld [vmem:[#allocation9 + $0x60] sm:$0xff]
    %v2393 = vld [vmem:[#allocation9 + $0x68] sm:$0xff]
    %v2394 = vld [vmem:[#allocation9 + $0x70] sm:$0xff]
    %v2395 = vld [vmem:[#allocation9 + $0x78] sm:$0xff]
    %v2396 = vld [vmem:[#allocation9 + $0x80] sm:$0xff]
    %v2397 = vld [vmem:[#allocation9 + $0x88] sm:$0xff]
    %v2398 = vld [vmem:[#allocation9 + $0x90] sm:$0xff]
    %v2399 = vld [vmem:[#allocation9 + $0x98] sm:$0xff]
    %v2400 = vld [vmem:[#allocation9 + $0xa0] sm:$0xff]
    %v2401 = vld [vmem:[#allocation9 + $0xa8] sm:$0xff]
    %v2402 = vld [vmem:[#allocation9 + $0xb0] sm:$0xff]
    %v2403 = vld [vmem:[#allocation9 + $0xb8] sm:$0xff]
    %v2404 = vld [vmem:[#allocation9 + $0xc0] sm:$0xff]
    %v2405 = vld [vmem:[#allocation9 + $0xc8] sm:$0xff]
    %v2406 = vld [vmem:[#allocation9 + $0xd0] sm:$0xff]
    %v2407 = vld [vmem:[#allocation9 + $0xd8] sm:$0xff]
    %v2408 = vld [vmem:[#allocation9 + $0xe0] sm:$0xff]
    %v2409 = vld [vmem:[#allocation9 + $0xe8] sm:$0xff]
    %v2410 = vld [vmem:[#allocation9 + $0xf0] sm:$0xff]
    %v2411 = vld [vmem:[#allocation9 + $0xf8] sm:$0xff]
    %v2412 = vld [vmem:[#allocation9 + $0x100] sm:$0xff]
    %v2413 = vld [vmem:[#allocation9 + $0x108] sm:$0xff]
    %v2414 = vld [vmem:[#allocation9 + $0x110] sm:$0xff]
    %v2415 = vld [vmem:[#allocation9 + $0x118] sm:$0xff]
    %v2416 = vld [vmem:[#allocation9 + $0x120] sm:$0xff]
    %v2417 = vld [vmem:[#allocation9 + $0x128] sm:$0xff]
    %v2418 = vld [vmem:[#allocation9 + $0x130] sm:$0xff]
    %v2419 = vld [vmem:[#allocation9 + $0x138] sm:$0xff]
    %v2420 = vld [vmem:[#allocation9 + $0x140] sm:$0xff]
    %v2421 = vld [vmem:[#allocation9 + $0x148] sm:$0xff]
    %v2422 = vld [vmem:[#allocation9 + $0x150] sm:$0xff]
    %v2423 = vld [vmem:[#allocation9 + $0x158] sm:$0xff]
    %v2424 = vld [vmem:[#allocation9 + $0x160] sm:$0xff]
    %v2425 = vld [vmem:[#allocation9 + $0x168] sm:$0xff]
    %v2426 = vld [vmem:[#allocation9 + $0x170] sm:$0xff]
    %v2427 = vld [vmem:[#allocation9 + $0x178] sm:$0xff]
    %v2428 = vld [vmem:[#allocation9 + $0x180] sm:$0xff]
    %v2429 = vld [vmem:[#allocation9 + $0x188] sm:$0xff]
    %v2430 = vld [vmem:[#allocation9 + $0x190] sm:$0xff]
    %v2431 = vld [vmem:[#allocation9 + $0x198] sm:$0xff]
    %v2432 = vld [vmem:[#allocation9 + $0x1a0] sm:$0xff]
    %v2433 = vld [vmem:[#allocation9 + $0x1a8] sm:$0xff]
    %v2434 = vld [vmem:[#allocation9 + $0x1b0] sm:$0xff]
    %v2435 = vld [vmem:[#allocation9 + $0x1b8] sm:$0xff]
    %v2436 = vld [vmem:[#allocation9 + $0x1c0] sm:$0xff]
    %v2437 = vld [vmem:[#allocation9 + $0x1c8] sm:$0xff]
    %v2438 = vld [vmem:[#allocation9 + $0x1d0] sm:$0xff]
    %v2439 = vld [vmem:[#allocation9 + $0x1d8] sm:$0xff]
    %v2440 = vld [vmem:[#allocation9 + $0x1e0] sm:$0xff]
    %v2441 = vld [vmem:[#allocation9 + $0x1e8] sm:$0xff]
    %v2442 = vld [vmem:[#allocation9 + $0x1f0] sm:$0xff]
    %v2443 = vld [vmem:[#allocation9 + $0x1f8] sm:$0xff]
    %2444 = vmatpush.msra.mxu0 %v2440
    %2445 = vmatpush.msra.mxu0 %v2436
    %2446 = vmatpush.msra.mxu0 %v2432
    %2447 = vmatpush.msra.mxu0 %v2428
    %2448 = vmatpush.msra.mxu0 %v2424
    %2449 = vmatpush.msra.mxu0 %v2420
    %2450 = vmatpush.msra.mxu0 %v2416
    %2451 = vmatpush.msra.mxu0 %v2412
    %2452 = vmatpush.msra.mxu0 %v2408
    %2453 = vmatpush.msra.mxu0 %v2404
    %2454 = vmatpush.msra.mxu0 %v2400
    %2455 = vmatpush.msra.mxu0 %v2396
    %2456 = vmatpush.msra.mxu0 %v2392
    %2457 = vmatpush.msra.mxu0 %v2388
    %2458 = vmatpush.msra.mxu0 %v2384
    %2459 = vmatpush.msra.mxu0 %v2380
    %2460 = vmatmul.f32.gmra.mxu0 %v2021
    %v2461 = vpop.f32.mrf.mxu0
    %v2462 = vadd.f32 0.0, %v2461
    %2463 = vdwg.mxu0
    %2464 = vmatpush.msra.mxu0 %v2441
    %2465 = vmatpush.msra.mxu0 %v2437
    %2466 = vmatpush.msra.mxu0 %v2433
    %2467 = vmatpush.msra.mxu0 %v2429
    %2468 = vmatpush.msra.mxu0 %v2425
    %2469 = vmatpush.msra.mxu0 %v2421
    %2470 = vmatpush.msra.mxu0 %v2417
    %2471 = vmatpush.msra.mxu0 %v2413
    %2472 = vmatpush.msra.mxu0 %v2409
    %2473 = vmatpush.msra.mxu0 %v2405
    %2474 = vmatpush.msra.mxu0 %v2401
    %2475 = vmatpush.msra.mxu0 %v2397
    %2476 = vmatpush.msra.mxu0 %v2393
    %2477 = vmatpush.msra.mxu0 %v2389
    %2478 = vmatpush.msra.mxu0 %v2385
    %2479 = vmatpush.msra.mxu0 %v2381
    %2480 = vmatmul.f32.gmra.mxu0 %v2021
    %v2481 = vpop.f32.mrf.mxu0
    %v2482 = vadd.f32 0.0, %v2481
    %2483 = vdwg.mxu0
    %2484 = vmatpush.msra.mxu0 %v2442
    %2485 = vmatpush.msra.mxu0 %v2438
    %2486 = vmatpush.msra.mxu0 %v2434
    %2487 = vmatpush.msra.mxu0 %v2430
    %2488 = vmatpush.msra.mxu0 %v2426
    %2489 = vmatpush.msra.mxu0 %v2422
    %2490 = vmatpush.msra.mxu0 %v2418
    %2491 = vmatpush.msra.mxu0 %v2414
    %2492 = vmatpush.msra.mxu0 %v2410
    %2493 = vmatpush.msra.mxu0 %v2406
    %2494 = vmatpush.msra.mxu0 %v2402
    %2495 = vmatpush.msra.mxu0 %v2398
    %2496 = vmatpush.msra.mxu0 %v2394
    %2497 = vmatpush.msra.mxu0 %v2390
    %2498 = vmatpush.msra.mxu0 %v2386
    %2499 = vmatpush.msra.mxu0 %v2382
    %2500 = vmatmul.f32.gmra.mxu0 %v2021
    %v2501 = vpop.f32.mrf.mxu0
    %v2502 = vadd.f32 0.0, %v2501
    %2503 = vdwg.mxu0
    %2504 = vmatpush.msra.mxu0 %v2443
    %2505 = vmatpush.msra.mxu0 %v2439
    %2506 = vmatpush.msra.mxu0 %v2435
    %2507 = vmatpush.msra.mxu0 %v2431
    %2508 = vmatpush.msra.mxu0 %v2427
    %2509 = vmatpush.msra.mxu0 %v2423
    %2510 = vmatpush.msra.mxu0 %v2419
    %2511 = vmatpush.msra.mxu0 %v2415
    %2512 = vmatpush.msra.mxu0 %v2411
    %2513 = vmatpush.msra.mxu0 %v2407
    %2514 = vmatpush.msra.mxu0 %v2403
    %2515 = vmatpush.msra.mxu0 %v2399
    %2516 = vmatpush.msra.mxu0 %v2395
    %2517 = vmatpush.msra.mxu0 %v2391
    %2518 = vmatpush.msra.mxu0 %v2387
    %2519 = vmatpush.msra.mxu0 %v2383
    %2520 = vmatmul.f32.gmra.mxu0 %v2021
    %v2521 = vpop.f32.mrf.mxu0
    %v2522 = vadd.f32 0.0, %v2521
    %2523 = vdwg.mxu0
    %v2524 = vadd.f32 %v2376, %v2462
    %v2525 = vadd.f32 %v2377, %v2482
    %v2526 = vadd.f32 %v2378, %v2502
    %v2527 = vadd.f32 %v2379, %v2522
    %v2528 = vxor.u32 %v2524, 2147483648
    %v2529 = vmul.f32 %v2528, 1.442695
    %v2530 = vpow.pop %v2529
    %v2531 = vadd.f32 %v2530, 1.0
    %v2532 = vrcp.pop %v2531
    %v2533 = vmul.f32 %v2531, %v2532
    %v2534 = vsub.f32 1.0, %v2533
    %v2535 = vmul.f32 %v2532, %v2534
    %v2536 = vadd.f32 %v2532, %v2535
    %vm2537 = vweird.f32 %v2531
    %vm2538 = vweird.f32 %v2532
    %vm2539 = vmor %vm2537, %vm2538
    %v2540 = vsel %vm2539, %v2532, %v2536
    %v2541 = vand.u32 2147483647, %v2531
    %vm2542 = vcmp.eq.f32.partialorder %v2541, 8.507059e+37
    %v2543 = vand.u32 %v2531, 2147483648
    %v2544 = vor.u32 1.1754944e-38, %v2543
    %v2545 = vsel %vm2542, %v2544, %v2540
    %v2546 = vmul.f32 1.0, %v2545
    %v2547 = vxor.u32 %v2525, 2147483648
    %v2548 = vmul.f32 %v2547, 1.442695
    %v2549 = vpow.pop %v2548
    %v2550 = vadd.f32 %v2549, 1.0
    %v2551 = vrcp.pop %v2550
    %v2552 = vmul.f32 %v2550, %v2551
    %v2553 = vsub.f32 1.0, %v2552
    %v2554 = vmul.f32 %v2551, %v2553
    %v2555 = vadd.f32 %v2551, %v2554
    %vm2556 = vweird.f32 %v2550
    %vm2557 = vweird.f32 %v2551
    %vm2558 = vmor %vm2556, %vm2557
    %v2559 = vsel %vm2558, %v2551, %v2555
    %v2560 = vand.u32 2147483647, %v2550
    %vm2561 = vcmp.eq.f32.partialorder %v2560, 8.507059e+37
    %v2562 = vand.u32 %v2550, 2147483648
    %v2563 = vor.u32 1.1754944e-38, %v2562
    %v2564 = vsel %vm2561, %v2563, %v2559
    %v2565 = vmul.f32 1.0, %v2564
    %v2566 = vtanh.pop %v2526
    %v2567 = vxor.u32 %v2527, 2147483648
    %v2568 = vmul.f32 %v2567, 1.442695
    %v2569 = vpow.pop %v2568
    %v2570 = vadd.f32 %v2569, 1.0
    %v2571 = vrcp.pop %v2570
    %v2572 = vmul.f32 %v2570, %v2571
    %v2573 = vsub.f32 1.0, %v2572
    %v2574 = vmul.f32 %v2571, %v2573
    %v2575 = vadd.f32 %v2571, %v2574
    %vm2576 = vweird.f32 %v2570
    %vm2577 = vweird.f32 %v2571
    %vm2578 = vmor %vm2576, %vm2577
    %v2579 = vsel %vm2578, %v2571, %v2575
    %v2580 = vand.u32 2147483647, %v2570
    %vm2581 = vcmp.eq.f32.partialorder %v2580, 8.507059e+37
    %v2582 = vand.u32 %v2570, 2147483648
    %v2583 = vor.u32 1.1754944e-38, %v2582
    %v2584 = vsel %vm2581, %v2583, %v2579
    %v2585 = vmul.f32 1.0, %v2584
    %v2586 = vmul.f32 %v2565, %v2019
    %v2587 = vmul.f32 %v2546, %v2566
    %v2588 = vadd.f32 %v2586, %v2587
    %v2589 = vtanh.pop %v2588
    %v2590 = vmul.f32 %v2585, %v2589
    %v2591 = vld [vmem:[#allocation11] sm:$0xff]
    %v2592 = vld [vmem:[#allocation11 + $0x8] sm:$0xff]
    %v2593 = vld [vmem:[#allocation11 + $0x10] sm:$0xff]
    %v2594 = vld [vmem:[#allocation11 + $0x18] sm:$0xff]
    %v2595 = vld [vmem:[#allocation11 + $0x20] sm:$0xff]
    %v2596 = vld [vmem:[#allocation11 + $0x28] sm:$0xff]
    %v2597 = vld [vmem:[#allocation11 + $0x30] sm:$0xff]
    %v2598 = vld [vmem:[#allocation11 + $0x38] sm:$0xff]
    %v2599 = vld [vmem:[#allocation11 + $0x40] sm:$0xff]
    %v2600 = vld [vmem:[#allocation11 + $0x48] sm:$0xff]
    %v2601 = vld [vmem:[#allocation11 + $0x50] sm:$0xff]
    %v2602 = vld [vmem:[#allocation11 + $0x58] sm:$0xff]
    %v2603 = vld [vmem:[#allocation11 + $0x60] sm:$0xff]
    %v2604 = vld [vmem:[#allocation11 + $0x68] sm:$0xff]
    %v2605 = vld [vmem:[#allocation11 + $0x70] sm:$0xff]
    %v2606 = vld [vmem:[#allocation11 + $0x78] sm:$0xff]
    %v2607 = vld [vmem:[#allocation11 + $0x80] sm:$0xff]
    %v2608 = vld [vmem:[#allocation11 + $0x88] sm:$0xff]
    %v2609 = vld [vmem:[#allocation11 + $0x90] sm:$0xff]
    %v2610 = vld [vmem:[#allocation11 + $0x98] sm:$0xff]
    %v2611 = vld [vmem:[#allocation11 + $0xa0] sm:$0xff]
    %v2612 = vld [vmem:[#allocation11 + $0xa8] sm:$0xff]
    %v2613 = vld [vmem:[#allocation11 + $0xb0] sm:$0xff]
    %v2614 = vld [vmem:[#allocation11 + $0xb8] sm:$0xff]
    %v2615 = vld [vmem:[#allocation11 + $0xc0] sm:$0xff]
    %v2616 = vld [vmem:[#allocation11 + $0xc8] sm:$0xff]
    %v2617 = vld [vmem:[#allocation11 + $0xd0] sm:$0xff]
    %v2618 = vld [vmem:[#allocation11 + $0xd8] sm:$0xff]
    %v2619 = vld [vmem:[#allocation11 + $0xe0] sm:$0xff]
    %v2620 = vld [vmem:[#allocation11 + $0xe8] sm:$0xff]
    %v2621 = vld [vmem:[#allocation11 + $0xf0] sm:$0xff]
    %v2622 = vld [vmem:[#allocation11 + $0xf8] sm:$0xff]
    %v2623 = vld [vmem:[#allocation11 + $0x100] sm:$0xff]
    %v2624 = vld [vmem:[#allocation11 + $0x108] sm:$0xff]
    %v2625 = vld [vmem:[#allocation11 + $0x110] sm:$0xff]
    %v2626 = vld [vmem:[#allocation11 + $0x118] sm:$0xff]
    %v2627 = vld [vmem:[#allocation11 + $0x120] sm:$0xff]
    %v2628 = vld [vmem:[#allocation11 + $0x128] sm:$0xff]
    %v2629 = vld [vmem:[#allocation11 + $0x130] sm:$0xff]
    %v2630 = vld [vmem:[#allocation11 + $0x138] sm:$0xff]
    %v2631 = vld [vmem:[#allocation11 + $0x140] sm:$0xff]
    %v2632 = vld [vmem:[#allocation11 + $0x148] sm:$0xff]
    %v2633 = vld [vmem:[#allocation11 + $0x150] sm:$0xff]
    %v2634 = vld [vmem:[#allocation11 + $0x158] sm:$0xff]
    %v2635 = vld [vmem:[#allocation11 + $0x160] sm:$0xff]
    %v2636 = vld [vmem:[#allocation11 + $0x168] sm:$0xff]
    %v2637 = vld [vmem:[#allocation11 + $0x170] sm:$0xff]
    %v2638 = vld [vmem:[#allocation11 + $0x178] sm:$0xff]
    %v2639 = vld [vmem:[#allocation11 + $0x180] sm:$0xff]
    %v2640 = vld [vmem:[#allocation11 + $0x188] sm:$0xff]
    %v2641 = vld [vmem:[#allocation11 + $0x190] sm:$0xff]
    %v2642 = vld [vmem:[#allocation11 + $0x198] sm:$0xff]
    %v2643 = vld [vmem:[#allocation11 + $0x1a0] sm:$0xff]
    %v2644 = vld [vmem:[#allocation11 + $0x1a8] sm:$0xff]
    %v2645 = vld [vmem:[#allocation11 + $0x1b0] sm:$0xff]
    %v2646 = vld [vmem:[#allocation11 + $0x1b8] sm:$0xff]
    %v2647 = vld [vmem:[#allocation11 + $0x1c0] sm:$0xff]
    %v2648 = vld [vmem:[#allocation11 + $0x1c8] sm:$0xff]
    %v2649 = vld [vmem:[#allocation11 + $0x1d0] sm:$0xff]
    %v2650 = vld [vmem:[#allocation11 + $0x1d8] sm:$0xff]
    %v2651 = vld [vmem:[#allocation11 + $0x1e0] sm:$0xff]
    %v2652 = vld [vmem:[#allocation11 + $0x1e8] sm:$0xff]
    %v2653 = vld [vmem:[#allocation11 + $0x1f0] sm:$0xff]
    %v2654 = vld [vmem:[#allocation11 + $0x1f8] sm:$0xff]
    %v2655 = vld [vmem:[#allocation11 + $0x200] sm:$0xff]
    %v2656 = vld [vmem:[#allocation11 + $0x208] sm:$0xff]
    %v2657 = vld [vmem:[#allocation11 + $0x210] sm:$0xff]
    %v2658 = vld [vmem:[#allocation11 + $0x218] sm:$0xff]
    %v2659 = vld [vmem:[#allocation11 + $0x220] sm:$0xff]
    %v2660 = vld [vmem:[#allocation11 + $0x228] sm:$0xff]
    %v2661 = vld [vmem:[#allocation11 + $0x230] sm:$0xff]
    %v2662 = vld [vmem:[#allocation11 + $0x238] sm:$0xff]
    %v2663 = vld [vmem:[#allocation11 + $0x240] sm:$0xff]
    %v2664 = vld [vmem:[#allocation11 + $0x248] sm:$0xff]
    %v2665 = vld [vmem:[#allocation11 + $0x250] sm:$0xff]
    %v2666 = vld [vmem:[#allocation11 + $0x258] sm:$0xff]
    %v2667 = vld [vmem:[#allocation11 + $0x260] sm:$0xff]
    %v2668 = vld [vmem:[#allocation11 + $0x268] sm:$0xff]
    %v2669 = vld [vmem:[#allocation11 + $0x270] sm:$0xff]
    %v2670 = vld [vmem:[#allocation11 + $0x278] sm:$0xff]
    %v2671 = vld [vmem:[#allocation11 + $0x280] sm:$0xff]
    %v2672 = vld [vmem:[#allocation11 + $0x288] sm:$0xff]
    %v2673 = vld [vmem:[#allocation11 + $0x290] sm:$0xff]
    %v2674 = vld [vmem:[#allocation11 + $0x298] sm:$0xff]
    %v2675 = vld [vmem:[#allocation11 + $0x2a0] sm:$0xff]
    %v2676 = vld [vmem:[#allocation11 + $0x2a8] sm:$0xff]
    %v2677 = vld [vmem:[#allocation11 + $0x2b0] sm:$0xff]
    %v2678 = vld [vmem:[#allocation11 + $0x2b8] sm:$0xff]
    %v2679 = vld [vmem:[#allocation11 + $0x2c0] sm:$0xff]
    %v2680 = vld [vmem:[#allocation11 + $0x2c8] sm:$0xff]
    %v2681 = vld [vmem:[#allocation11 + $0x2d0] sm:$0xff]
    %v2682 = vld [vmem:[#allocation11 + $0x2d8] sm:$0xff]
    %v2683 = vld [vmem:[#allocation11 + $0x2e0] sm:$0xff]
    %v2684 = vld [vmem:[#allocation11 + $0x2e8] sm:$0xff]
    %v2685 = vld [vmem:[#allocation11 + $0x2f0] sm:$0xff]
    %v2686 = vld [vmem:[#allocation11 + $0x2f8] sm:$0xff]
    %v2687 = vld [vmem:[#allocation11 + $0x300] sm:$0xff]
    %v2688 = vld [vmem:[#allocation11 + $0x308] sm:$0xff]
    %v2689 = vld [vmem:[#allocation11 + $0x310] sm:$0xff]
    %v2690 = vld [vmem:[#allocation11 + $0x318] sm:$0xff]
    %v2691 = vld [vmem:[#allocation11 + $0x320] sm:$0xff]
    %v2692 = vld [vmem:[#allocation11 + $0x328] sm:$0xff]
    %v2693 = vld [vmem:[#allocation11 + $0x330] sm:$0xff]
    %v2694 = vld [vmem:[#allocation11 + $0x338] sm:$0xff]
    %v2695 = vld [vmem:[#allocation11 + $0x340] sm:$0xff]
    %v2696 = vld [vmem:[#allocation11 + $0x348] sm:$0xff]
    %v2697 = vld [vmem:[#allocation11 + $0x350] sm:$0xff]
    %v2698 = vld [vmem:[#allocation11 + $0x358] sm:$0xff]
    %v2699 = vld [vmem:[#allocation11 + $0x360] sm:$0xff]
    %v2700 = vld [vmem:[#allocation11 + $0x368] sm:$0xff]
    %v2701 = vld [vmem:[#allocation11 + $0x370] sm:$0xff]
    %v2702 = vld [vmem:[#allocation11 + $0x378] sm:$0xff]
    %v2703 = vld [vmem:[#allocation11 + $0x380] sm:$0xff]
    %v2704 = vld [vmem:[#allocation11 + $0x388] sm:$0xff]
    %v2705 = vld [vmem:[#allocation11 + $0x390] sm:$0xff]
    %v2706 = vld [vmem:[#allocation11 + $0x398] sm:$0xff]
    %v2707 = vld [vmem:[#allocation11 + $0x3a0] sm:$0xff]
    %v2708 = vld [vmem:[#allocation11 + $0x3a8] sm:$0xff]
    %v2709 = vld [vmem:[#allocation11 + $0x3b0] sm:$0xff]
    %v2710 = vld [vmem:[#allocation11 + $0x3b8] sm:$0xff]
    %v2711 = vld [vmem:[#allocation11 + $0x3c0] sm:$0xff]
    %v2712 = vld [vmem:[#allocation11 + $0x3c8] sm:$0xff]
    %v2713 = vld [vmem:[#allocation11 + $0x3d0] sm:$0xff]
    %v2714 = vld [vmem:[#allocation11 + $0x3d8] sm:$0xff]
    %v2715 = vld [vmem:[#allocation11 + $0x3e0] sm:$0xff]
    %v2716 = vld [vmem:[#allocation11 + $0x3e8] sm:$0xff]
    %v2717 = vld [vmem:[#allocation11 + $0x3f0] sm:$0xff]
    %v2718 = vld [vmem:[#allocation11 + $0x3f8] sm:$0xff]
    %2719 = vmatpush.msra.mxu0 %v2651
    %2720 = vmatpush.msra.mxu0 %v2647
    %2721 = vmatpush.msra.mxu0 %v2643
    %2722 = vmatpush.msra.mxu0 %v2639
    %2723 = vmatpush.msra.mxu0 %v2635
    %2724 = vmatpush.msra.mxu0 %v2631
    %2725 = vmatpush.msra.mxu0 %v2627
    %2726 = vmatpush.msra.mxu0 %v2623
    %2727 = vmatpush.msra.mxu0 %v2619
    %2728 = vmatpush.msra.mxu0 %v2615
    %2729 = vmatpush.msra.mxu0 %v2611
    %2730 = vmatpush.msra.mxu0 %v2607
    %2731 = vmatpush.msra.mxu0 %v2603
    %2732 = vmatpush.msra.mxu0 %v2599
    %2733 = vmatpush.msra.mxu0 %v2595
    %2734 = vmatpush.msra.mxu0 %v2591
    %2735 = vmatmul.f32.gmra.mxu0 %v2590
    %v2736 = vpop.f32.mrf.mxu0
    %v2737 = vadd.f32 %v89, %v2736
    %2738 = vdwg.mxu0
    %2739 = vmatpush.msra.mxu0 %v2715
    %2740 = vmatpush.msra.mxu0 %v2711
    %2741 = vmatpush.msra.mxu0 %v2707
    %2742 = vmatpush.msra.mxu0 %v2703
    %2743 = vmatpush.msra.mxu0 %v2699
    %2744 = vmatpush.msra.mxu0 %v2695
    %2745 = vmatpush.msra.mxu0 %v2691
    %2746 = vmatpush.msra.mxu0 %v2687
    %2747 = vmatpush.msra.mxu0 %v2683
    %2748 = vmatpush.msra.mxu0 %v2679
    %2749 = vmatpush.msra.mxu0 %v2675
    %2750 = vmatpush.msra.mxu0 %v2671
    %2751 = vmatpush.msra.mxu0 %v2667
    %2752 = vmatpush.msra.mxu0 %v2663
    %2753 = vmatpush.msra.mxu0 %v2659
    %2754 = vmatpush.msra.mxu0 %v2655
    %2755 = vmatmul.f32.gmra.mxu0 %v2372
    %v2756 = vpop.f32.mrf.mxu0
    %v2757 = vadd.f32 %v2737, %v2756
    %2758 = vdwg.mxu0
    %2759 = vmatpush.msra.mxu0 %v2652
    %2760 = vmatpush.msra.mxu0 %v2648
    %2761 = vmatpush.msra.mxu0 %v2644
    %2762 = vmatpush.msra.mxu0 %v2640
    %2763 = vmatpush.msra.mxu0 %v2636
    %2764 = vmatpush.msra.mxu0 %v2632
    %2765 = vmatpush.msra.mxu0 %v2628
    %2766 = vmatpush.msra.mxu0 %v2624
    %2767 = vmatpush.msra.mxu0 %v2620
    %2768 = vmatpush.msra.mxu0 %v2616
    %2769 = vmatpush.msra.mxu0 %v2612
    %2770 = vmatpush.msra.mxu0 %v2608
    %2771 = vmatpush.msra.mxu0 %v2604
    %2772 = vmatpush.msra.mxu0 %v2600
    %2773 = vmatpush.msra.mxu0 %v2596
    %2774 = vmatpush.msra.mxu0 %v2592
    %2775 = vmatmul.f32.gmra.mxu0 %v2590
    %v2776 = vpop.f32.mrf.mxu0
    %v2777 = vadd.f32 %v90, %v2776
    %2778 = vdwg.mxu0
    %2779 = vmatpush.msra.mxu0 %v2716
    %2780 = vmatpush.msra.mxu0 %v2712
    %2781 = vmatpush.msra.mxu0 %v2708
    %2782 = vmatpush.msra.mxu0 %v2704
    %2783 = vmatpush.msra.mxu0 %v2700
    %2784 = vmatpush.msra.mxu0 %v2696
    %2785 = vmatpush.msra.mxu0 %v2692
    %2786 = vmatpush.msra.mxu0 %v2688
    %2787 = vmatpush.msra.mxu0 %v2684
    %2788 = vmatpush.msra.mxu0 %v2680
    %2789 = vmatpush.msra.mxu0 %v2676
    %2790 = vmatpush.msra.mxu0 %v2672
    %2791 = vmatpush.msra.mxu0 %v2668
    %2792 = vmatpush.msra.mxu0 %v2664
    %2793 = vmatpush.msra.mxu0 %v2660
    %2794 = vmatpush.msra.mxu0 %v2656
    %2795 = vmatmul.f32.gmra.mxu0 %v2372
    %v2796 = vpop.f32.mrf.mxu0
    %v2797 = vadd.f32 %v2777, %v2796
    %2798 = vdwg.mxu0
    %2799 = vmatpush.msra.mxu0 %v2653
    %2800 = vmatpush.msra.mxu0 %v2649
    %2801 = vmatpush.msra.mxu0 %v2645
    %2802 = vmatpush.msra.mxu0 %v2641
    %2803 = vmatpush.msra.mxu0 %v2637
    %2804 = vmatpush.msra.mxu0 %v2633
    %2805 = vmatpush.msra.mxu0 %v2629
    %2806 = vmatpush.msra.mxu0 %v2625
    %2807 = vmatpush.msra.mxu0 %v2621
    %2808 = vmatpush.msra.mxu0 %v2617
    %2809 = vmatpush.msra.mxu0 %v2613
    %2810 = vmatpush.msra.mxu0 %v2609
    %2811 = vmatpush.msra.mxu0 %v2605
    %2812 = vmatpush.msra.mxu0 %v2601
    %2813 = vmatpush.msra.mxu0 %v2597
    %2814 = vmatpush.msra.mxu0 %v2593
    %2815 = vmatmul.f32.gmra.mxu0 %v2590
    %v2816 = vpop.f32.mrf.mxu0
    %v2817 = vadd.f32 %v91, %v2816
    %2818 = vdwg.mxu0
    %2819 = vmatpush.msra.mxu0 %v2717
    %2820 = vmatpush.msra.mxu0 %v2713
    %2821 = vmatpush.msra.mxu0 %v2709
    %2822 = vmatpush.msra.mxu0 %v2705
    %2823 = vmatpush.msra.mxu0 %v2701
    %2824 = vmatpush.msra.mxu0 %v2697
    %2825 = vmatpush.msra.mxu0 %v2693
    %2826 = vmatpush.msra.mxu0 %v2689
    %2827 = vmatpush.msra.mxu0 %v2685
    %2828 = vmatpush.msra.mxu0 %v2681
    %2829 = vmatpush.msra.mxu0 %v2677
    %2830 = vmatpush.msra.mxu0 %v2673
    %2831 = vmatpush.msra.mxu0 %v2669
    %2832 = vmatpush.msra.mxu0 %v2665
    %2833 = vmatpush.msra.mxu0 %v2661
    %2834 = vmatpush.msra.mxu0 %v2657
    %2835 = vmatmul.f32.gmra.mxu0 %v2372
    %v2836 = vpop.f32.mrf.mxu0
    %v2837 = vadd.f32 %v2817, %v2836
    %2838 = vdwg.mxu0
    %2839 = vmatpush.msra.mxu0 %v2654
    %2840 = vmatpush.msra.mxu0 %v2650
    %2841 = vmatpush.msra.mxu0 %v2646
    %2842 = vmatpush.msra.mxu0 %v2642
    %2843 = vmatpush.msra.mxu0 %v2638
    %2844 = vmatpush.msra.mxu0 %v2634
    %2845 = vmatpush.msra.mxu0 %v2630
    %2846 = vmatpush.msra.mxu0 %v2626
    %2847 = vmatpush.msra.mxu0 %v2622
    %2848 = vmatpush.msra.mxu0 %v2618
    %2849 = vmatpush.msra.mxu0 %v2614
    %2850 = vmatpush.msra.mxu0 %v2610
    %2851 = vmatpush.msra.mxu0 %v2606
    %2852 = vmatpush.msra.mxu0 %v2602
    %2853 = vmatpush.msra.mxu0 %v2598
    %2854 = vmatpush.msra.mxu0 %v2594
    %2855 = vmatmul.f32.gmra.mxu0 %v2590
    %v2856 = vpop.f32.mrf.mxu0
    %v2857 = vadd.f32 %v92, %v2856
    %2858 = vdwg.mxu0
    %2859 = vmatpush.msra.mxu0 %v2718
    %2860 = vmatpush.msra.mxu0 %v2714
    %2861 = vmatpush.msra.mxu0 %v2710
    %2862 = vmatpush.msra.mxu0 %v2706
    %2863 = vmatpush.msra.mxu0 %v2702
    %2864 = vmatpush.msra.mxu0 %v2698
    %2865 = vmatpush.msra.mxu0 %v2694
    %2866 = vmatpush.msra.mxu0 %v2690
    %2867 = vmatpush.msra.mxu0 %v2686
    %2868 = vmatpush.msra.mxu0 %v2682
    %2869 = vmatpush.msra.mxu0 %v2678
    %2870 = vmatpush.msra.mxu0 %v2674
    %2871 = vmatpush.msra.mxu0 %v2670
    %2872 = vmatpush.msra.mxu0 %v2666
    %2873 = vmatpush.msra.mxu0 %v2662
    %2874 = vmatpush.msra.mxu0 %v2658
    %2875 = vmatmul.f32.gmra.mxu0 %v2372
    %v2876 = vpop.f32.mrf.mxu0
    %v2877 = vadd.f32 %v2857, %v2876
    %2878 = vdwg.mxu0
    %v2879 = vxor.u32 %v2757, 2147483648
    %v2880 = vmul.f32 %v2879, 1.442695
    %v2881 = vpow.pop %v2880
    %v2882 = vadd.f32 %v2881, 1.0
    %v2883 = vrcp.pop %v2882
    %v2884 = vmul.f32 %v2882, %v2883
    %v2885 = vsub.f32 1.0, %v2884
    %v2886 = vmul.f32 %v2883, %v2885
    %v2887 = vadd.f32 %v2883, %v2886
    %vm2888 = vweird.f32 %v2882
    %vm2889 = vweird.f32 %v2883
    %vm2890 = vmor %vm2888, %vm2889
    %v2891 = vsel %vm2890, %v2883, %v2887
    %v2892 = vand.u32 2147483647, %v2882
    %vm2893 = vcmp.eq.f32.partialorder %v2892, 8.507059e+37
    %v2894 = vand.u32 %v2882, 2147483648
    %v2895 = vor.u32 1.1754944e-38, %v2894
    %v2896 = vsel %vm2893, %v2895, %v2891
    %v2897 = vmul.f32 1.0, %v2896
    %v2898 = vxor.u32 %v2797, 2147483648
    %v2899 = vmul.f32 %v2898, 1.442695
    %v2900 = vpow.pop %v2899
    %v2901 = vadd.f32 %v2900, 1.0
    %v2902 = vrcp.pop %v2901
    %v2903 = vmul.f32 %v2901, %v2902
    %v2904 = vsub.f32 1.0, %v2903
    %v2905 = vmul.f32 %v2902, %v2904
    %v2906 = vadd.f32 %v2902, %v2905
    %vm2907 = vweird.f32 %v2901
    %vm2908 = vweird.f32 %v2902
    %vm2909 = vmor %vm2907, %vm2908
    %v2910 = vsel %vm2909, %v2902, %v2906
    %v2911 = vand.u32 2147483647, %v2901
    %vm2912 = vcmp.eq.f32.partialorder %v2911, 8.507059e+37
    %v2913 = vand.u32 %v2901, 2147483648
    %v2914 = vor.u32 1.1754944e-38, %v2913
    %v2915 = vsel %vm2912, %v2914, %v2910
    %v2916 = vmul.f32 1.0, %v2915
    %v2917 = vtanh.pop %v2837
    %v2918 = vxor.u32 %v2877, 2147483648
    %v2919 = vmul.f32 %v2918, 1.442695
    %v2920 = vpow.pop %v2919
    %v2921 = vadd.f32 %v2920, 1.0
    %v2922 = vrcp.pop %v2921
    %v2923 = vmul.f32 %v2921, %v2922
    %v2924 = vsub.f32 1.0, %v2923
    %v2925 = vmul.f32 %v2922, %v2924
    %v2926 = vadd.f32 %v2922, %v2925
    %vm2927 = vweird.f32 %v2921
    %vm2928 = vweird.f32 %v2922
    %vm2929 = vmor %vm2927, %vm2928
    %v2930 = vsel %vm2929, %v2922, %v2926
    %v2931 = vand.u32 2147483647, %v2921
    %vm2932 = vcmp.eq.f32.partialorder %v2931, 8.507059e+37
    %v2933 = vand.u32 %v2921, 2147483648
    %v2934 = vor.u32 1.1754944e-38, %v2933
    %v2935 = vsel %vm2932, %v2934, %v2930
    %v2936 = vmul.f32 1.0, %v2935
    %v2937 = vmul.f32 %v2916, %v2370
    %v2938 = vmul.f32 %v2897, %v2917
    %v2939 = vadd.f32 %v2937, %v2938
    %v2940 = vtanh.pop %v2939
    %v2941 = vmul.f32 %v2936, %v2940
    %s2942 = scalar_lea.vmem [#allocation14], 32
    %2943 = vst [vmem:[%s2942] sm:$0xff] %v2941
    %s2944 = scalar_lea.vmem [#allocation6], 160
    %v2945 = vld [vmem:[%s2944] sm:$0xff]
    %v2946 = vld [vmem:[%s2944 + $0x8] sm:$0xff]
    %v2947 = vld [vmem:[%s2944 + $0x10] sm:$0xff]
    %v2948 = vld [vmem:[%s2944 + $0x18] sm:$0xff]
    %v2949 = vld [vmem:[#allocation9] sm:$0xff]
    %v2950 = vld [vmem:[#allocation9 + $0x8] sm:$0xff]
    %v2951 = vld [vmem:[#allocation9 + $0x10] sm:$0xff]
    %v2952 = vld [vmem:[#allocation9 + $0x18] sm:$0xff]
    %v2953 = vld [vmem:[#allocation9 + $0x20] sm:$0xff]
    %v2954 = vld [vmem:[#allocation9 + $0x28] sm:$0xff]
    %v2955 = vld [vmem:[#allocation9 + $0x30] sm:$0xff]
    %v2956 = vld [vmem:[#allocation9 + $0x38] sm:$0xff]
    %v2957 = vld [vmem:[#allocation9 + $0x40] sm:$0xff]
    %v2958 = vld [vmem:[#allocation9 + $0x48] sm:$0xff]
    %v2959 = vld [vmem:[#allocation9 + $0x50] sm:$0xff]
    %v2960 = vld [vmem:[#allocation9 + $0x58] sm:$0xff]
    %v2961 = vld [vmem:[#allocation9 + $0x60] sm:$0xff]
    %v2962 = vld [vmem:[#allocation9 + $0x68] sm:$0xff]
    %v2963 = vld [vmem:[#allocation9 + $0x70] sm:$0xff]
    %v2964 = vld [vmem:[#allocation9 + $0x78] sm:$0xff]
    %v2965 = vld [vmem:[#allocation9 + $0x80] sm:$0xff]
    %v2966 = vld [vmem:[#allocation9 + $0x88] sm:$0xff]
    %v2967 = vld [vmem:[#allocation9 + $0x90] sm:$0xff]
    %v2968 = vld [vmem:[#allocation9 + $0x98] sm:$0xff]
    %v2969 = vld [vmem:[#allocation9 + $0xa0] sm:$0xff]
    %v2970 = vld [vmem:[#allocation9 + $0xa8] sm:$0xff]
    %v2971 = vld [vmem:[#allocation9 + $0xb0] sm:$0xff]
    %v2972 = vld [vmem:[#allocation9 + $0xb8] sm:$0xff]
    %v2973 = vld [vmem:[#allocation9 + $0xc0] sm:$0xff]
    %v2974 = vld [vmem:[#allocation9 + $0xc8] sm:$0xff]
    %v2975 = vld [vmem:[#allocation9 + $0xd0] sm:$0xff]
    %v2976 = vld [vmem:[#allocation9 + $0xd8] sm:$0xff]
    %v2977 = vld [vmem:[#allocation9 + $0xe0] sm:$0xff]
    %v2978 = vld [vmem:[#allocation9 + $0xe8] sm:$0xff]
    %v2979 = vld [vmem:[#allocation9 + $0xf0] sm:$0xff]
    %v2980 = vld [vmem:[#allocation9 + $0xf8] sm:$0xff]
    %v2981 = vld [vmem:[#allocation9 + $0x100] sm:$0xff]
    %v2982 = vld [vmem:[#allocation9 + $0x108] sm:$0xff]
    %v2983 = vld [vmem:[#allocation9 + $0x110] sm:$0xff]
    %v2984 = vld [vmem:[#allocation9 + $0x118] sm:$0xff]
    %v2985 = vld [vmem:[#allocation9 + $0x120] sm:$0xff]
    %v2986 = vld [vmem:[#allocation9 + $0x128] sm:$0xff]
    %v2987 = vld [vmem:[#allocation9 + $0x130] sm:$0xff]
    %v2988 = vld [vmem:[#allocation9 + $0x138] sm:$0xff]
    %v2989 = vld [vmem:[#allocation9 + $0x140] sm:$0xff]
    %v2990 = vld [vmem:[#allocation9 + $0x148] sm:$0xff]
    %v2991 = vld [vmem:[#allocation9 + $0x150] sm:$0xff]
    %v2992 = vld [vmem:[#allocation9 + $0x158] sm:$0xff]
    %v2993 = vld [vmem:[#allocation9 + $0x160] sm:$0xff]
    %v2994 = vld [vmem:[#allocation9 + $0x168] sm:$0xff]
    %v2995 = vld [vmem:[#allocation9 + $0x170] sm:$0xff]
    %v2996 = vld [vmem:[#allocation9 + $0x178] sm:$0xff]
    %v2997 = vld [vmem:[#allocation9 + $0x180] sm:$0xff]
    %v2998 = vld [vmem:[#allocation9 + $0x188] sm:$0xff]
    %v2999 = vld [vmem:[#allocation9 + $0x190] sm:$0xff]
    %v3000 = vld [vmem:[#allocation9 + $0x198] sm:$0xff]
    %v3001 = vld [vmem:[#allocation9 + $0x1a0] sm:$0xff]
    %v3002 = vld [vmem:[#allocation9 + $0x1a8] sm:$0xff]
    %v3003 = vld [vmem:[#allocation9 + $0x1b0] sm:$0xff]
    %v3004 = vld [vmem:[#allocation9 + $0x1b8] sm:$0xff]
    %v3005 = vld [vmem:[#allocation9 + $0x1c0] sm:$0xff]
    %v3006 = vld [vmem:[#allocation9 + $0x1c8] sm:$0xff]
    %v3007 = vld [vmem:[#allocation9 + $0x1d0] sm:$0xff]
    %v3008 = vld [vmem:[#allocation9 + $0x1d8] sm:$0xff]
    %v3009 = vld [vmem:[#allocation9 + $0x1e0] sm:$0xff]
    %v3010 = vld [vmem:[#allocation9 + $0x1e8] sm:$0xff]
    %v3011 = vld [vmem:[#allocation9 + $0x1f0] sm:$0xff]
    %v3012 = vld [vmem:[#allocation9 + $0x1f8] sm:$0xff]
    %3013 = vmatpush.msra.mxu0 %v3009
    %3014 = vmatpush.msra.mxu0 %v3005
    %3015 = vmatpush.msra.mxu0 %v3001
    %3016 = vmatpush.msra.mxu0 %v2997
    %3017 = vmatpush.msra.mxu0 %v2993
    %3018 = vmatpush.msra.mxu0 %v2989
    %3019 = vmatpush.msra.mxu0 %v2985
    %3020 = vmatpush.msra.mxu0 %v2981
    %3021 = vmatpush.msra.mxu0 %v2977
    %3022 = vmatpush.msra.mxu0 %v2973
    %3023 = vmatpush.msra.mxu0 %v2969
    %3024 = vmatpush.msra.mxu0 %v2965
    %3025 = vmatpush.msra.mxu0 %v2961
    %3026 = vmatpush.msra.mxu0 %v2957
    %3027 = vmatpush.msra.mxu0 %v2953
    %3028 = vmatpush.msra.mxu0 %v2949
    %3029 = vmatmul.f32.gmra.mxu0 %v2590
    %v3030 = vpop.f32.mrf.mxu0
    %v3031 = vadd.f32 0.0, %v3030
    %3032 = vdwg.mxu0
    %3033 = vmatpush.msra.mxu0 %v3010
    %3034 = vmatpush.msra.mxu0 %v3006
    %3035 = vmatpush.msra.mxu0 %v3002
    %3036 = vmatpush.msra.mxu0 %v2998
    %3037 = vmatpush.msra.mxu0 %v2994
    %3038 = vmatpush.msra.mxu0 %v2990
    %3039 = vmatpush.msra.mxu0 %v2986
    %3040 = vmatpush.msra.mxu0 %v2982
    %3041 = vmatpush.msra.mxu0 %v2978
    %3042 = vmatpush.msra.mxu0 %v2974
    %3043 = vmatpush.msra.mxu0 %v2970
    %3044 = vmatpush.msra.mxu0 %v2966
    %3045 = vmatpush.msra.mxu0 %v2962
    %3046 = vmatpush.msra.mxu0 %v2958
    %3047 = vmatpush.msra.mxu0 %v2954
    %3048 = vmatpush.msra.mxu0 %v2950
    %3049 = vmatmul.f32.gmra.mxu0 %v2590
    %v3050 = vpop.f32.mrf.mxu0
    %v3051 = vadd.f32 0.0, %v3050
    %3052 = vdwg.mxu0
    %3053 = vmatpush.msra.mxu0 %v3011
    %3054 = vmatpush.msra.mxu0 %v3007
    %3055 = vmatpush.msra.mxu0 %v3003
    %3056 = vmatpush.msra.mxu0 %v2999
    %3057 = vmatpush.msra.mxu0 %v2995
    %3058 = vmatpush.msra.mxu0 %v2991
    %3059 = vmatpush.msra.mxu0 %v2987
    %3060 = vmatpush.msra.mxu0 %v2983
    %3061 = vmatpush.msra.mxu0 %v2979
    %3062 = vmatpush.msra.mxu0 %v2975
    %3063 = vmatpush.msra.mxu0 %v2971
    %3064 = vmatpush.msra.mxu0 %v2967
    %3065 = vmatpush.msra.mxu0 %v2963
    %3066 = vmatpush.msra.mxu0 %v2959
    %3067 = vmatpush.msra.mxu0 %v2955
    %3068 = vmatpush.msra.mxu0 %v2951
    %3069 = vmatmul.f32.gmra.mxu0 %v2590
    %v3070 = vpop.f32.mrf.mxu0
    %v3071 = vadd.f32 0.0, %v3070
    %3072 = vdwg.mxu0
    %3073 = vmatpush.msra.mxu0 %v3012
    %3074 = vmatpush.msra.mxu0 %v3008
    %3075 = vmatpush.msra.mxu0 %v3004
    %3076 = vmatpush.msra.mxu0 %v3000
    %3077 = vmatpush.msra.mxu0 %v2996
    %3078 = vmatpush.msra.mxu0 %v2992
    %3079 = vmatpush.msra.mxu0 %v2988
    %3080 = vmatpush.msra.mxu0 %v2984
    %3081 = vmatpush.msra.mxu0 %v2980
    %3082 = vmatpush.msra.mxu0 %v2976
    %3083 = vmatpush.msra.mxu0 %v2972
    %3084 = vmatpush.msra.mxu0 %v2968
    %3085 = vmatpush.msra.mxu0 %v2964
    %3086 = vmatpush.msra.mxu0 %v2960
    %3087 = vmatpush.msra.mxu0 %v2956
    %3088 = vmatpush.msra.mxu0 %v2952
    %3089 = vmatmul.f32.gmra.mxu0 %v2590
    %v3090 = vpop.f32.mrf.mxu0
    %v3091 = vadd.f32 0.0, %v3090
    %3092 = vdwg.mxu0
    %v3093 = vadd.f32 %v2945, %v3031
    %v3094 = vadd.f32 %v2946, %v3051
    %v3095 = vadd.f32 %v2947, %v3071
    %v3096 = vadd.f32 %v2948, %v3091
    %v3097 = vxor.u32 %v3093, 2147483648
    %v3098 = vmul.f32 %v3097, 1.442695
    %v3099 = vpow.pop %v3098
    %v3100 = vadd.f32 %v3099, 1.0
    %v3101 = vrcp.pop %v3100
    %v3102 = vmul.f32 %v3100, %v3101
    %v3103 = vsub.f32 1.0, %v3102
    %v3104 = vmul.f32 %v3101, %v3103
    %v3105 = vadd.f32 %v3101, %v3104
    %vm3106 = vweird.f32 %v3100
    %vm3107 = vweird.f32 %v3101
    %vm3108 = vmor %vm3106, %vm3107
    %v3109 = vsel %vm3108, %v3101, %v3105
    %v3110 = vand.u32 2147483647, %v3100
    %vm3111 = vcmp.eq.f32.partialorder %v3110, 8.507059e+37
    %v3112 = vand.u32 %v3100, 2147483648
    %v3113 = vor.u32 1.1754944e-38, %v3112
    %v3114 = vsel %vm3111, %v3113, %v3109
    %v3115 = vmul.f32 1.0, %v3114
    %v3116 = vxor.u32 %v3094, 2147483648
    %v3117 = vmul.f32 %v3116, 1.442695
    %v3118 = vpow.pop %v3117
    %v3119 = vadd.f32 %v3118, 1.0
    %v3120 = vrcp.pop %v3119
    %v3121 = vmul.f32 %v3119, %v3120
    %v3122 = vsub.f32 1.0, %v3121
    %v3123 = vmul.f32 %v3120, %v3122
    %v3124 = vadd.f32 %v3120, %v3123
    %vm3125 = vweird.f32 %v3119
    %vm3126 = vweird.f32 %v3120
    %vm3127 = vmor %vm3125, %vm3126
    %v3128 = vsel %vm3127, %v3120, %v3124
    %v3129 = vand.u32 2147483647, %v3119
    %vm3130 = vcmp.eq.f32.partialorder %v3129, 8.507059e+37
    %v3131 = vand.u32 %v3119, 2147483648
    %v3132 = vor.u32 1.1754944e-38, %v3131
    %v3133 = vsel %vm3130, %v3132, %v3128
    %v3134 = vmul.f32 1.0, %v3133
    %v3135 = vtanh.pop %v3095
    %v3136 = vxor.u32 %v3096, 2147483648
    %v3137 = vmul.f32 %v3136, 1.442695
    %v3138 = vpow.pop %v3137
    %v3139 = vadd.f32 %v3138, 1.0
    %v3140 = vrcp.pop %v3139
    %v3141 = vmul.f32 %v3139, %v3140
    %v3142 = vsub.f32 1.0, %v3141
    %v3143 = vmul.f32 %v3140, %v3142
    %v3144 = vadd.f32 %v3140, %v3143
    %vm3145 = vweird.f32 %v3139
    %vm3146 = vweird.f32 %v3140
    %vm3147 = vmor %vm3145, %vm3146
    %v3148 = vsel %vm3147, %v3140, %v3144
    %v3149 = vand.u32 2147483647, %v3139
    %vm3150 = vcmp.eq.f32.partialorder %v3149, 8.507059e+37
    %v3151 = vand.u32 %v3139, 2147483648
    %v3152 = vor.u32 1.1754944e-38, %v3151
    %v3153 = vsel %vm3150, %v3152, %v3148
    %v3154 = vmul.f32 1.0, %v3153
    %v3155 = vmul.f32 %v3134, %v2588
    %v3156 = vmul.f32 %v3115, %v3135
    %v3157 = vadd.f32 %v3155, %v3156
    %v3158 = vtanh.pop %v3157
    %v3159 = vmul.f32 %v3154, %v3158
    %v3160 = vld [vmem:[#allocation11] sm:$0xff]
    %v3161 = vld [vmem:[#allocation11 + $0x8] sm:$0xff]
    %v3162 = vld [vmem:[#allocation11 + $0x10] sm:$0xff]
    %v3163 = vld [vmem:[#allocation11 + $0x18] sm:$0xff]
    %v3164 = vld [vmem:[#allocation11 + $0x20] sm:$0xff]
    %v3165 = vld [vmem:[#allocation11 + $0x28] sm:$0xff]
    %v3166 = vld [vmem:[#allocation11 + $0x30] sm:$0xff]
    %v3167 = vld [vmem:[#allocation11 + $0x38] sm:$0xff]
    %v3168 = vld [vmem:[#allocation11 + $0x40] sm:$0xff]
    %v3169 = vld [vmem:[#allocation11 + $0x48] sm:$0xff]
    %v3170 = vld [vmem:[#allocation11 + $0x50] sm:$0xff]
    %v3171 = vld [vmem:[#allocation11 + $0x58] sm:$0xff]
    %v3172 = vld [vmem:[#allocation11 + $0x60] sm:$0xff]
    %v3173 = vld [vmem:[#allocation11 + $0x68] sm:$0xff]
    %v3174 = vld [vmem:[#allocation11 + $0x70] sm:$0xff]
    %v3175 = vld [vmem:[#allocation11 + $0x78] sm:$0xff]
    %v3176 = vld [vmem:[#allocation11 + $0x80] sm:$0xff]
    %v3177 = vld [vmem:[#allocation11 + $0x88] sm:$0xff]
    %v3178 = vld [vmem:[#allocation11 + $0x90] sm:$0xff]
    %v3179 = vld [vmem:[#allocation11 + $0x98] sm:$0xff]
    %v3180 = vld [vmem:[#allocation11 + $0xa0] sm:$0xff]
    %v3181 = vld [vmem:[#allocation11 + $0xa8] sm:$0xff]
    %v3182 = vld [vmem:[#allocation11 + $0xb0] sm:$0xff]
    %v3183 = vld [vmem:[#allocation11 + $0xb8] sm:$0xff]
    %v3184 = vld [vmem:[#allocation11 + $0xc0] sm:$0xff]
    %v3185 = vld [vmem:[#allocation11 + $0xc8] sm:$0xff]
    %v3186 = vld [vmem:[#allocation11 + $0xd0] sm:$0xff]
    %v3187 = vld [vmem:[#allocation11 + $0xd8] sm:$0xff]
    %v3188 = vld [vmem:[#allocation11 + $0xe0] sm:$0xff]
    %v3189 = vld [vmem:[#allocation11 + $0xe8] sm:$0xff]
    %v3190 = vld [vmem:[#allocation11 + $0xf0] sm:$0xff]
    %v3191 = vld [vmem:[#allocation11 + $0xf8] sm:$0xff]
    %v3192 = vld [vmem:[#allocation11 + $0x100] sm:$0xff]
    %v3193 = vld [vmem:[#allocation11 + $0x108] sm:$0xff]
    %v3194 = vld [vmem:[#allocation11 + $0x110] sm:$0xff]
    %v3195 = vld [vmem:[#allocation11 + $0x118] sm:$0xff]
    %v3196 = vld [vmem:[#allocation11 + $0x120] sm:$0xff]
    %v3197 = vld [vmem:[#allocation11 + $0x128] sm:$0xff]
    %v3198 = vld [vmem:[#allocation11 + $0x130] sm:$0xff]
    %v3199 = vld [vmem:[#allocation11 + $0x138] sm:$0xff]
    %v3200 = vld [vmem:[#allocation11 + $0x140] sm:$0xff]
    %v3201 = vld [vmem:[#allocation11 + $0x148] sm:$0xff]
    %v3202 = vld [vmem:[#allocation11 + $0x150] sm:$0xff]
    %v3203 = vld [vmem:[#allocation11 + $0x158] sm:$0xff]
    %v3204 = vld [vmem:[#allocation11 + $0x160] sm:$0xff]
    %v3205 = vld [vmem:[#allocation11 + $0x168] sm:$0xff]
    %v3206 = vld [vmem:[#allocation11 + $0x170] sm:$0xff]
    %v3207 = vld [vmem:[#allocation11 + $0x178] sm:$0xff]
    %v3208 = vld [vmem:[#allocation11 + $0x180] sm:$0xff]
    %v3209 = vld [vmem:[#allocation11 + $0x188] sm:$0xff]
    %v3210 = vld [vmem:[#allocation11 + $0x190] sm:$0xff]
    %v3211 = vld [vmem:[#allocation11 + $0x198] sm:$0xff]
    %v3212 = vld [vmem:[#allocation11 + $0x1a0] sm:$0xff]
    %v3213 = vld [vmem:[#allocation11 + $0x1a8] sm:$0xff]
    %v3214 = vld [vmem:[#allocation11 + $0x1b0] sm:$0xff]
    %v3215 = vld [vmem:[#allocation11 + $0x1b8] sm:$0xff]
    %v3216 = vld [vmem:[#allocation11 + $0x1c0] sm:$0xff]
    %v3217 = vld [vmem:[#allocation11 + $0x1c8] sm:$0xff]
    %v3218 = vld [vmem:[#allocation11 + $0x1d0] sm:$0xff]
    %v3219 = vld [vmem:[#allocation11 + $0x1d8] sm:$0xff]
    %v3220 = vld [vmem:[#allocation11 + $0x1e0] sm:$0xff]
    %v3221 = vld [vmem:[#allocation11 + $0x1e8] sm:$0xff]
    %v3222 = vld [vmem:[#allocation11 + $0x1f0] sm:$0xff]
    %v3223 = vld [vmem:[#allocation11 + $0x1f8] sm:$0xff]
    %v3224 = vld [vmem:[#allocation11 + $0x200] sm:$0xff]
    %v3225 = vld [vmem:[#allocation11 + $0x208] sm:$0xff]
    %v3226 = vld [vmem:[#allocation11 + $0x210] sm:$0xff]
    %v3227 = vld [vmem:[#allocation11 + $0x218] sm:$0xff]
    %v3228 = vld [vmem:[#allocation11 + $0x220] sm:$0xff]
    %v3229 = vld [vmem:[#allocation11 + $0x228] sm:$0xff]
    %v3230 = vld [vmem:[#allocation11 + $0x230] sm:$0xff]
    %v3231 = vld [vmem:[#allocation11 + $0x238] sm:$0xff]
    %v3232 = vld [vmem:[#allocation11 + $0x240] sm:$0xff]
    %v3233 = vld [vmem:[#allocation11 + $0x248] sm:$0xff]
    %v3234 = vld [vmem:[#allocation11 + $0x250] sm:$0xff]
    %v3235 = vld [vmem:[#allocation11 + $0x258] sm:$0xff]
    %v3236 = vld [vmem:[#allocation11 + $0x260] sm:$0xff]
    %v3237 = vld [vmem:[#allocation11 + $0x268] sm:$0xff]
    %v3238 = vld [vmem:[#allocation11 + $0x270] sm:$0xff]
    %v3239 = vld [vmem:[#allocation11 + $0x278] sm:$0xff]
    %v3240 = vld [vmem:[#allocation11 + $0x280] sm:$0xff]
    %v3241 = vld [vmem:[#allocation11 + $0x288] sm:$0xff]
    %v3242 = vld [vmem:[#allocation11 + $0x290] sm:$0xff]
    %v3243 = vld [vmem:[#allocation11 + $0x298] sm:$0xff]
    %v3244 = vld [vmem:[#allocation11 + $0x2a0] sm:$0xff]
    %v3245 = vld [vmem:[#allocation11 + $0x2a8] sm:$0xff]
    %v3246 = vld [vmem:[#allocation11 + $0x2b0] sm:$0xff]
    %v3247 = vld [vmem:[#allocation11 + $0x2b8] sm:$0xff]
    %v3248 = vld [vmem:[#allocation11 + $0x2c0] sm:$0xff]
    %v3249 = vld [vmem:[#allocation11 + $0x2c8] sm:$0xff]
    %v3250 = vld [vmem:[#allocation11 + $0x2d0] sm:$0xff]
    %v3251 = vld [vmem:[#allocation11 + $0x2d8] sm:$0xff]
    %v3252 = vld [vmem:[#allocation11 + $0x2e0] sm:$0xff]
    %v3253 = vld [vmem:[#allocation11 + $0x2e8] sm:$0xff]
    %v3254 = vld [vmem:[#allocation11 + $0x2f0] sm:$0xff]
    %v3255 = vld [vmem:[#allocation11 + $0x2f8] sm:$0xff]
    %v3256 = vld [vmem:[#allocation11 + $0x300] sm:$0xff]
    %v3257 = vld [vmem:[#allocation11 + $0x308] sm:$0xff]
    %v3258 = vld [vmem:[#allocation11 + $0x310] sm:$0xff]
    %v3259 = vld [vmem:[#allocation11 + $0x318] sm:$0xff]
    %v3260 = vld [vmem:[#allocation11 + $0x320] sm:$0xff]
    %v3261 = vld [vmem:[#allocation11 + $0x328] sm:$0xff]
    %v3262 = vld [vmem:[#allocation11 + $0x330] sm:$0xff]
    %v3263 = vld [vmem:[#allocation11 + $0x338] sm:$0xff]
    %v3264 = vld [vmem:[#allocation11 + $0x340] sm:$0xff]
    %v3265 = vld [vmem:[#allocation11 + $0x348] sm:$0xff]
    %v3266 = vld [vmem:[#allocation11 + $0x350] sm:$0xff]
    %v3267 = vld [vmem:[#allocation11 + $0x358] sm:$0xff]
    %v3268 = vld [vmem:[#allocation11 + $0x360] sm:$0xff]
    %v3269 = vld [vmem:[#allocation11 + $0x368] sm:$0xff]
    %v3270 = vld [vmem:[#allocation11 + $0x370] sm:$0xff]
    %v3271 = vld [vmem:[#allocation11 + $0x378] sm:$0xff]
    %v3272 = vld [vmem:[#allocation11 + $0x380] sm:$0xff]
    %v3273 = vld [vmem:[#allocation11 + $0x388] sm:$0xff]
    %v3274 = vld [vmem:[#allocation11 + $0x390] sm:$0xff]
    %v3275 = vld [vmem:[#allocation11 + $0x398] sm:$0xff]
    %v3276 = vld [vmem:[#allocation11 + $0x3a0] sm:$0xff]
    %v3277 = vld [vmem:[#allocation11 + $0x3a8] sm:$0xff]
    %v3278 = vld [vmem:[#allocation11 + $0x3b0] sm:$0xff]
    %v3279 = vld [vmem:[#allocation11 + $0x3b8] sm:$0xff]
    %v3280 = vld [vmem:[#allocation11 + $0x3c0] sm:$0xff]
    %v3281 = vld [vmem:[#allocation11 + $0x3c8] sm:$0xff]
    %v3282 = vld [vmem:[#allocation11 + $0x3d0] sm:$0xff]
    %v3283 = vld [vmem:[#allocation11 + $0x3d8] sm:$0xff]
    %v3284 = vld [vmem:[#allocation11 + $0x3e0] sm:$0xff]
    %v3285 = vld [vmem:[#allocation11 + $0x3e8] sm:$0xff]
    %v3286 = vld [vmem:[#allocation11 + $0x3f0] sm:$0xff]
    %v3287 = vld [vmem:[#allocation11 + $0x3f8] sm:$0xff]
    %3288 = vmatpush.msra.mxu0 %v3220
    %3289 = vmatpush.msra.mxu0 %v3216
    %3290 = vmatpush.msra.mxu0 %v3212
    %3291 = vmatpush.msra.mxu0 %v3208
    %3292 = vmatpush.msra.mxu0 %v3204
    %3293 = vmatpush.msra.mxu0 %v3200
    %3294 = vmatpush.msra.mxu0 %v3196
    %3295 = vmatpush.msra.mxu0 %v3192
    %3296 = vmatpush.msra.mxu0 %v3188
    %3297 = vmatpush.msra.mxu0 %v3184
    %3298 = vmatpush.msra.mxu0 %v3180
    %3299 = vmatpush.msra.mxu0 %v3176
    %3300 = vmatpush.msra.mxu0 %v3172
    %3301 = vmatpush.msra.mxu0 %v3168
    %3302 = vmatpush.msra.mxu0 %v3164
    %3303 = vmatpush.msra.mxu0 %v3160
    %3304 = vmatmul.f32.gmra.mxu0 %v3159
    %v3305 = vpop.f32.mrf.mxu0
    %v3306 = vadd.f32 %v89, %v3305
    %3307 = vdwg.mxu0
    %3308 = vmatpush.msra.mxu0 %v3284
    %3309 = vmatpush.msra.mxu0 %v3280
    %3310 = vmatpush.msra.mxu0 %v3276
    %3311 = vmatpush.msra.mxu0 %v3272
    %3312 = vmatpush.msra.mxu0 %v3268
    %3313 = vmatpush.msra.mxu0 %v3264
    %3314 = vmatpush.msra.mxu0 %v3260
    %3315 = vmatpush.msra.mxu0 %v3256
    %3316 = vmatpush.msra.mxu0 %v3252
    %3317 = vmatpush.msra.mxu0 %v3248
    %3318 = vmatpush.msra.mxu0 %v3244
    %3319 = vmatpush.msra.mxu0 %v3240
    %3320 = vmatpush.msra.mxu0 %v3236
    %3321 = vmatpush.msra.mxu0 %v3232
    %3322 = vmatpush.msra.mxu0 %v3228
    %3323 = vmatpush.msra.mxu0 %v3224
    %3324 = vmatmul.f32.gmra.mxu0 %v2941
    %v3325 = vpop.f32.mrf.mxu0
    %v3326 = vadd.f32 %v3306, %v3325
    %3327 = vdwg.mxu0
    %3328 = vmatpush.msra.mxu0 %v3221
    %3329 = vmatpush.msra.mxu0 %v3217
    %3330 = vmatpush.msra.mxu0 %v3213
    %3331 = vmatpush.msra.mxu0 %v3209
    %3332 = vmatpush.msra.mxu0 %v3205
    %3333 = vmatpush.msra.mxu0 %v3201
    %3334 = vmatpush.msra.mxu0 %v3197
    %3335 = vmatpush.msra.mxu0 %v3193
    %3336 = vmatpush.msra.mxu0 %v3189
    %3337 = vmatpush.msra.mxu0 %v3185
    %3338 = vmatpush.msra.mxu0 %v3181
    %3339 = vmatpush.msra.mxu0 %v3177
    %3340 = vmatpush.msra.mxu0 %v3173
    %3341 = vmatpush.msra.mxu0 %v3169
    %3342 = vmatpush.msra.mxu0 %v3165
    %3343 = vmatpush.msra.mxu0 %v3161
    %3344 = vmatmul.f32.gmra.mxu0 %v3159
    %v3345 = vpop.f32.mrf.mxu0
    %v3346 = vadd.f32 %v90, %v3345
    %3347 = vdwg.mxu0
    %3348 = vmatpush.msra.mxu0 %v3285
    %3349 = vmatpush.msra.mxu0 %v3281
    %3350 = vmatpush.msra.mxu0 %v3277
    %3351 = vmatpush.msra.mxu0 %v3273
    %3352 = vmatpush.msra.mxu0 %v3269
    %3353 = vmatpush.msra.mxu0 %v3265
    %3354 = vmatpush.msra.mxu0 %v3261
    %3355 = vmatpush.msra.mxu0 %v3257
    %3356 = vmatpush.msra.mxu0 %v3253
    %3357 = vmatpush.msra.mxu0 %v3249
    %3358 = vmatpush.msra.mxu0 %v3245
    %3359 = vmatpush.msra.mxu0 %v3241
    %3360 = vmatpush.msra.mxu0 %v3237
    %3361 = vmatpush.msra.mxu0 %v3233
    %3362 = vmatpush.msra.mxu0 %v3229
    %3363 = vmatpush.msra.mxu0 %v3225
    %3364 = vmatmul.f32.gmra.mxu0 %v2941
    %v3365 = vpop.f32.mrf.mxu0
    %v3366 = vadd.f32 %v3346, %v3365
    %3367 = vdwg.mxu0
    %3368 = vmatpush.msra.mxu0 %v3222
    %3369 = vmatpush.msra.mxu0 %v3218
    %3370 = vmatpush.msra.mxu0 %v3214
    %3371 = vmatpush.msra.mxu0 %v3210
    %3372 = vmatpush.msra.mxu0 %v3206
    %3373 = vmatpush.msra.mxu0 %v3202
    %3374 = vmatpush.msra.mxu0 %v3198
    %3375 = vmatpush.msra.mxu0 %v3194
    %3376 = vmatpush.msra.mxu0 %v3190
    %3377 = vmatpush.msra.mxu0 %v3186
    %3378 = vmatpush.msra.mxu0 %v3182
    %3379 = vmatpush.msra.mxu0 %v3178
    %3380 = vmatpush.msra.mxu0 %v3174
    %3381 = vmatpush.msra.mxu0 %v3170
    %3382 = vmatpush.msra.mxu0 %v3166
    %3383 = vmatpush.msra.mxu0 %v3162
    %3384 = vmatmul.f32.gmra.mxu0 %v3159
    %v3385 = vpop.f32.mrf.mxu0
    %v3386 = vadd.f32 %v91, %v3385
    %3387 = vdwg.mxu0
    %3388 = vmatpush.msra.mxu0 %v3286
    %3389 = vmatpush.msra.mxu0 %v3282
    %3390 = vmatpush.msra.mxu0 %v3278
    %3391 = vmatpush.msra.mxu0 %v3274
    %3392 = vmatpush.msra.mxu0 %v3270
    %3393 = vmatpush.msra.mxu0 %v3266
    %3394 = vmatpush.msra.mxu0 %v3262
    %3395 = vmatpush.msra.mxu0 %v3258
    %3396 = vmatpush.msra.mxu0 %v3254
    %3397 = vmatpush.msra.mxu0 %v3250
    %3398 = vmatpush.msra.mxu0 %v3246
    %3399 = vmatpush.msra.mxu0 %v3242
    %3400 = vmatpush.msra.mxu0 %v3238
    %3401 = vmatpush.msra.mxu0 %v3234
    %3402 = vmatpush.msra.mxu0 %v3230
    %3403 = vmatpush.msra.mxu0 %v3226
    %3404 = vmatmul.f32.gmra.mxu0 %v2941
    %v3405 = vpop.f32.mrf.mxu0
    %v3406 = vadd.f32 %v3386, %v3405
    %3407 = vdwg.mxu0
    %3408 = vmatpush.msra.mxu0 %v3223
    %3409 = vmatpush.msra.mxu0 %v3219
    %3410 = vmatpush.msra.mxu0 %v3215
    %3411 = vmatpush.msra.mxu0 %v3211
    %3412 = vmatpush.msra.mxu0 %v3207
    %3413 = vmatpush.msra.mxu0 %v3203
    %3414 = vmatpush.msra.mxu0 %v3199
    %3415 = vmatpush.msra.mxu0 %v3195
    %3416 = vmatpush.msra.mxu0 %v3191
    %3417 = vmatpush.msra.mxu0 %v3187
    %3418 = vmatpush.msra.mxu0 %v3183
    %3419 = vmatpush.msra.mxu0 %v3179
    %3420 = vmatpush.msra.mxu0 %v3175
    %3421 = vmatpush.msra.mxu0 %v3171
    %3422 = vmatpush.msra.mxu0 %v3167
    %3423 = vmatpush.msra.mxu0 %v3163
    %3424 = vmatmul.f32.gmra.mxu0 %v3159
    %v3425 = vpop.f32.mrf.mxu0
    %v3426 = vadd.f32 %v92, %v3425
    %3427 = vdwg.mxu0
    %3428 = vmatpush.msra.mxu0 %v3287
    %3429 = vmatpush.msra.mxu0 %v3283
    %3430 = vmatpush.msra.mxu0 %v3279
    %3431 = vmatpush.msra.mxu0 %v3275
    %3432 = vmatpush.msra.mxu0 %v3271
    %3433 = vmatpush.msra.mxu0 %v3267
    %3434 = vmatpush.msra.mxu0 %v3263
    %3435 = vmatpush.msra.mxu0 %v3259
    %3436 = vmatpush.msra.mxu0 %v3255
    %3437 = vmatpush.msra.mxu0 %v3251
    %3438 = vmatpush.msra.mxu0 %v3247
    %3439 = vmatpush.msra.mxu0 %v3243
    %3440 = vmatpush.msra.mxu0 %v3239
    %3441 = vmatpush.msra.mxu0 %v3235
    %3442 = vmatpush.msra.mxu0 %v3231
    %3443 = vmatpush.msra.mxu0 %v3227
    %3444 = vmatmul.f32.gmra.mxu0 %v2941
    %v3445 = vpop.f32.mrf.mxu0
    %v3446 = vadd.f32 %v3426, %v3445
    %3447 = vdwg.mxu0
    %v3448 = vxor.u32 %v3326, 2147483648
    %v3449 = vmul.f32 %v3448, 1.442695
    %v3450 = vpow.pop %v3449
    %v3451 = vadd.f32 %v3450, 1.0
    %v3452 = vrcp.pop %v3451
    %v3453 = vmul.f32 %v3451, %v3452
    %v3454 = vsub.f32 1.0, %v3453
    %v3455 = vmul.f32 %v3452, %v3454
    %v3456 = vadd.f32 %v3452, %v3455
    %vm3457 = vweird.f32 %v3451
    %vm3458 = vweird.f32 %v3452
    %vm3459 = vmor %vm3457, %vm3458
    %v3460 = vsel %vm3459, %v3452, %v3456
    %v3461 = vand.u32 2147483647, %v3451
    %vm3462 = vcmp.eq.f32.partialorder %v3461, 8.507059e+37
    %v3463 = vand.u32 %v3451, 2147483648
    %v3464 = vor.u32 1.1754944e-38, %v3463
    %v3465 = vsel %vm3462, %v3464, %v3460
    %v3466 = vmul.f32 1.0, %v3465
    %v3467 = vxor.u32 %v3366, 2147483648
    %v3468 = vmul.f32 %v3467, 1.442695
    %v3469 = vpow.pop %v3468
    %v3470 = vadd.f32 %v3469, 1.0
    %v3471 = vrcp.pop %v3470
    %v3472 = vmul.f32 %v3470, %v3471
    %v3473 = vsub.f32 1.0, %v3472
    %v3474 = vmul.f32 %v3471, %v3473
    %v3475 = vadd.f32 %v3471, %v3474
    %vm3476 = vweird.f32 %v3470
    %vm3477 = vweird.f32 %v3471
    %vm3478 = vmor %vm3476, %vm3477
    %v3479 = vsel %vm3478, %v3471, %v3475
    %v3480 = vand.u32 2147483647, %v3470
    %vm3481 = vcmp.eq.f32.partialorder %v3480, 8.507059e+37
    %v3482 = vand.u32 %v3470, 2147483648
    %v3483 = vor.u32 1.1754944e-38, %v3482
    %v3484 = vsel %vm3481, %v3483, %v3479
    %v3485 = vmul.f32 1.0, %v3484
    %v3486 = vtanh.pop %v3406
    %v3487 = vxor.u32 %v3446, 2147483648
    %v3488 = vmul.f32 %v3487, 1.442695
    %v3489 = vpow.pop %v3488
    %v3490 = vadd.f32 %v3489, 1.0
    %v3491 = vrcp.pop %v3490
    %v3492 = vmul.f32 %v3490, %v3491
    %v3493 = vsub.f32 1.0, %v3492
    %v3494 = vmul.f32 %v3491, %v3493
    %v3495 = vadd.f32 %v3491, %v3494
    %vm3496 = vweird.f32 %v3490
    %vm3497 = vweird.f32 %v3491
    %vm3498 = vmor %vm3496, %vm3497
    %v3499 = vsel %vm3498, %v3491, %v3495
    %v3500 = vand.u32 2147483647, %v3490
    %vm3501 = vcmp.eq.f32.partialorder %v3500, 8.507059e+37
    %v3502 = vand.u32 %v3490, 2147483648
    %v3503 = vor.u32 1.1754944e-38, %v3502
    %v3504 = vsel %vm3501, %v3503, %v3499
    %v3505 = vmul.f32 1.0, %v3504
    %v3506 = vmul.f32 %v3485, %v2939
    %v3507 = vmul.f32 %v3466, %v3486
    %v3508 = vadd.f32 %v3506, %v3507
    %v3509 = vtanh.pop %v3508
    %v3510 = vmul.f32 %v3505, %v3509
    %s3511 = scalar_lea.vmem [#allocation14], 40
    %3512 = vst [vmem:[%s3511] sm:$0xff] %v3510
    %s3513 = scalar_lea.vmem [#allocation6], 192
    %v3514 = vld [vmem:[%s3513] sm:$0xff]
    %v3515 = vld [vmem:[%s3513 + $0x8] sm:$0xff]
    %v3516 = vld [vmem:[%s3513 + $0x10] sm:$0xff]
    %v3517 = vld [vmem:[%s3513 + $0x18] sm:$0xff]
    %v3518 = vld [vmem:[#allocation9] sm:$0xff]
    %v3519 = vld [vmem:[#allocation9 + $0x8] sm:$0xff]
    %v3520 = vld [vmem:[#allocation9 + $0x10] sm:$0xff]
    %v3521 = vld [vmem:[#allocation9 + $0x18] sm:$0xff]
    %v3522 = vld [vmem:[#allocation9 + $0x20] sm:$0xff]
    %v3523 = vld [vmem:[#allocation9 + $0x28] sm:$0xff]
    %v3524 = vld [vmem:[#allocation9 + $0x30] sm:$0xff]
    %v3525 = vld [vmem:[#allocation9 + $0x38] sm:$0xff]
    %v3526 = vld [vmem:[#allocation9 + $0x40] sm:$0xff]
    %v3527 = vld [vmem:[#allocation9 + $0x48] sm:$0xff]
    %v3528 = vld [vmem:[#allocation9 + $0x50] sm:$0xff]
    %v3529 = vld [vmem:[#allocation9 + $0x58] sm:$0xff]
    %v3530 = vld [vmem:[#allocation9 + $0x60] sm:$0xff]
    %v3531 = vld [vmem:[#allocation9 + $0x68] sm:$0xff]
    %v3532 = vld [vmem:[#allocation9 + $0x70] sm:$0xff]
    %v3533 = vld [vmem:[#allocation9 + $0x78] sm:$0xff]
    %v3534 = vld [vmem:[#allocation9 + $0x80] sm:$0xff]
    %v3535 = vld [vmem:[#allocation9 + $0x88] sm:$0xff]
    %v3536 = vld [vmem:[#allocation9 + $0x90] sm:$0xff]
    %v3537 = vld [vmem:[#allocation9 + $0x98] sm:$0xff]
    %v3538 = vld [vmem:[#allocation9 + $0xa0] sm:$0xff]
    %v3539 = vld [vmem:[#allocation9 + $0xa8] sm:$0xff]
    %v3540 = vld [vmem:[#allocation9 + $0xb0] sm:$0xff]
    %v3541 = vld [vmem:[#allocation9 + $0xb8] sm:$0xff]
    %v3542 = vld [vmem:[#allocation9 + $0xc0] sm:$0xff]
    %v3543 = vld [vmem:[#allocation9 + $0xc8] sm:$0xff]
    %v3544 = vld [vmem:[#allocation9 + $0xd0] sm:$0xff]
    %v3545 = vld [vmem:[#allocation9 + $0xd8] sm:$0xff]
    %v3546 = vld [vmem:[#allocation9 + $0xe0] sm:$0xff]
    %v3547 = vld [vmem:[#allocation9 + $0xe8] sm:$0xff]
    %v3548 = vld [vmem:[#allocation9 + $0xf0] sm:$0xff]
    %v3549 = vld [vmem:[#allocation9 + $0xf8] sm:$0xff]
    %v3550 = vld [vmem:[#allocation9 + $0x100] sm:$0xff]
    %v3551 = vld [vmem:[#allocation9 + $0x108] sm:$0xff]
    %v3552 = vld [vmem:[#allocation9 + $0x110] sm:$0xff]
    %v3553 = vld [vmem:[#allocation9 + $0x118] sm:$0xff]
    %v3554 = vld [vmem:[#allocation9 + $0x120] sm:$0xff]
    %v3555 = vld [vmem:[#allocation9 + $0x128] sm:$0xff]
    %v3556 = vld [vmem:[#allocation9 + $0x130] sm:$0xff]
    %v3557 = vld [vmem:[#allocation9 + $0x138] sm:$0xff]
    %v3558 = vld [vmem:[#allocation9 + $0x140] sm:$0xff]
    %v3559 = vld [vmem:[#allocation9 + $0x148] sm:$0xff]
    %v3560 = vld [vmem:[#allocation9 + $0x150] sm:$0xff]
    %v3561 = vld [vmem:[#allocation9 + $0x158] sm:$0xff]
    %v3562 = vld [vmem:[#allocation9 + $0x160] sm:$0xff]
    %v3563 = vld [vmem:[#allocation9 + $0x168] sm:$0xff]
    %v3564 = vld [vmem:[#allocation9 + $0x170] sm:$0xff]
    %v3565 = vld [vmem:[#allocation9 + $0x178] sm:$0xff]
    %v3566 = vld [vmem:[#allocation9 + $0x180] sm:$0xff]
    %v3567 = vld [vmem:[#allocation9 + $0x188] sm:$0xff]
    %v3568 = vld [vmem:[#allocation9 + $0x190] sm:$0xff]
    %v3569 = vld [vmem:[#allocation9 + $0x198] sm:$0xff]
    %v3570 = vld [vmem:[#allocation9 + $0x1a0] sm:$0xff]
    %v3571 = vld [vmem:[#allocation9 + $0x1a8] sm:$0xff]
    %v3572 = vld [vmem:[#allocation9 + $0x1b0] sm:$0xff]
    %v3573 = vld [vmem:[#allocation9 + $0x1b8] sm:$0xff]
    %v3574 = vld [vmem:[#allocation9 + $0x1c0] sm:$0xff]
    %v3575 = vld [vmem:[#allocation9 + $0x1c8] sm:$0xff]
    %v3576 = vld [vmem:[#allocation9 + $0x1d0] sm:$0xff]
    %v3577 = vld [vmem:[#allocation9 + $0x1d8] sm:$0xff]
    %v3578 = vld [vmem:[#allocation9 + $0x1e0] sm:$0xff]
    %v3579 = vld [vmem:[#allocation9 + $0x1e8] sm:$0xff]
    %v3580 = vld [vmem:[#allocation9 + $0x1f0] sm:$0xff]
    %v3581 = vld [vmem:[#allocation9 + $0x1f8] sm:$0xff]
    %3582 = vmatpush.msra.mxu0 %v3578
    %3583 = vmatpush.msra.mxu0 %v3574
    %3584 = vmatpush.msra.mxu0 %v3570
    %3585 = vmatpush.msra.mxu0 %v3566
    %3586 = vmatpush.msra.mxu0 %v3562
    %3587 = vmatpush.msra.mxu0 %v3558
    %3588 = vmatpush.msra.mxu0 %v3554
    %3589 = vmatpush.msra.mxu0 %v3550
    %3590 = vmatpush.msra.mxu0 %v3546
    %3591 = vmatpush.msra.mxu0 %v3542
    %3592 = vmatpush.msra.mxu0 %v3538
    %3593 = vmatpush.msra.mxu0 %v3534
    %3594 = vmatpush.msra.mxu0 %v3530
    %3595 = vmatpush.msra.mxu0 %v3526
    %3596 = vmatpush.msra.mxu0 %v3522
    %3597 = vmatpush.msra.mxu0 %v3518
    %3598 = vmatmul.f32.gmra.mxu0 %v3159
    %v3599 = vpop.f32.mrf.mxu0
    %v3600 = vadd.f32 0.0, %v3599
    %3601 = vdwg.mxu0
    %3602 = vmatpush.msra.mxu0 %v3579
    %3603 = vmatpush.msra.mxu0 %v3575
    %3604 = vmatpush.msra.mxu0 %v3571
    %3605 = vmatpush.msra.mxu0 %v3567
    %3606 = vmatpush.msra.mxu0 %v3563
    %3607 = vmatpush.msra.mxu0 %v3559
    %3608 = vmatpush.msra.mxu0 %v3555
    %3609 = vmatpush.msra.mxu0 %v3551
    %3610 = vmatpush.msra.mxu0 %v3547
    %3611 = vmatpush.msra.mxu0 %v3543
    %3612 = vmatpush.msra.mxu0 %v3539
    %3613 = vmatpush.msra.mxu0 %v3535
    %3614 = vmatpush.msra.mxu0 %v3531
    %3615 = vmatpush.msra.mxu0 %v3527
    %3616 = vmatpush.msra.mxu0 %v3523
    %3617 = vmatpush.msra.mxu0 %v3519
    %3618 = vmatmul.f32.gmra.mxu0 %v3159
    %v3619 = vpop.f32.mrf.mxu0
    %v3620 = vadd.f32 0.0, %v3619
    %3621 = vdwg.mxu0
    %3622 = vmatpush.msra.mxu0 %v3580
    %3623 = vmatpush.msra.mxu0 %v3576
    %3624 = vmatpush.msra.mxu0 %v3572
    %3625 = vmatpush.msra.mxu0 %v3568
    %3626 = vmatpush.msra.mxu0 %v3564
    %3627 = vmatpush.msra.mxu0 %v3560
    %3628 = vmatpush.msra.mxu0 %v3556
    %3629 = vmatpush.msra.mxu0 %v3552
    %3630 = vmatpush.msra.mxu0 %v3548
    %3631 = vmatpush.msra.mxu0 %v3544
    %3632 = vmatpush.msra.mxu0 %v3540
    %3633 = vmatpush.msra.mxu0 %v3536
    %3634 = vmatpush.msra.mxu0 %v3532
    %3635 = vmatpush.msra.mxu0 %v3528
    %3636 = vmatpush.msra.mxu0 %v3524
    %3637 = vmatpush.msra.mxu0 %v3520
    %3638 = vmatmul.f32.gmra.mxu0 %v3159
    %v3639 = vpop.f32.mrf.mxu0
    %v3640 = vadd.f32 0.0, %v3639
    %3641 = vdwg.mxu0
    %3642 = vmatpush.msra.mxu0 %v3581
    %3643 = vmatpush.msra.mxu0 %v3577
    %3644 = vmatpush.msra.mxu0 %v3573
    %3645 = vmatpush.msra.mxu0 %v3569
    %3646 = vmatpush.msra.mxu0 %v3565
    %3647 = vmatpush.msra.mxu0 %v3561
    %3648 = vmatpush.msra.mxu0 %v3557
    %3649 = vmatpush.msra.mxu0 %v3553
    %3650 = vmatpush.msra.mxu0 %v3549
    %3651 = vmatpush.msra.mxu0 %v3545
    %3652 = vmatpush.msra.mxu0 %v3541
    %3653 = vmatpush.msra.mxu0 %v3537
    %3654 = vmatpush.msra.mxu0 %v3533
    %3655 = vmatpush.msra.mxu0 %v3529
    %3656 = vmatpush.msra.mxu0 %v3525
    %3657 = vmatpush.msra.mxu0 %v3521
    %3658 = vmatmul.f32.gmra.mxu0 %v3159
    %v3659 = vpop.f32.mrf.mxu0
    %v3660 = vadd.f32 0.0, %v3659
    %3661 = vdwg.mxu0
    %v3662 = vadd.f32 %v3514, %v3600
    %v3663 = vadd.f32 %v3515, %v3620
    %v3664 = vadd.f32 %v3516, %v3640
    %v3665 = vadd.f32 %v3517, %v3660
    %v3666 = vxor.u32 %v3662, 2147483648
    %v3667 = vmul.f32 %v3666, 1.442695
    %v3668 = vpow.pop %v3667
    %v3669 = vadd.f32 %v3668, 1.0
    %v3670 = vrcp.pop %v3669
    %v3671 = vmul.f32 %v3669, %v3670
    %v3672 = vsub.f32 1.0, %v3671
    %v3673 = vmul.f32 %v3670, %v3672
    %v3674 = vadd.f32 %v3670, %v3673
    %vm3675 = vweird.f32 %v3669
    %vm3676 = vweird.f32 %v3670
    %vm3677 = vmor %vm3675, %vm3676
    %v3678 = vsel %vm3677, %v3670, %v3674
    %v3679 = vand.u32 2147483647, %v3669
    %vm3680 = vcmp.eq.f32.partialorder %v3679, 8.507059e+37
    %v3681 = vand.u32 %v3669, 2147483648
    %v3682 = vor.u32 1.1754944e-38, %v3681
    %v3683 = vsel %vm3680, %v3682, %v3678
    %v3684 = vmul.f32 1.0, %v3683
    %v3685 = vxor.u32 %v3663, 2147483648
    %v3686 = vmul.f32 %v3685, 1.442695
    %v3687 = vpow.pop %v3686
    %v3688 = vadd.f32 %v3687, 1.0
    %v3689 = vrcp.pop %v3688
    %v3690 = vmul.f32 %v3688, %v3689
    %v3691 = vsub.f32 1.0, %v3690
    %v3692 = vmul.f32 %v3689, %v3691
    %v3693 = vadd.f32 %v3689, %v3692
    %vm3694 = vweird.f32 %v3688
    %vm3695 = vweird.f32 %v3689
    %vm3696 = vmor %vm3694, %vm3695
    %v3697 = vsel %vm3696, %v3689, %v3693
    %v3698 = vand.u32 2147483647, %v3688
    %vm3699 = vcmp.eq.f32.partialorder %v3698, 8.507059e+37
    %v3700 = vand.u32 %v3688, 2147483648
    %v3701 = vor.u32 1.1754944e-38, %v3700
    %v3702 = vsel %vm3699, %v3701, %v3697
    %v3703 = vmul.f32 1.0, %v3702
    %v3704 = vtanh.pop %v3664
    %v3705 = vxor.u32 %v3665, 2147483648
    %v3706 = vmul.f32 %v3705, 1.442695
    %v3707 = vpow.pop %v3706
    %v3708 = vadd.f32 %v3707, 1.0
    %v3709 = vrcp.pop %v3708
    %v3710 = vmul.f32 %v3708, %v3709
    %v3711 = vsub.f32 1.0, %v3710
    %v3712 = vmul.f32 %v3709, %v3711
    %v3713 = vadd.f32 %v3709, %v3712
    %vm3714 = vweird.f32 %v3708
    %vm3715 = vweird.f32 %v3709
    %vm3716 = vmor %vm3714, %vm3715
    %v3717 = vsel %vm3716, %v3709, %v3713
    %v3718 = vand.u32 2147483647, %v3708
    %vm3719 = vcmp.eq.f32.partialorder %v3718, 8.507059e+37
    %v3720 = vand.u32 %v3708, 2147483648
    %v3721 = vor.u32 1.1754944e-38, %v3720
    %v3722 = vsel %vm3719, %v3721, %v3717
    %v3723 = vmul.f32 1.0, %v3722
    %v3724 = vmul.f32 %v3703, %v3157
    %v3725 = vmul.f32 %v3684, %v3704
    %v3726 = vadd.f32 %v3724, %v3725
    %v3727 = vtanh.pop %v3726
    %v3728 = vmul.f32 %v3723, %v3727
    %v3729 = vld [vmem:[#allocation11] sm:$0xff]
    %v3730 = vld [vmem:[#allocation11 + $0x8] sm:$0xff]
    %v3731 = vld [vmem:[#allocation11 + $0x10] sm:$0xff]
    %v3732 = vld [vmem:[#allocation11 + $0x18] sm:$0xff]
    %v3733 = vld [vmem:[#allocation11 + $0x20] sm:$0xff]
    %v3734 = vld [vmem:[#allocation11 + $0x28] sm:$0xff]
    %v3735 = vld [vmem:[#allocation11 + $0x30] sm:$0xff]
    %v3736 = vld [vmem:[#allocation11 + $0x38] sm:$0xff]
    %v3737 = vld [vmem:[#allocation11 + $0x40] sm:$0xff]
    %v3738 = vld [vmem:[#allocation11 + $0x48] sm:$0xff]
    %v3739 = vld [vmem:[#allocation11 + $0x50] sm:$0xff]
    %v3740 = vld [vmem:[#allocation11 + $0x58] sm:$0xff]
    %v3741 = vld [vmem:[#allocation11 + $0x60] sm:$0xff]
    %v3742 = vld [vmem:[#allocation11 + $0x68] sm:$0xff]
    %v3743 = vld [vmem:[#allocation11 + $0x70] sm:$0xff]
    %v3744 = vld [vmem:[#allocation11 + $0x78] sm:$0xff]
    %v3745 = vld [vmem:[#allocation11 + $0x80] sm:$0xff]
    %v3746 = vld [vmem:[#allocation11 + $0x88] sm:$0xff]
    %v3747 = vld [vmem:[#allocation11 + $0x90] sm:$0xff]
    %v3748 = vld [vmem:[#allocation11 + $0x98] sm:$0xff]
    %v3749 = vld [vmem:[#allocation11 + $0xa0] sm:$0xff]
    %v3750 = vld [vmem:[#allocation11 + $0xa8] sm:$0xff]
    %v3751 = vld [vmem:[#allocation11 + $0xb0] sm:$0xff]
    %v3752 = vld [vmem:[#allocation11 + $0xb8] sm:$0xff]
    %v3753 = vld [vmem:[#allocation11 + $0xc0] sm:$0xff]
    %v3754 = vld [vmem:[#allocation11 + $0xc8] sm:$0xff]
    %v3755 = vld [vmem:[#allocation11 + $0xd0] sm:$0xff]
    %v3756 = vld [vmem:[#allocation11 + $0xd8] sm:$0xff]
    %v3757 = vld [vmem:[#allocation11 + $0xe0] sm:$0xff]
    %v3758 = vld [vmem:[#allocation11 + $0xe8] sm:$0xff]
    %v3759 = vld [vmem:[#allocation11 + $0xf0] sm:$0xff]
    %v3760 = vld [vmem:[#allocation11 + $0xf8] sm:$0xff]
    %v3761 = vld [vmem:[#allocation11 + $0x100] sm:$0xff]
    %v3762 = vld [vmem:[#allocation11 + $0x108] sm:$0xff]
    %v3763 = vld [vmem:[#allocation11 + $0x110] sm:$0xff]
    %v3764 = vld [vmem:[#allocation11 + $0x118] sm:$0xff]
    %v3765 = vld [vmem:[#allocation11 + $0x120] sm:$0xff]
    %v3766 = vld [vmem:[#allocation11 + $0x128] sm:$0xff]
    %v3767 = vld [vmem:[#allocation11 + $0x130] sm:$0xff]
    %v3768 = vld [vmem:[#allocation11 + $0x138] sm:$0xff]
    %v3769 = vld [vmem:[#allocation11 + $0x140] sm:$0xff]
    %v3770 = vld [vmem:[#allocation11 + $0x148] sm:$0xff]
    %v3771 = vld [vmem:[#allocation11 + $0x150] sm:$0xff]
    %v3772 = vld [vmem:[#allocation11 + $0x158] sm:$0xff]
    %v3773 = vld [vmem:[#allocation11 + $0x160] sm:$0xff]
    %v3774 = vld [vmem:[#allocation11 + $0x168] sm:$0xff]
    %v3775 = vld [vmem:[#allocation11 + $0x170] sm:$0xff]
    %v3776 = vld [vmem:[#allocation11 + $0x178] sm:$0xff]
    %v3777 = vld [vmem:[#allocation11 + $0x180] sm:$0xff]
    %v3778 = vld [vmem:[#allocation11 + $0x188] sm:$0xff]
    %v3779 = vld [vmem:[#allocation11 + $0x190] sm:$0xff]
    %v3780 = vld [vmem:[#allocation11 + $0x198] sm:$0xff]
    %v3781 = vld [vmem:[#allocation11 + $0x1a0] sm:$0xff]
    %v3782 = vld [vmem:[#allocation11 + $0x1a8] sm:$0xff]
    %v3783 = vld [vmem:[#allocation11 + $0x1b0] sm:$0xff]
    %v3784 = vld [vmem:[#allocation11 + $0x1b8] sm:$0xff]
    %v3785 = vld [vmem:[#allocation11 + $0x1c0] sm:$0xff]
    %v3786 = vld [vmem:[#allocation11 + $0x1c8] sm:$0xff]
    %v3787 = vld [vmem:[#allocation11 + $0x1d0] sm:$0xff]
    %v3788 = vld [vmem:[#allocation11 + $0x1d8] sm:$0xff]
    %v3789 = vld [vmem:[#allocation11 + $0x1e0] sm:$0xff]
    %v3790 = vld [vmem:[#allocation11 + $0x1e8] sm:$0xff]
    %v3791 = vld [vmem:[#allocation11 + $0x1f0] sm:$0xff]
    %v3792 = vld [vmem:[#allocation11 + $0x1f8] sm:$0xff]
    %v3793 = vld [vmem:[#allocation11 + $0x200] sm:$0xff]
    %v3794 = vld [vmem:[#allocation11 + $0x208] sm:$0xff]
    %v3795 = vld [vmem:[#allocation11 + $0x210] sm:$0xff]
    %v3796 = vld [vmem:[#allocation11 + $0x218] sm:$0xff]
    %v3797 = vld [vmem:[#allocation11 + $0x220] sm:$0xff]
    %v3798 = vld [vmem:[#allocation11 + $0x228] sm:$0xff]
    %v3799 = vld [vmem:[#allocation11 + $0x230] sm:$0xff]
    %v3800 = vld [vmem:[#allocation11 + $0x238] sm:$0xff]
    %v3801 = vld [vmem:[#allocation11 + $0x240] sm:$0xff]
    %v3802 = vld [vmem:[#allocation11 + $0x248] sm:$0xff]
    %v3803 = vld [vmem:[#allocation11 + $0x250] sm:$0xff]
    %v3804 = vld [vmem:[#allocation11 + $0x258] sm:$0xff]
    %v3805 = vld [vmem:[#allocation11 + $0x260] sm:$0xff]
    %v3806 = vld [vmem:[#allocation11 + $0x268] sm:$0xff]
    %v3807 = vld [vmem:[#allocation11 + $0x270] sm:$0xff]
    %v3808 = vld [vmem:[#allocation11 + $0x278] sm:$0xff]
    %v3809 = vld [vmem:[#allocation11 + $0x280] sm:$0xff]
    %v3810 = vld [vmem:[#allocation11 + $0x288] sm:$0xff]
    %v3811 = vld [vmem:[#allocation11 + $0x290] sm:$0xff]
    %v3812 = vld [vmem:[#allocation11 + $0x298] sm:$0xff]
    %v3813 = vld [vmem:[#allocation11 + $0x2a0] sm:$0xff]
    %v3814 = vld [vmem:[#allocation11 + $0x2a8] sm:$0xff]
    %v3815 = vld [vmem:[#allocation11 + $0x2b0] sm:$0xff]
    %v3816 = vld [vmem:[#allocation11 + $0x2b8] sm:$0xff]
    %v3817 = vld [vmem:[#allocation11 + $0x2c0] sm:$0xff]
    %v3818 = vld [vmem:[#allocation11 + $0x2c8] sm:$0xff]
    %v3819 = vld [vmem:[#allocation11 + $0x2d0] sm:$0xff]
    %v3820 = vld [vmem:[#allocation11 + $0x2d8] sm:$0xff]
    %v3821 = vld [vmem:[#allocation11 + $0x2e0] sm:$0xff]
    %v3822 = vld [vmem:[#allocation11 + $0x2e8] sm:$0xff]
    %v3823 = vld [vmem:[#allocation11 + $0x2f0] sm:$0xff]
    %v3824 = vld [vmem:[#allocation11 + $0x2f8] sm:$0xff]
    %v3825 = vld [vmem:[#allocation11 + $0x300] sm:$0xff]
    %v3826 = vld [vmem:[#allocation11 + $0x308] sm:$0xff]
    %v3827 = vld [vmem:[#allocation11 + $0x310] sm:$0xff]
    %v3828 = vld [vmem:[#allocation11 + $0x318] sm:$0xff]
    %v3829 = vld [vmem:[#allocation11 + $0x320] sm:$0xff]
    %v3830 = vld [vmem:[#allocation11 + $0x328] sm:$0xff]
    %v3831 = vld [vmem:[#allocation11 + $0x330] sm:$0xff]
    %v3832 = vld [vmem:[#allocation11 + $0x338] sm:$0xff]
    %v3833 = vld [vmem:[#allocation11 + $0x340] sm:$0xff]
    %v3834 = vld [vmem:[#allocation11 + $0x348] sm:$0xff]
    %v3835 = vld [vmem:[#allocation11 + $0x350] sm:$0xff]
    %v3836 = vld [vmem:[#allocation11 + $0x358] sm:$0xff]
    %v3837 = vld [vmem:[#allocation11 + $0x360] sm:$0xff]
    %v3838 = vld [vmem:[#allocation11 + $0x368] sm:$0xff]
    %v3839 = vld [vmem:[#allocation11 + $0x370] sm:$0xff]
    %v3840 = vld [vmem:[#allocation11 + $0x378] sm:$0xff]
    %v3841 = vld [vmem:[#allocation11 + $0x380] sm:$0xff]
    %v3842 = vld [vmem:[#allocation11 + $0x388] sm:$0xff]
    %v3843 = vld [vmem:[#allocation11 + $0x390] sm:$0xff]
    %v3844 = vld [vmem:[#allocation11 + $0x398] sm:$0xff]
    %v3845 = vld [vmem:[#allocation11 + $0x3a0] sm:$0xff]
    %v3846 = vld [vmem:[#allocation11 + $0x3a8] sm:$0xff]
    %v3847 = vld [vmem:[#allocation11 + $0x3b0] sm:$0xff]
    %v3848 = vld [vmem:[#allocation11 + $0x3b8] sm:$0xff]
    %v3849 = vld [vmem:[#allocation11 + $0x3c0] sm:$0xff]
    %v3850 = vld [vmem:[#allocation11 + $0x3c8] sm:$0xff]
    %v3851 = vld [vmem:[#allocation11 + $0x3d0] sm:$0xff]
    %v3852 = vld [vmem:[#allocation11 + $0x3d8] sm:$0xff]
    %v3853 = vld [vmem:[#allocation11 + $0x3e0] sm:$0xff]
    %v3854 = vld [vmem:[#allocation11 + $0x3e8] sm:$0xff]
    %v3855 = vld [vmem:[#allocation11 + $0x3f0] sm:$0xff]
    %v3856 = vld [vmem:[#allocation11 + $0x3f8] sm:$0xff]
    %3857 = vmatpush.msra.mxu0 %v3789
    %3858 = vmatpush.msra.mxu0 %v3785
    %3859 = vmatpush.msra.mxu0 %v3781
    %3860 = vmatpush.msra.mxu0 %v3777
    %3861 = vmatpush.msra.mxu0 %v3773
    %3862 = vmatpush.msra.mxu0 %v3769
    %3863 = vmatpush.msra.mxu0 %v3765
    %3864 = vmatpush.msra.mxu0 %v3761
    %3865 = vmatpush.msra.mxu0 %v3757
    %3866 = vmatpush.msra.mxu0 %v3753
    %3867 = vmatpush.msra.mxu0 %v3749
    %3868 = vmatpush.msra.mxu0 %v3745
    %3869 = vmatpush.msra.mxu0 %v3741
    %3870 = vmatpush.msra.mxu0 %v3737
    %3871 = vmatpush.msra.mxu0 %v3733
    %3872 = vmatpush.msra.mxu0 %v3729
    %3873 = vmatmul.f32.gmra.mxu0 %v3728
    %v3874 = vpop.f32.mrf.mxu0
    %v3875 = vadd.f32 %v89, %v3874
    %3876 = vdwg.mxu0
    %3877 = vmatpush.msra.mxu0 %v3853
    %3878 = vmatpush.msra.mxu0 %v3849
    %3879 = vmatpush.msra.mxu0 %v3845
    %3880 = vmatpush.msra.mxu0 %v3841
    %3881 = vmatpush.msra.mxu0 %v3837
    %3882 = vmatpush.msra.mxu0 %v3833
    %3883 = vmatpush.msra.mxu0 %v3829
    %3884 = vmatpush.msra.mxu0 %v3825
    %3885 = vmatpush.msra.mxu0 %v3821
    %3886 = vmatpush.msra.mxu0 %v3817
    %3887 = vmatpush.msra.mxu0 %v3813
    %3888 = vmatpush.msra.mxu0 %v3809
    %3889 = vmatpush.msra.mxu0 %v3805
    %3890 = vmatpush.msra.mxu0 %v3801
    %3891 = vmatpush.msra.mxu0 %v3797
    %3892 = vmatpush.msra.mxu0 %v3793
    %3893 = vmatmul.f32.gmra.mxu0 %v3510
    %v3894 = vpop.f32.mrf.mxu0
    %v3895 = vadd.f32 %v3875, %v3894
    %3896 = vdwg.mxu0
    %3897 = vmatpush.msra.mxu0 %v3790
    %3898 = vmatpush.msra.mxu0 %v3786
    %3899 = vmatpush.msra.mxu0 %v3782
    %3900 = vmatpush.msra.mxu0 %v3778
    %3901 = vmatpush.msra.mxu0 %v3774
    %3902 = vmatpush.msra.mxu0 %v3770
    %3903 = vmatpush.msra.mxu0 %v3766
    %3904 = vmatpush.msra.mxu0 %v3762
    %3905 = vmatpush.msra.mxu0 %v3758
    %3906 = vmatpush.msra.mxu0 %v3754
    %3907 = vmatpush.msra.mxu0 %v3750
    %3908 = vmatpush.msra.mxu0 %v3746
    %3909 = vmatpush.msra.mxu0 %v3742
    %3910 = vmatpush.msra.mxu0 %v3738
    %3911 = vmatpush.msra.mxu0 %v3734
    %3912 = vmatpush.msra.mxu0 %v3730
    %3913 = vmatmul.f32.gmra.mxu0 %v3728
    %v3914 = vpop.f32.mrf.mxu0
    %v3915 = vadd.f32 %v90, %v3914
    %3916 = vdwg.mxu0
    %3917 = vmatpush.msra.mxu0 %v3854
    %3918 = vmatpush.msra.mxu0 %v3850
    %3919 = vmatpush.msra.mxu0 %v3846
    %3920 = vmatpush.msra.mxu0 %v3842
    %3921 = vmatpush.msra.mxu0 %v3838
    %3922 = vmatpush.msra.mxu0 %v3834
    %3923 = vmatpush.msra.mxu0 %v3830
    %3924 = vmatpush.msra.mxu0 %v3826
    %3925 = vmatpush.msra.mxu0 %v3822
    %3926 = vmatpush.msra.mxu0 %v3818
    %3927 = vmatpush.msra.mxu0 %v3814
    %3928 = vmatpush.msra.mxu0 %v3810
    %3929 = vmatpush.msra.mxu0 %v3806
    %3930 = vmatpush.msra.mxu0 %v3802
    %3931 = vmatpush.msra.mxu0 %v3798
    %3932 = vmatpush.msra.mxu0 %v3794
    %3933 = vmatmul.f32.gmra.mxu0 %v3510
    %v3934 = vpop.f32.mrf.mxu0
    %v3935 = vadd.f32 %v3915, %v3934
    %3936 = vdwg.mxu0
    %3937 = vmatpush.msra.mxu0 %v3791
    %3938 = vmatpush.msra.mxu0 %v3787
    %3939 = vmatpush.msra.mxu0 %v3783
    %3940 = vmatpush.msra.mxu0 %v3779
    %3941 = vmatpush.msra.mxu0 %v3775
    %3942 = vmatpush.msra.mxu0 %v3771
    %3943 = vmatpush.msra.mxu0 %v3767
    %3944 = vmatpush.msra.mxu0 %v3763
    %3945 = vmatpush.msra.mxu0 %v3759
    %3946 = vmatpush.msra.mxu0 %v3755
    %3947 = vmatpush.msra.mxu0 %v3751
    %3948 = vmatpush.msra.mxu0 %v3747
    %3949 = vmatpush.msra.mxu0 %v3743
    %3950 = vmatpush.msra.mxu0 %v3739
    %3951 = vmatpush.msra.mxu0 %v3735
    %3952 = vmatpush.msra.mxu0 %v3731
    %3953 = vmatmul.f32.gmra.mxu0 %v3728
    %v3954 = vpop.f32.mrf.mxu0
    %v3955 = vadd.f32 %v91, %v3954
    %3956 = vdwg.mxu0
    %3957 = vmatpush.msra.mxu0 %v3855
    %3958 = vmatpush.msra.mxu0 %v3851
    %3959 = vmatpush.msra.mxu0 %v3847
    %3960 = vmatpush.msra.mxu0 %v3843
    %3961 = vmatpush.msra.mxu0 %v3839
    %3962 = vmatpush.msra.mxu0 %v3835
    %3963 = vmatpush.msra.mxu0 %v3831
    %3964 = vmatpush.msra.mxu0 %v3827
    %3965 = vmatpush.msra.mxu0 %v3823
    %3966 = vmatpush.msra.mxu0 %v3819
    %3967 = vmatpush.msra.mxu0 %v3815
    %3968 = vmatpush.msra.mxu0 %v3811
    %3969 = vmatpush.msra.mxu0 %v3807
    %3970 = vmatpush.msra.mxu0 %v3803
    %3971 = vmatpush.msra.mxu0 %v3799
    %3972 = vmatpush.msra.mxu0 %v3795
    %3973 = vmatmul.f32.gmra.mxu0 %v3510
    %v3974 = vpop.f32.mrf.mxu0
    %v3975 = vadd.f32 %v3955, %v3974
    %3976 = vdwg.mxu0
    %3977 = vmatpush.msra.mxu0 %v3792
    %3978 = vmatpush.msra.mxu0 %v3788
    %3979 = vmatpush.msra.mxu0 %v3784
    %3980 = vmatpush.msra.mxu0 %v3780
    %3981 = vmatpush.msra.mxu0 %v3776
    %3982 = vmatpush.msra.mxu0 %v3772
    %3983 = vmatpush.msra.mxu0 %v3768
    %3984 = vmatpush.msra.mxu0 %v3764
    %3985 = vmatpush.msra.mxu0 %v3760
    %3986 = vmatpush.msra.mxu0 %v3756
    %3987 = vmatpush.msra.mxu0 %v3752
    %3988 = vmatpush.msra.mxu0 %v3748
    %3989 = vmatpush.msra.mxu0 %v3744
    %3990 = vmatpush.msra.mxu0 %v3740
    %3991 = vmatpush.msra.mxu0 %v3736
    %3992 = vmatpush.msra.mxu0 %v3732
    %3993 = vmatmul.f32.gmra.mxu0 %v3728
    %v3994 = vpop.f32.mrf.mxu0
    %v3995 = vadd.f32 %v92, %v3994
    %3996 = vdwg.mxu0
    %3997 = vmatpush.msra.mxu0 %v3856
    %3998 = vmatpush.msra.mxu0 %v3852
    %3999 = vmatpush.msra.mxu0 %v3848
    %4000 = vmatpush.msra.mxu0 %v3844
    %4001 = vmatpush.msra.mxu0 %v3840
    %4002 = vmatpush.msra.mxu0 %v3836
    %4003 = vmatpush.msra.mxu0 %v3832
    %4004 = vmatpush.msra.mxu0 %v3828
    %4005 = vmatpush.msra.mxu0 %v3824
    %4006 = vmatpush.msra.mxu0 %v3820
    %4007 = vmatpush.msra.mxu0 %v3816
    %4008 = vmatpush.msra.mxu0 %v3812
    %4009 = vmatpush.msra.mxu0 %v3808
    %4010 = vmatpush.msra.mxu0 %v3804
    %4011 = vmatpush.msra.mxu0 %v3800
    %4012 = vmatpush.msra.mxu0 %v3796
    %4013 = vmatmul.f32.gmra.mxu0 %v3510
    %v4014 = vpop.f32.mrf.mxu0
    %v4015 = vadd.f32 %v3995, %v4014
    %4016 = vdwg.mxu0
    %v4017 = vxor.u32 %v3895, 2147483648
    %v4018 = vmul.f32 %v4017, 1.442695
    %v4019 = vpow.pop %v4018
    %v4020 = vadd.f32 %v4019, 1.0
    %v4021 = vrcp.pop %v4020
    %v4022 = vmul.f32 %v4020, %v4021
    %v4023 = vsub.f32 1.0, %v4022
    %v4024 = vmul.f32 %v4021, %v4023
    %v4025 = vadd.f32 %v4021, %v4024
    %vm4026 = vweird.f32 %v4020
    %vm4027 = vweird.f32 %v4021
    %vm4028 = vmor %vm4026, %vm4027
    %v4029 = vsel %vm4028, %v4021, %v4025
    %v4030 = vand.u32 2147483647, %v4020
    %vm4031 = vcmp.eq.f32.partialorder %v4030, 8.507059e+37
    %v4032 = vand.u32 %v4020, 2147483648
    %v4033 = vor.u32 1.1754944e-38, %v4032
    %v4034 = vsel %vm4031, %v4033, %v4029
    %v4035 = vmul.f32 1.0, %v4034
    %v4036 = vxor.u32 %v3935, 2147483648
    %v4037 = vmul.f32 %v4036, 1.442695
    %v4038 = vpow.pop %v4037
    %v4039 = vadd.f32 %v4038, 1.0
    %v4040 = vrcp.pop %v4039
    %v4041 = vmul.f32 %v4039, %v4040
    %v4042 = vsub.f32 1.0, %v4041
    %v4043 = vmul.f32 %v4040, %v4042
    %v4044 = vadd.f32 %v4040, %v4043
    %vm4045 = vweird.f32 %v4039
    %vm4046 = vweird.f32 %v4040
    %vm4047 = vmor %vm4045, %vm4046
    %v4048 = vsel %vm4047, %v4040, %v4044
    %v4049 = vand.u32 2147483647, %v4039
    %vm4050 = vcmp.eq.f32.partialorder %v4049, 8.507059e+37
    %v4051 = vand.u32 %v4039, 2147483648
    %v4052 = vor.u32 1.1754944e-38, %v4051
    %v4053 = vsel %vm4050, %v4052, %v4048
    %v4054 = vmul.f32 1.0, %v4053
    %v4055 = vtanh.pop %v3975
    %v4056 = vxor.u32 %v4015, 2147483648
    %v4057 = vmul.f32 %v4056, 1.442695
    %v4058 = vpow.pop %v4057
    %v4059 = vadd.f32 %v4058, 1.0
    %v4060 = vrcp.pop %v4059
    %v4061 = vmul.f32 %v4059, %v4060
    %v4062 = vsub.f32 1.0, %v4061
    %v4063 = vmul.f32 %v4060, %v4062
    %v4064 = vadd.f32 %v4060, %v4063
    %vm4065 = vweird.f32 %v4059
    %vm4066 = vweird.f32 %v4060
    %vm4067 = vmor %vm4065, %vm4066
    %v4068 = vsel %vm4067, %v4060, %v4064
    %v4069 = vand.u32 2147483647, %v4059
    %vm4070 = vcmp.eq.f32.partialorder %v4069, 8.507059e+37
    %v4071 = vand.u32 %v4059, 2147483648
    %v4072 = vor.u32 1.1754944e-38, %v4071
    %v4073 = vsel %vm4070, %v4072, %v4068
    %v4074 = vmul.f32 1.0, %v4073
    %v4075 = vmul.f32 %v4054, %v3508
    %v4076 = vmul.f32 %v4035, %v4055
    %v4077 = vadd.f32 %v4075, %v4076
    %v4078 = vtanh.pop %v4077
    %v4079 = vmul.f32 %v4074, %v4078
    %s4080 = scalar_lea.vmem [#allocation14], 48
    %4081 = vst [vmem:[%s4080] sm:$0xff] %v4079
    %s4082 = scalar_lea.vmem [#allocation6], 224
    %v4083 = vld [vmem:[%s4082] sm:$0xff]
    %v4084 = vld [vmem:[%s4082 + $0x8] sm:$0xff]
    %v4085 = vld [vmem:[%s4082 + $0x10] sm:$0xff]
    %v4086 = vld [vmem:[%s4082 + $0x18] sm:$0xff]
    %v4087 = vld [vmem:[#allocation9] sm:$0xff]
    %v4088 = vld [vmem:[#allocation9 + $0x8] sm:$0xff]
    %v4089 = vld [vmem:[#allocation9 + $0x10] sm:$0xff]
    %v4090 = vld [vmem:[#allocation9 + $0x18] sm:$0xff]
    %v4091 = vld [vmem:[#allocation9 + $0x20] sm:$0xff]
    %v4092 = vld [vmem:[#allocation9 + $0x28] sm:$0xff]
    %v4093 = vld [vmem:[#allocation9 + $0x30] sm:$0xff]
    %v4094 = vld [vmem:[#allocation9 + $0x38] sm:$0xff]
    %v4095 = vld [vmem:[#allocation9 + $0x40] sm:$0xff]
    %v4096 = vld [vmem:[#allocation9 + $0x48] sm:$0xff]
    %v4097 = vld [vmem:[#allocation9 + $0x50] sm:$0xff]
    %v4098 = vld [vmem:[#allocation9 + $0x58] sm:$0xff]
    %v4099 = vld [vmem:[#allocation9 + $0x60] sm:$0xff]
    %v4100 = vld [vmem:[#allocation9 + $0x68] sm:$0xff]
    %v4101 = vld [vmem:[#allocation9 + $0x70] sm:$0xff]
    %v4102 = vld [vmem:[#allocation9 + $0x78] sm:$0xff]
    %v4103 = vld [vmem:[#allocation9 + $0x80] sm:$0xff]
    %v4104 = vld [vmem:[#allocation9 + $0x88] sm:$0xff]
    %v4105 = vld [vmem:[#allocation9 + $0x90] sm:$0xff]
    %v4106 = vld [vmem:[#allocation9 + $0x98] sm:$0xff]
    %v4107 = vld [vmem:[#allocation9 + $0xa0] sm:$0xff]
    %v4108 = vld [vmem:[#allocation9 + $0xa8] sm:$0xff]
    %v4109 = vld [vmem:[#allocation9 + $0xb0] sm:$0xff]
    %v4110 = vld [vmem:[#allocation9 + $0xb8] sm:$0xff]
    %v4111 = vld [vmem:[#allocation9 + $0xc0] sm:$0xff]
    %v4112 = vld [vmem:[#allocation9 + $0xc8] sm:$0xff]
    %v4113 = vld [vmem:[#allocation9 + $0xd0] sm:$0xff]
    %v4114 = vld [vmem:[#allocation9 + $0xd8] sm:$0xff]
    %v4115 = vld [vmem:[#allocation9 + $0xe0] sm:$0xff]
    %v4116 = vld [vmem:[#allocation9 + $0xe8] sm:$0xff]
    %v4117 = vld [vmem:[#allocation9 + $0xf0] sm:$0xff]
    %v4118 = vld [vmem:[#allocation9 + $0xf8] sm:$0xff]
    %v4119 = vld [vmem:[#allocation9 + $0x100] sm:$0xff]
    %v4120 = vld [vmem:[#allocation9 + $0x108] sm:$0xff]
    %v4121 = vld [vmem:[#allocation9 + $0x110] sm:$0xff]
    %v4122 = vld [vmem:[#allocation9 + $0x118] sm:$0xff]
    %v4123 = vld [vmem:[#allocation9 + $0x120] sm:$0xff]
    %v4124 = vld [vmem:[#allocation9 + $0x128] sm:$0xff]
    %v4125 = vld [vmem:[#allocation9 + $0x130] sm:$0xff]
    %v4126 = vld [vmem:[#allocation9 + $0x138] sm:$0xff]
    %v4127 = vld [vmem:[#allocation9 + $0x140] sm:$0xff]
    %v4128 = vld [vmem:[#allocation9 + $0x148] sm:$0xff]
    %v4129 = vld [vmem:[#allocation9 + $0x150] sm:$0xff]
    %v4130 = vld [vmem:[#allocation9 + $0x158] sm:$0xff]
    %v4131 = vld [vmem:[#allocation9 + $0x160] sm:$0xff]
    %v4132 = vld [vmem:[#allocation9 + $0x168] sm:$0xff]
    %v4133 = vld [vmem:[#allocation9 + $0x170] sm:$0xff]
    %v4134 = vld [vmem:[#allocation9 + $0x178] sm:$0xff]
    %v4135 = vld [vmem:[#allocation9 + $0x180] sm:$0xff]
    %v4136 = vld [vmem:[#allocation9 + $0x188] sm:$0xff]
    %v4137 = vld [vmem:[#allocation9 + $0x190] sm:$0xff]
    %v4138 = vld [vmem:[#allocation9 + $0x198] sm:$0xff]
    %v4139 = vld [vmem:[#allocation9 + $0x1a0] sm:$0xff]
    %v4140 = vld [vmem:[#allocation9 + $0x1a8] sm:$0xff]
    %v4141 = vld [vmem:[#allocation9 + $0x1b0] sm:$0xff]
    %v4142 = vld [vmem:[#allocation9 + $0x1b8] sm:$0xff]
    %v4143 = vld [vmem:[#allocation9 + $0x1c0] sm:$0xff]
    %v4144 = vld [vmem:[#allocation9 + $0x1c8] sm:$0xff]
    %v4145 = vld [vmem:[#allocation9 + $0x1d0] sm:$0xff]
    %v4146 = vld [vmem:[#allocation9 + $0x1d8] sm:$0xff]
    %v4147 = vld [vmem:[#allocation9 + $0x1e0] sm:$0xff]
    %v4148 = vld [vmem:[#allocation9 + $0x1e8] sm:$0xff]
    %v4149 = vld [vmem:[#allocation9 + $0x1f0] sm:$0xff]
    %v4150 = vld [vmem:[#allocation9 + $0x1f8] sm:$0xff]
    %4151 = vmatpush.msra.mxu0 %v4147
    %4152 = vmatpush.msra.mxu0 %v4143
    %4153 = vmatpush.msra.mxu0 %v4139
    %4154 = vmatpush.msra.mxu0 %v4135
    %4155 = vmatpush.msra.mxu0 %v4131
    %4156 = vmatpush.msra.mxu0 %v4127
    %4157 = vmatpush.msra.mxu0 %v4123
    %4158 = vmatpush.msra.mxu0 %v4119
    %4159 = vmatpush.msra.mxu0 %v4115
    %4160 = vmatpush.msra.mxu0 %v4111
    %4161 = vmatpush.msra.mxu0 %v4107
    %4162 = vmatpush.msra.mxu0 %v4103
    %4163 = vmatpush.msra.mxu0 %v4099
    %4164 = vmatpush.msra.mxu0 %v4095
    %4165 = vmatpush.msra.mxu0 %v4091
    %4166 = vmatpush.msra.mxu0 %v4087
    %4167 = vmatmul.f32.gmra.mxu0 %v3728
    %v4168 = vpop.f32.mrf.mxu0
    %v4169 = vadd.f32 0.0, %v4168
    %4170 = vdwg.mxu0
    %4171 = vmatpush.msra.mxu0 %v4148
    %4172 = vmatpush.msra.mxu0 %v4144
    %4173 = vmatpush.msra.mxu0 %v4140
    %4174 = vmatpush.msra.mxu0 %v4136
    %4175 = vmatpush.msra.mxu0 %v4132
    %4176 = vmatpush.msra.mxu0 %v4128
    %4177 = vmatpush.msra.mxu0 %v4124
    %4178 = vmatpush.msra.mxu0 %v4120
    %4179 = vmatpush.msra.mxu0 %v4116
    %4180 = vmatpush.msra.mxu0 %v4112
    %4181 = vmatpush.msra.mxu0 %v4108
    %4182 = vmatpush.msra.mxu0 %v4104
    %4183 = vmatpush.msra.mxu0 %v4100
    %4184 = vmatpush.msra.mxu0 %v4096
    %4185 = vmatpush.msra.mxu0 %v4092
    %4186 = vmatpush.msra.mxu0 %v4088
    %4187 = vmatmul.f32.gmra.mxu0 %v3728
    %v4188 = vpop.f32.mrf.mxu0
    %v4189 = vadd.f32 0.0, %v4188
    %4190 = vdwg.mxu0
    %4191 = vmatpush.msra.mxu0 %v4149
    %4192 = vmatpush.msra.mxu0 %v4145
    %4193 = vmatpush.msra.mxu0 %v4141
    %4194 = vmatpush.msra.mxu0 %v4137
    %4195 = vmatpush.msra.mxu0 %v4133
    %4196 = vmatpush.msra.mxu0 %v4129
    %4197 = vmatpush.msra.mxu0 %v4125
    %4198 = vmatpush.msra.mxu0 %v4121
    %4199 = vmatpush.msra.mxu0 %v4117
    %4200 = vmatpush.msra.mxu0 %v4113
    %4201 = vmatpush.msra.mxu0 %v4109
    %4202 = vmatpush.msra.mxu0 %v4105
    %4203 = vmatpush.msra.mxu0 %v4101
    %4204 = vmatpush.msra.mxu0 %v4097
    %4205 = vmatpush.msra.mxu0 %v4093
    %4206 = vmatpush.msra.mxu0 %v4089
    %4207 = vmatmul.f32.gmra.mxu0 %v3728
    %v4208 = vpop.f32.mrf.mxu0
    %v4209 = vadd.f32 0.0, %v4208
    %4210 = vdwg.mxu0
    %4211 = vmatpush.msra.mxu0 %v4150
    %4212 = vmatpush.msra.mxu0 %v4146
    %4213 = vmatpush.msra.mxu0 %v4142
    %4214 = vmatpush.msra.mxu0 %v4138
    %4215 = vmatpush.msra.mxu0 %v4134
    %4216 = vmatpush.msra.mxu0 %v4130
    %4217 = vmatpush.msra.mxu0 %v4126
    %4218 = vmatpush.msra.mxu0 %v4122
    %4219 = vmatpush.msra.mxu0 %v4118
    %4220 = vmatpush.msra.mxu0 %v4114
    %4221 = vmatpush.msra.mxu0 %v4110
    %4222 = vmatpush.msra.mxu0 %v4106
    %4223 = vmatpush.msra.mxu0 %v4102
    %4224 = vmatpush.msra.mxu0 %v4098
    %4225 = vmatpush.msra.mxu0 %v4094
    %4226 = vmatpush.msra.mxu0 %v4090
    %4227 = vmatmul.f32.gmra.mxu0 %v3728
    %v4228 = vpop.f32.mrf.mxu0
    %v4229 = vadd.f32 0.0, %v4228
    %4230 = vdwg.mxu0
    %v4231 = vadd.f32 %v4083, %v4169
    %v4232 = vadd.f32 %v4084, %v4189
    %v4233 = vadd.f32 %v4085, %v4209
    %v4234 = vadd.f32 %v4086, %v4229
    %v4235 = vxor.u32 %v4231, 2147483648
    %v4236 = vmul.f32 %v4235, 1.442695
    %v4237 = vpow.pop %v4236
    %v4238 = vadd.f32 %v4237, 1.0
    %v4239 = vrcp.pop %v4238
    %v4240 = vmul.f32 %v4238, %v4239
    %v4241 = vsub.f32 1.0, %v4240
    %v4242 = vmul.f32 %v4239, %v4241
    %v4243 = vadd.f32 %v4239, %v4242
    %vm4244 = vweird.f32 %v4238
    %vm4245 = vweird.f32 %v4239
    %vm4246 = vmor %vm4244, %vm4245
    %v4247 = vsel %vm4246, %v4239, %v4243
    %v4248 = vand.u32 2147483647, %v4238
    %vm4249 = vcmp.eq.f32.partialorder %v4248, 8.507059e+37
    %v4250 = vand.u32 %v4238, 2147483648
    %v4251 = vor.u32 1.1754944e-38, %v4250
    %v4252 = vsel %vm4249, %v4251, %v4247
    %v4253 = vmul.f32 1.0, %v4252
    %v4254 = vxor.u32 %v4232, 2147483648
    %v4255 = vmul.f32 %v4254, 1.442695
    %v4256 = vpow.pop %v4255
    %v4257 = vadd.f32 %v4256, 1.0
    %v4258 = vrcp.pop %v4257
    %v4259 = vmul.f32 %v4257, %v4258
    %v4260 = vsub.f32 1.0, %v4259
    %v4261 = vmul.f32 %v4258, %v4260
    %v4262 = vadd.f32 %v4258, %v4261
    %vm4263 = vweird.f32 %v4257
    %vm4264 = vweird.f32 %v4258
    %vm4265 = vmor %vm4263, %vm4264
    %v4266 = vsel %vm4265, %v4258, %v4262
    %v4267 = vand.u32 2147483647, %v4257
    %vm4268 = vcmp.eq.f32.partialorder %v4267, 8.507059e+37
    %v4269 = vand.u32 %v4257, 2147483648
    %v4270 = vor.u32 1.1754944e-38, %v4269
    %v4271 = vsel %vm4268, %v4270, %v4266
    %v4272 = vmul.f32 1.0, %v4271
    %v4273 = vtanh.pop %v4233
    %v4274 = vxor.u32 %v4234, 2147483648
    %v4275 = vmul.f32 %v4274, 1.442695
    %v4276 = vpow.pop %v4275
    %v4277 = vadd.f32 %v4276, 1.0
    %v4278 = vrcp.pop %v4277
    %v4279 = vmul.f32 %v4277, %v4278
    %v4280 = vsub.f32 1.0, %v4279
    %v4281 = vmul.f32 %v4278, %v4280
    %v4282 = vadd.f32 %v4278, %v4281
    %vm4283 = vweird.f32 %v4277
    %vm4284 = vweird.f32 %v4278
    %vm4285 = vmor %vm4283, %vm4284
    %v4286 = vsel %vm4285, %v4278, %v4282
    %v4287 = vand.u32 2147483647, %v4277
    %vm4288 = vcmp.eq.f32.partialorder %v4287, 8.507059e+37
    %v4289 = vand.u32 %v4277, 2147483648
    %v4290 = vor.u32 1.1754944e-38, %v4289
    %v4291 = vsel %vm4288, %v4290, %v4286
    %v4292 = vmul.f32 1.0, %v4291
    %v4293 = vmul.f32 %v4272, %v3726
    %v4294 = vmul.f32 %v4253, %v4273
    %v4295 = vadd.f32 %v4293, %v4294
    %v4296 = vtanh.pop %v4295
    %v4297 = vmul.f32 %v4292, %v4296
    %v4298 = vld [vmem:[#allocation11] sm:$0xff]
    %v4299 = vld [vmem:[#allocation11 + $0x8] sm:$0xff]
    %v4300 = vld [vmem:[#allocation11 + $0x10] sm:$0xff]
    %v4301 = vld [vmem:[#allocation11 + $0x18] sm:$0xff]
    %v4302 = vld [vmem:[#allocation11 + $0x20] sm:$0xff]
    %v4303 = vld [vmem:[#allocation11 + $0x28] sm:$0xff]
    %v4304 = vld [vmem:[#allocation11 + $0x30] sm:$0xff]
    %v4305 = vld [vmem:[#allocation11 + $0x38] sm:$0xff]
    %v4306 = vld [vmem:[#allocation11 + $0x40] sm:$0xff]
    %v4307 = vld [vmem:[#allocation11 + $0x48] sm:$0xff]
    %v4308 = vld [vmem:[#allocation11 + $0x50] sm:$0xff]
    %v4309 = vld [vmem:[#allocation11 + $0x58] sm:$0xff]
    %v4310 = vld [vmem:[#allocation11 + $0x60] sm:$0xff]
    %v4311 = vld [vmem:[#allocation11 + $0x68] sm:$0xff]
    %v4312 = vld [vmem:[#allocation11 + $0x70] sm:$0xff]
    %v4313 = vld [vmem:[#allocation11 + $0x78] sm:$0xff]
    %v4314 = vld [vmem:[#allocation11 + $0x80] sm:$0xff]
    %v4315 = vld [vmem:[#allocation11 + $0x88] sm:$0xff]
    %v4316 = vld [vmem:[#allocation11 + $0x90] sm:$0xff]
    %v4317 = vld [vmem:[#allocation11 + $0x98] sm:$0xff]
    %v4318 = vld [vmem:[#allocation11 + $0xa0] sm:$0xff]
    %v4319 = vld [vmem:[#allocation11 + $0xa8] sm:$0xff]
    %v4320 = vld [vmem:[#allocation11 + $0xb0] sm:$0xff]
    %v4321 = vld [vmem:[#allocation11 + $0xb8] sm:$0xff]
    %v4322 = vld [vmem:[#allocation11 + $0xc0] sm:$0xff]
    %v4323 = vld [vmem:[#allocation11 + $0xc8] sm:$0xff]
    %v4324 = vld [vmem:[#allocation11 + $0xd0] sm:$0xff]
    %v4325 = vld [vmem:[#allocation11 + $0xd8] sm:$0xff]
    %v4326 = vld [vmem:[#allocation11 + $0xe0] sm:$0xff]
    %v4327 = vld [vmem:[#allocation11 + $0xe8] sm:$0xff]
    %v4328 = vld [vmem:[#allocation11 + $0xf0] sm:$0xff]
    %v4329 = vld [vmem:[#allocation11 + $0xf8] sm:$0xff]
    %v4330 = vld [vmem:[#allocation11 + $0x100] sm:$0xff]
    %v4331 = vld [vmem:[#allocation11 + $0x108] sm:$0xff]
    %v4332 = vld [vmem:[#allocation11 + $0x110] sm:$0xff]
    %v4333 = vld [vmem:[#allocation11 + $0x118] sm:$0xff]
    %v4334 = vld [vmem:[#allocation11 + $0x120] sm:$0xff]
    %v4335 = vld [vmem:[#allocation11 + $0x128] sm:$0xff]
    %v4336 = vld [vmem:[#allocation11 + $0x130] sm:$0xff]
    %v4337 = vld [vmem:[#allocation11 + $0x138] sm:$0xff]
    %v4338 = vld [vmem:[#allocation11 + $0x140] sm:$0xff]
    %v4339 = vld [vmem:[#allocation11 + $0x148] sm:$0xff]
    %v4340 = vld [vmem:[#allocation11 + $0x150] sm:$0xff]
    %v4341 = vld [vmem:[#allocation11 + $0x158] sm:$0xff]
    %v4342 = vld [vmem:[#allocation11 + $0x160] sm:$0xff]
    %v4343 = vld [vmem:[#allocation11 + $0x168] sm:$0xff]
    %v4344 = vld [vmem:[#allocation11 + $0x170] sm:$0xff]
    %v4345 = vld [vmem:[#allocation11 + $0x178] sm:$0xff]
    %v4346 = vld [vmem:[#allocation11 + $0x180] sm:$0xff]
    %v4347 = vld [vmem:[#allocation11 + $0x188] sm:$0xff]
    %v4348 = vld [vmem:[#allocation11 + $0x190] sm:$0xff]
    %v4349 = vld [vmem:[#allocation11 + $0x198] sm:$0xff]
    %v4350 = vld [vmem:[#allocation11 + $0x1a0] sm:$0xff]
    %v4351 = vld [vmem:[#allocation11 + $0x1a8] sm:$0xff]
    %v4352 = vld [vmem:[#allocation11 + $0x1b0] sm:$0xff]
    %v4353 = vld [vmem:[#allocation11 + $0x1b8] sm:$0xff]
    %v4354 = vld [vmem:[#allocation11 + $0x1c0] sm:$0xff]
    %v4355 = vld [vmem:[#allocation11 + $0x1c8] sm:$0xff]
    %v4356 = vld [vmem:[#allocation11 + $0x1d0] sm:$0xff]
    %v4357 = vld [vmem:[#allocation11 + $0x1d8] sm:$0xff]
    %v4358 = vld [vmem:[#allocation11 + $0x1e0] sm:$0xff]
    %v4359 = vld [vmem:[#allocation11 + $0x1e8] sm:$0xff]
    %v4360 = vld [vmem:[#allocation11 + $0x1f0] sm:$0xff]
    %v4361 = vld [vmem:[#allocation11 + $0x1f8] sm:$0xff]
    %v4362 = vld [vmem:[#allocation11 + $0x200] sm:$0xff]
    %v4363 = vld [vmem:[#allocation11 + $0x208] sm:$0xff]
    %v4364 = vld [vmem:[#allocation11 + $0x210] sm:$0xff]
    %v4365 = vld [vmem:[#allocation11 + $0x218] sm:$0xff]
    %v4366 = vld [vmem:[#allocation11 + $0x220] sm:$0xff]
    %v4367 = vld [vmem:[#allocation11 + $0x228] sm:$0xff]
    %v4368 = vld [vmem:[#allocation11 + $0x230] sm:$0xff]
    %v4369 = vld [vmem:[#allocation11 + $0x238] sm:$0xff]
    %v4370 = vld [vmem:[#allocation11 + $0x240] sm:$0xff]
    %v4371 = vld [vmem:[#allocation11 + $0x248] sm:$0xff]
    %v4372 = vld [vmem:[#allocation11 + $0x250] sm:$0xff]
    %v4373 = vld [vmem:[#allocation11 + $0x258] sm:$0xff]
    %v4374 = vld [vmem:[#allocation11 + $0x260] sm:$0xff]
    %v4375 = vld [vmem:[#allocation11 + $0x268] sm:$0xff]
    %v4376 = vld [vmem:[#allocation11 + $0x270] sm:$0xff]
    %v4377 = vld [vmem:[#allocation11 + $0x278] sm:$0xff]
    %v4378 = vld [vmem:[#allocation11 + $0x280] sm:$0xff]
    %v4379 = vld [vmem:[#allocation11 + $0x288] sm:$0xff]
    %v4380 = vld [vmem:[#allocation11 + $0x290] sm:$0xff]
    %v4381 = vld [vmem:[#allocation11 + $0x298] sm:$0xff]
    %v4382 = vld [vmem:[#allocation11 + $0x2a0] sm:$0xff]
    %v4383 = vld [vmem:[#allocation11 + $0x2a8] sm:$0xff]
    %v4384 = vld [vmem:[#allocation11 + $0x2b0] sm:$0xff]
    %v4385 = vld [vmem:[#allocation11 + $0x2b8] sm:$0xff]
    %v4386 = vld [vmem:[#allocation11 + $0x2c0] sm:$0xff]
    %v4387 = vld [vmem:[#allocation11 + $0x2c8] sm:$0xff]
    %v4388 = vld [vmem:[#allocation11 + $0x2d0] sm:$0xff]
    %v4389 = vld [vmem:[#allocation11 + $0x2d8] sm:$0xff]
    %v4390 = vld [vmem:[#allocation11 + $0x2e0] sm:$0xff]
    %v4391 = vld [vmem:[#allocation11 + $0x2e8] sm:$0xff]
    %v4392 = vld [vmem:[#allocation11 + $0x2f0] sm:$0xff]
    %v4393 = vld [vmem:[#allocation11 + $0x2f8] sm:$0xff]
    %v4394 = vld [vmem:[#allocation11 + $0x300] sm:$0xff]
    %v4395 = vld [vmem:[#allocation11 + $0x308] sm:$0xff]
    %v4396 = vld [vmem:[#allocation11 + $0x310] sm:$0xff]
    %v4397 = vld [vmem:[#allocation11 + $0x318] sm:$0xff]
    %v4398 = vld [vmem:[#allocation11 + $0x320] sm:$0xff]
    %v4399 = vld [vmem:[#allocation11 + $0x328] sm:$0xff]
    %v4400 = vld [vmem:[#allocation11 + $0x330] sm:$0xff]
    %v4401 = vld [vmem:[#allocation11 + $0x338] sm:$0xff]
    %v4402 = vld [vmem:[#allocation11 + $0x340] sm:$0xff]
    %v4403 = vld [vmem:[#allocation11 + $0x348] sm:$0xff]
    %v4404 = vld [vmem:[#allocation11 + $0x350] sm:$0xff]
    %v4405 = vld [vmem:[#allocation11 + $0x358] sm:$0xff]
    %v4406 = vld [vmem:[#allocation11 + $0x360] sm:$0xff]
    %v4407 = vld [vmem:[#allocation11 + $0x368] sm:$0xff]
    %v4408 = vld [vmem:[#allocation11 + $0x370] sm:$0xff]
    %v4409 = vld [vmem:[#allocation11 + $0x378] sm:$0xff]
    %v4410 = vld [vmem:[#allocation11 + $0x380] sm:$0xff]
    %v4411 = vld [vmem:[#allocation11 + $0x388] sm:$0xff]
    %v4412 = vld [vmem:[#allocation11 + $0x390] sm:$0xff]
    %v4413 = vld [vmem:[#allocation11 + $0x398] sm:$0xff]
    %v4414 = vld [vmem:[#allocation11 + $0x3a0] sm:$0xff]
    %v4415 = vld [vmem:[#allocation11 + $0x3a8] sm:$0xff]
    %v4416 = vld [vmem:[#allocation11 + $0x3b0] sm:$0xff]
    %v4417 = vld [vmem:[#allocation11 + $0x3b8] sm:$0xff]
    %v4418 = vld [vmem:[#allocation11 + $0x3c0] sm:$0xff]
    %v4419 = vld [vmem:[#allocation11 + $0x3c8] sm:$0xff]
    %v4420 = vld [vmem:[#allocation11 + $0x3d0] sm:$0xff]
    %v4421 = vld [vmem:[#allocation11 + $0x3d8] sm:$0xff]
    %v4422 = vld [vmem:[#allocation11 + $0x3e0] sm:$0xff]
    %v4423 = vld [vmem:[#allocation11 + $0x3e8] sm:$0xff]
    %v4424 = vld [vmem:[#allocation11 + $0x3f0] sm:$0xff]
    %v4425 = vld [vmem:[#allocation11 + $0x3f8] sm:$0xff]
    %4426 = vmatpush.msra.mxu0 %v4358
    %4427 = vmatpush.msra.mxu0 %v4354
    %4428 = vmatpush.msra.mxu0 %v4350
    %4429 = vmatpush.msra.mxu0 %v4346
    %4430 = vmatpush.msra.mxu0 %v4342
    %4431 = vmatpush.msra.mxu0 %v4338
    %4432 = vmatpush.msra.mxu0 %v4334
    %4433 = vmatpush.msra.mxu0 %v4330
    %4434 = vmatpush.msra.mxu0 %v4326
    %4435 = vmatpush.msra.mxu0 %v4322
    %4436 = vmatpush.msra.mxu0 %v4318
    %4437 = vmatpush.msra.mxu0 %v4314
    %4438 = vmatpush.msra.mxu0 %v4310
    %4439 = vmatpush.msra.mxu0 %v4306
    %4440 = vmatpush.msra.mxu0 %v4302
    %4441 = vmatpush.msra.mxu0 %v4298
    %4442 = vmatmul.f32.gmra.mxu0 %v4297
    %v4443 = vpop.f32.mrf.mxu0
    %v4444 = vadd.f32 %v89, %v4443
    %4445 = vdwg.mxu0
    %4446 = vmatpush.msra.mxu0 %v4422
    %4447 = vmatpush.msra.mxu0 %v4418
    %4448 = vmatpush.msra.mxu0 %v4414
    %4449 = vmatpush.msra.mxu0 %v4410
    %4450 = vmatpush.msra.mxu0 %v4406
    %4451 = vmatpush.msra.mxu0 %v4402
    %4452 = vmatpush.msra.mxu0 %v4398
    %4453 = vmatpush.msra.mxu0 %v4394
    %4454 = vmatpush.msra.mxu0 %v4390
    %4455 = vmatpush.msra.mxu0 %v4386
    %4456 = vmatpush.msra.mxu0 %v4382
    %4457 = vmatpush.msra.mxu0 %v4378
    %4458 = vmatpush.msra.mxu0 %v4374
    %4459 = vmatpush.msra.mxu0 %v4370
    %4460 = vmatpush.msra.mxu0 %v4366
    %4461 = vmatpush.msra.mxu0 %v4362
    %4462 = vmatmul.f32.gmra.mxu0 %v4079
    %v4463 = vpop.f32.mrf.mxu0
    %v4464 = vadd.f32 %v4444, %v4463
    %4465 = vdwg.mxu0
    %4466 = vmatpush.msra.mxu0 %v4359
    %4467 = vmatpush.msra.mxu0 %v4355
    %4468 = vmatpush.msra.mxu0 %v4351
    %4469 = vmatpush.msra.mxu0 %v4347
    %4470 = vmatpush.msra.mxu0 %v4343
    %4471 = vmatpush.msra.mxu0 %v4339
    %4472 = vmatpush.msra.mxu0 %v4335
    %4473 = vmatpush.msra.mxu0 %v4331
    %4474 = vmatpush.msra.mxu0 %v4327
    %4475 = vmatpush.msra.mxu0 %v4323
    %4476 = vmatpush.msra.mxu0 %v4319
    %4477 = vmatpush.msra.mxu0 %v4315
    %4478 = vmatpush.msra.mxu0 %v4311
    %4479 = vmatpush.msra.mxu0 %v4307
    %4480 = vmatpush.msra.mxu0 %v4303
    %4481 = vmatpush.msra.mxu0 %v4299
    %4482 = vmatmul.f32.gmra.mxu0 %v4297
    %v4483 = vpop.f32.mrf.mxu0
    %v4484 = vadd.f32 %v90, %v4483
    %4485 = vdwg.mxu0
    %4486 = vmatpush.msra.mxu0 %v4423
    %4487 = vmatpush.msra.mxu0 %v4419
    %4488 = vmatpush.msra.mxu0 %v4415
    %4489 = vmatpush.msra.mxu0 %v4411
    %4490 = vmatpush.msra.mxu0 %v4407
    %4491 = vmatpush.msra.mxu0 %v4403
    %4492 = vmatpush.msra.mxu0 %v4399
    %4493 = vmatpush.msra.mxu0 %v4395
    %4494 = vmatpush.msra.mxu0 %v4391
    %4495 = vmatpush.msra.mxu0 %v4387
    %4496 = vmatpush.msra.mxu0 %v4383
    %4497 = vmatpush.msra.mxu0 %v4379
    %4498 = vmatpush.msra.mxu0 %v4375
    %4499 = vmatpush.msra.mxu0 %v4371
    %4500 = vmatpush.msra.mxu0 %v4367
    %4501 = vmatpush.msra.mxu0 %v4363
    %4502 = vmatmul.f32.gmra.mxu0 %v4079
    %v4503 = vpop.f32.mrf.mxu0
    %v4504 = vadd.f32 %v4484, %v4503
    %4505 = vdwg.mxu0
    %4506 = vmatpush.msra.mxu0 %v4360
    %4507 = vmatpush.msra.mxu0 %v4356
    %4508 = vmatpush.msra.mxu0 %v4352
    %4509 = vmatpush.msra.mxu0 %v4348
    %4510 = vmatpush.msra.mxu0 %v4344
    %4511 = vmatpush.msra.mxu0 %v4340
    %4512 = vmatpush.msra.mxu0 %v4336
    %4513 = vmatpush.msra.mxu0 %v4332
    %4514 = vmatpush.msra.mxu0 %v4328
    %4515 = vmatpush.msra.mxu0 %v4324
    %4516 = vmatpush.msra.mxu0 %v4320
    %4517 = vmatpush.msra.mxu0 %v4316
    %4518 = vmatpush.msra.mxu0 %v4312
    %4519 = vmatpush.msra.mxu0 %v4308
    %4520 = vmatpush.msra.mxu0 %v4304
    %4521 = vmatpush.msra.mxu0 %v4300
    %4522 = vmatmul.f32.gmra.mxu0 %v4297
    %v4523 = vpop.f32.mrf.mxu0
    %v4524 = vadd.f32 %v91, %v4523
    %4525 = vdwg.mxu0
    %4526 = vmatpush.msra.mxu0 %v4424
    %4527 = vmatpush.msra.mxu0 %v4420
    %4528 = vmatpush.msra.mxu0 %v4416
    %4529 = vmatpush.msra.mxu0 %v4412
    %4530 = vmatpush.msra.mxu0 %v4408
    %4531 = vmatpush.msra.mxu0 %v4404
    %4532 = vmatpush.msra.mxu0 %v4400
    %4533 = vmatpush.msra.mxu0 %v4396
    %4534 = vmatpush.msra.mxu0 %v4392
    %4535 = vmatpush.msra.mxu0 %v4388
    %4536 = vmatpush.msra.mxu0 %v4384
    %4537 = vmatpush.msra.mxu0 %v4380
    %4538 = vmatpush.msra.mxu0 %v4376
    %4539 = vmatpush.msra.mxu0 %v4372
    %4540 = vmatpush.msra.mxu0 %v4368
    %4541 = vmatpush.msra.mxu0 %v4364
    %4542 = vmatmul.f32.gmra.mxu0 %v4079
    %v4543 = vpop.f32.mrf.mxu0
    %v4544 = vadd.f32 %v4524, %v4543
    %4545 = vdwg.mxu0
    %4546 = vmatpush.msra.mxu0 %v4361
    %4547 = vmatpush.msra.mxu0 %v4357
    %4548 = vmatpush.msra.mxu0 %v4353
    %4549 = vmatpush.msra.mxu0 %v4349
    %4550 = vmatpush.msra.mxu0 %v4345
    %4551 = vmatpush.msra.mxu0 %v4341
    %4552 = vmatpush.msra.mxu0 %v4337
    %4553 = vmatpush.msra.mxu0 %v4333
    %4554 = vmatpush.msra.mxu0 %v4329
    %4555 = vmatpush.msra.mxu0 %v4325
    %4556 = vmatpush.msra.mxu0 %v4321
    %4557 = vmatpush.msra.mxu0 %v4317
    %4558 = vmatpush.msra.mxu0 %v4313
    %4559 = vmatpush.msra.mxu0 %v4309
    %4560 = vmatpush.msra.mxu0 %v4305
    %4561 = vmatpush.msra.mxu0 %v4301
    %4562 = vmatmul.f32.gmra.mxu0 %v4297
    %v4563 = vpop.f32.mrf.mxu0
    %v4564 = vadd.f32 %v92, %v4563
    %4565 = vdwg.mxu0
    %4566 = vmatpush.msra.mxu0 %v4425
    %4567 = vmatpush.msra.mxu0 %v4421
    %4568 = vmatpush.msra.mxu0 %v4417
    %4569 = vmatpush.msra.mxu0 %v4413
    %4570 = vmatpush.msra.mxu0 %v4409
    %4571 = vmatpush.msra.mxu0 %v4405
    %4572 = vmatpush.msra.mxu0 %v4401
    %4573 = vmatpush.msra.mxu0 %v4397
    %4574 = vmatpush.msra.mxu0 %v4393
    %4575 = vmatpush.msra.mxu0 %v4389
    %4576 = vmatpush.msra.mxu0 %v4385
    %4577 = vmatpush.msra.mxu0 %v4381
    %4578 = vmatpush.msra.mxu0 %v4377
    %4579 = vmatpush.msra.mxu0 %v4373
    %4580 = vmatpush.msra.mxu0 %v4369
    %4581 = vmatpush.msra.mxu0 %v4365
    %4582 = vmatmul.f32.gmra.mxu0 %v4079
    %v4583 = vpop.f32.mrf.mxu0
    %v4584 = vadd.f32 %v4564, %v4583
    %4585 = vdwg.mxu0
    %v4586 = vxor.u32 %v4464, 2147483648
    %v4587 = vmul.f32 %v4586, 1.442695
    %v4588 = vpow.pop %v4587
    %v4589 = vadd.f32 %v4588, 1.0
    %v4590 = vrcp.pop %v4589
    %v4591 = vmul.f32 %v4589, %v4590
    %v4592 = vsub.f32 1.0, %v4591
    %v4593 = vmul.f32 %v4590, %v4592
    %v4594 = vadd.f32 %v4590, %v4593
    %vm4595 = vweird.f32 %v4589
    %vm4596 = vweird.f32 %v4590
    %vm4597 = vmor %vm4595, %vm4596
    %v4598 = vsel %vm4597, %v4590, %v4594
    %v4599 = vand.u32 2147483647, %v4589
    %vm4600 = vcmp.eq.f32.partialorder %v4599, 8.507059e+37
    %v4601 = vand.u32 %v4589, 2147483648
    %v4602 = vor.u32 1.1754944e-38, %v4601
    %v4603 = vsel %vm4600, %v4602, %v4598
    %v4604 = vmul.f32 1.0, %v4603
    %v4605 = vxor.u32 %v4504, 2147483648
    %v4606 = vmul.f32 %v4605, 1.442695
    %v4607 = vpow.pop %v4606
    %v4608 = vadd.f32 %v4607, 1.0
    %v4609 = vrcp.pop %v4608
    %v4610 = vmul.f32 %v4608, %v4609
    %v4611 = vsub.f32 1.0, %v4610
    %v4612 = vmul.f32 %v4609, %v4611
    %v4613 = vadd.f32 %v4609, %v4612
    %vm4614 = vweird.f32 %v4608
    %vm4615 = vweird.f32 %v4609
    %vm4616 = vmor %vm4614, %vm4615
    %v4617 = vsel %vm4616, %v4609, %v4613
    %v4618 = vand.u32 2147483647, %v4608
    %vm4619 = vcmp.eq.f32.partialorder %v4618, 8.507059e+37
    %v4620 = vand.u32 %v4608, 2147483648
    %v4621 = vor.u32 1.1754944e-38, %v4620
    %v4622 = vsel %vm4619, %v4621, %v4617
    %v4623 = vmul.f32 1.0, %v4622
    %v4624 = vtanh.pop %v4544
    %v4625 = vxor.u32 %v4584, 2147483648
    %v4626 = vmul.f32 %v4625, 1.442695
    %v4627 = vpow.pop %v4626
    %v4628 = vadd.f32 %v4627, 1.0
    %v4629 = vrcp.pop %v4628
    %v4630 = vmul.f32 %v4628, %v4629
    %v4631 = vsub.f32 1.0, %v4630
    %v4632 = vmul.f32 %v4629, %v4631
    %v4633 = vadd.f32 %v4629, %v4632
    %vm4634 = vweird.f32 %v4628
    %vm4635 = vweird.f32 %v4629
    %vm4636 = vmor %vm4634, %vm4635
    %v4637 = vsel %vm4636, %v4629, %v4633
    %v4638 = vand.u32 2147483647, %v4628
    %vm4639 = vcmp.eq.f32.partialorder %v4638, 8.507059e+37
    %v4640 = vand.u32 %v4628, 2147483648
    %v4641 = vor.u32 1.1754944e-38, %v4640
    %v4642 = vsel %vm4639, %v4641, %v4637
    %v4643 = vmul.f32 1.0, %v4642
    %v4644 = vmul.f32 %v4623, %v4077
    %v4645 = vmul.f32 %v4604, %v4624
    %v4646 = vadd.f32 %v4644, %v4645
    %v4647 = vtanh.pop %v4646
    %v4648 = vmul.f32 %v4643, %v4647
    %s4649 = scalar_lea.vmem [#allocation14], 56
    %4650 = vst [vmem:[%s4649] sm:$0xff] %v4648
    %4651 = vst [vmem:[#allocation2] sm:$0xff] %v4297
    %4652 = vst [vmem:[#allocation3] sm:$0xff] %v4295
    %4653 = vst [vmem:[#allocation4] sm:$0xff] %v4648
    %4654 = vst [vmem:[#allocation5] sm:$0xff] %v4646
    // Predicated region
    $region38: #{tpu_custom_call.1} parent=1 // pred_check
      _
    $region39: #{tpu_custom_call.1} parent=1 // pred_check_branch
      %4656 = sbr.rel (0) target = $region41
    $region40: #{tpu_custom_call.1} parent=1 // pred_region
      %4658 = vsyncadd [#allocation8], 0
      %s4659 = sshll.u32 [#allocation14], 4
      %s4660 = int_to_ptr.vmem [resolvable:$true] %s4659
      %s4661 = sshll.u32 %s4, 4
      %s4662 = int_to_ptr.hbm [resolvable:$true] %s4661
      %4667 = dma.vmem_to_hbm [thread:$0]  %s4660, 1024, %s4662, [#allocation8], 128, 128, 8
    $region41: #{tpu_custom_call.1} parent=1 // pred_fallthru
      _
    // Predicated region
    $region42: #{tpu_custom_call.1} parent=1 // pred_check
      _
    $region43: #{tpu_custom_call.1} parent=1 // pred_check_branch
      %4669 = sbr.rel (0) target = $region45
    $region44: #{tpu_custom_call.1} parent=1 // pred_region
      %4671 = dma.done [#allocation8], 1024
    $region45: #{tpu_custom_call.1} parent=1 // pred_fallthru
      _
    %4672 = vsyncpa [#allocation7], 1
    %4673 = vsyncpa [#allocation10], 1
    %4674 = vsyncpa [#allocation13], 1
    %4675 = vsyncpa [#allocation8], 1

</llo_original>
